<compile_context>
chip_gen: v5e
topology: v5e:2x2
jax: 0.10.0
libtpu: 0.0.40
codegen_flags: <defaults>
</compile_context>

<pallas_src>
import functools
import math

import jax
import jax.numpy as jnp
from jax.experimental import pallas as pl
from jax.experimental.pallas import tpu as pltpu

LN_EPS = 1e-5
NEG_INF = -1e30  # finite "minus infinity": avoids inf-inf NaNs with masked columns


# ---------------------------------------------------------------------------
# Tiling helpers
# ---------------------------------------------------------------------------
def _round_up(x, m):
    return ((x + m - 1) // m) * m


def _pick_tile(dim, target, align):
    """Largest tile <= target that divides `dim` and is a multiple of `align`;
    falls back to the full dim (dim <= target or no aligned divisor)."""
    if dim <= target:
        return dim
    start = target - (target % align)
    for t in range(start, 0, -align):
        if dim % t == 0:
            return t
    return dim


def _choose_div(dim, candidates):
    """First candidate (best-first) that divides `dim`; else the full dim."""
    for c in candidates:
        if c <= dim and dim % c == 0:
            return c
    return dim


def _device_defaults():
    """Generation-aware scoped-VMEM limit and row-tile target (perf review)."""
    kind = ""
    try:
        kind = jax.devices()[0].device_kind.lower()
    except Exception:
        pass
    if "v6" in kind:                    # v6e: 128 MiB VMEM, fast MXU -> big row tiles
        return {"vmem": 100 * 2**20, "tr": 1024}
    if "v5" in kind:                    # v5e/v5p: 128 MiB VMEM, slow HBM -> tr >= ~512
        return {"vmem": 96 * 2**20, "tr": 512}
    if "v7" in kind or "7x" in kind:    # v7x: 64 MiB physical VMEM per TensorCore
        return {"vmem": 48 * 2**20, "tr": 512}
    return {"vmem": 64 * 2**20, "tr": 512}


# ---------------------------------------------------------------------------
# Kernels 1 / 4: LayerNorm + Linear (+ optional exact GELU), column-slab grid
# ---------------------------------------------------------------------------
def _ln_matmul_kernel(apply_gelu, x_ref, g_ref, b_ref, w_ref, bias_ref, o_ref,
                      xn_ref):
    # Column axis (axis 1) is the innermost 'arbitrary' axis: LayerNorm and the
    # f32->bf16 cast run once per row tile (c == 0) into a persistent VMEM
    # scratch and are reused for every streamed weight column slab.
    @pl.when(pl.program_id(1) == 0)
    def _():
        x = x_ref[...]                                        # (TR, C) f32
        mu = jnp.mean(x, axis=-1, keepdims=True)
        xc = x - mu
        var = jnp.mean(xc * xc, axis=-1, keepdims=True)
        xn = (xc * jax.lax.rsqrt(var + LN_EPS)) * g_ref[...] + b_ref[...]
        xn_ref[...] = xn.astype(xn_ref.dtype)

    y = jnp.dot(xn_ref[...], w_ref[...],
                preferred_element_type=jnp.float32) + bias_ref[...]
    if apply_gelu:
        y = 0.5 * y * (1.0 + jax.lax.erf(y * (1.0 / math.sqrt(2.0))))
    o_ref[...] = y.astype(o_ref.dtype)


def _ln_matmul_call(x2d, g, b, w, bias, *, tile_r, tile_c, out_dtype,
                    apply_gelu, vmem):
    R, C = x2d.shape
    CO = w.shape[1]
    kernel = functools.partial(_ln_matmul_kernel, apply_gelu)
    return pl.pallas_call(
        kernel,
        out_shape=jax.ShapeDtypeStruct((R, CO), out_dtype),
        grid_spec=pltpu.PrefetchScalarGridSpec(
            num_scalar_prefetch=0,
            grid=(R // tile_r, CO // tile_c),
            in_specs=[
                pl.BlockSpec((tile_r, C), lambda r, c: (r, 0)),   # row tile (resident)
                pl.BlockSpec((1, C), lambda r, c: (0, 0)),        # ln gamma
                pl.BlockSpec((1, C), lambda r, c: (0, 0)),        # ln beta
                pl.BlockSpec((C, tile_c), lambda r, c: (0, c)),   # streamed weight slab
                pl.BlockSpec((1, tile_c), lambda r, c: (0, c)),   # bias slab
            ],
            out_specs=pl.BlockSpec((tile_r, tile_c), lambda r, c: (r, c)),
            scratch_shapes=[pltpu.VMEM((tile_r, C), jnp.bfloat16)],  # LN'd row tile
        ),
        compiler_params=pltpu.CompilerParams(
            dimension_semantics=("parallel", "arbitrary"),
            vmem_limit_bytes=vmem),
    )(x2d, g, b, w, bias)


# ---------------------------------------------------------------------------
# Kernel 2: flash attention (online softmax over kv tiles)
# ---------------------------------------------------------------------------
def _flash_attn_kernel(kv_axis, n_valid, n_padded, tile_k, scale,
                       q_ref, k_ref, v_ref, o_ref, m_sc, l_sc, acc_sc):
    ki = pl.program_id(kv_axis)

    @pl.when(ki == 0)
    def _():
        m_sc[...] = jnp.full_like(m_sc, NEG_INF)
        l_sc[...] = jnp.zeros_like(l_sc)
        acc_sc[...] = jnp.zeros_like(acc_sc)

    q = q_ref[0]                                              # (TQ, D) bf16
    k = k_ref[0]                                              # (TK, D) bf16
    # NT matmul (contract last dims) -> no transpose; 1/sqrt(D) applied to the
    # f32 scores (one VPU mul, hidden under the MXU) instead of rewriting W_qkv.
    s = jax.lax.dot_general(q, k, (((1,), (1,)), ((), ())),
                            preferred_element_type=jnp.float32) * scale
    if n_valid < n_padded:                                    # static: mask padded KV
        col = ki * tile_k + jax.lax.broadcasted_iota(jnp.int32, s.shape, 1)
        s = jnp.where(col < n_valid, s, NEG_INF)

    m_prev = m_sc[...]
    m_new = jnp.maximum(m_prev, jnp.max(s, axis=-1, keepdims=True))
    alpha = jnp.exp(m_prev - m_new)
    p = jnp.exp(s - m_new)
    l_sc[...] = alpha * l_sc[...] + jnp.sum(p, axis=-1, keepdims=True)
    acc_sc[...] = alpha * acc_sc[...] + jnp.dot(
        p.astype(jnp.bfloat16), v_ref[0], preferred_element_type=jnp.float32)
    m_sc[...] = m_new

    @pl.when(ki == pl.num_programs(kv_axis) - 1)
    def _():
        o_ref[0] = (acc_sc[...] * pl.reciprocal(l_sc[...], approx=True)
                    ).astype(o_ref.dtype)


def _flash_attention_fused_layout(qkv3, *, num_heads, head_dim, tile_q, tile_k,
                                  n_valid, scale, vmem):
    """Production path (head_dim % 128 == 0): q/k/v read straight from the
    token-major (B, N_pad, 3C) QKV buffer (q head h -> col block h, k -> H+h,
    v -> 2H+h) and context written token-major (B, N_pad, C) — no transposes."""
    B, n_pad, _ = qkv3.shape
    H, D = num_heads, head_dim
    kernel = functools.partial(_flash_attn_kernel, 3, n_valid, n_pad, tile_k, scale)
    return pl.pallas_call(
        kernel,
        out_shape=jax.ShapeDtypeStruct((B, n_pad, H * D), jnp.bfloat16),
        grid_spec=pltpu.PrefetchScalarGridSpec(
            num_scalar_prefetch=0,
            grid=(B, H, n_pad // tile_q, n_pad // tile_k),
            in_specs=[
                pl.BlockSpec((1, tile_q, D), lambda b, h, qi, ki: (b, qi, h)),
                pl.BlockSpec((1, tile_k, D), lambda b, h, qi, ki: (b, ki, H + h)),
                pl.BlockSpec((1, tile_k, D), lambda b, h, qi, ki: (b, ki, 2 * H + h)),
            ],
            out_specs=pl.BlockSpec((1, tile_q, D), lambda b, h, qi, ki: (b, qi, h)),
            scratch_shapes=[
                pltpu.VMEM((tile_q, 1), jnp.float32),    # running max
                pltpu.VMEM((tile_q, 1), jnp.float32),    # running denom
                pltpu.VMEM((tile_q, D), jnp.float32),    # running numerator
            ],
        ),
        compiler_params=pltpu.CompilerParams(
            dimension_semantics=("parallel", "parallel", "parallel", "arbitrary"),
            vmem_limit_bytes=vmem),
    )(qkv3, qkv3, qkv3)


def _flash_attention_split_layout(q, k, v, *, tile_q, tile_k, n_valid, scale, vmem):
    """Fallback for head_dim not lane-aligned (small test shapes): q/k/v already
    split per head as (B*H, N_pad, D)."""
    BH, n_pad, D = q.shape
    kernel = functools.partial(_flash_attn_kernel, 2, n_valid, n_pad, tile_k, scale)
    return pl.pallas_call(
        kernel,
        out_shape=jax.ShapeDtypeStruct((BH, n_pad, D), jnp.bfloat16),
        grid_spec=pltpu.PrefetchScalarGridSpec(
            num_scalar_prefetch=0,
            grid=(BH, n_pad // tile_q, n_pad // tile_k),
            in_specs=[
                pl.BlockSpec((1, tile_q, D), lambda bh, qi, ki: (bh, qi, 0)),
                pl.BlockSpec((1, tile_k, D), lambda bh, qi, ki: (bh, ki, 0)),
                pl.BlockSpec((1, tile_k, D), lambda bh, qi, ki: (bh, ki, 0)),
            ],
            out_specs=pl.BlockSpec((1, tile_q, D), lambda bh, qi, ki: (bh, qi, 0)),
            scratch_shapes=[
                pltpu.VMEM((tile_q, 1), jnp.float32),
                pltpu.VMEM((tile_q, 1), jnp.float32),
                pltpu.VMEM((tile_q, D), jnp.float32),
            ],
        ),
        compiler_params=pltpu.CompilerParams(
            dimension_semantics=("parallel", "parallel", "arbitrary"),
            vmem_limit_bytes=vmem),
    )(q, k, v)


# ---------------------------------------------------------------------------
# Kernel 3: output projection + LayerScale1 + residual, column-slab grid
# ---------------------------------------------------------------------------
def _proj_residual_kernel(ctx_ref, w_ref, b_ref, g_ref, x_ref, o_ref):
    y = jnp.dot(ctx_ref[...], w_ref[...],
                preferred_element_type=jnp.float32) + b_ref[...]
    o_ref[...] = x_ref[...] + y * g_ref[...]


def _proj_residual_call(ctx, w, b, g, x, *, tile_r, tile_c, vmem):
    R, C = x.shape
    return pl.pallas_call(
        _proj_residual_kernel,
        out_shape=jax.ShapeDtypeStruct((R, C), jnp.float32),
        grid_spec=pltpu.PrefetchScalarGridSpec(
            num_scalar_prefetch=0,
            grid=(R // tile_r, C // tile_c),
            in_specs=[
                pl.BlockSpec((tile_r, C), lambda r, c: (r, 0)),        # attn context
                pl.BlockSpec((C, tile_c), lambda r, c: (0, c)),        # streamed W_proj
                pl.BlockSpec((1, tile_c), lambda r, c: (0, c)),        # bias
                pl.BlockSpec((1, tile_c), lambda r, c: (0, c)),        # ls1 gamma
                pl.BlockSpec((tile_r, tile_c), lambda r, c: (r, c)),   # residual x
            ],
            out_specs=pl.BlockSpec((tile_r, tile_c), lambda r, c: (r, c)),
        ),
        compiler_params=pltpu.CompilerParams(
            dimension_semantics=("parallel", "parallel"),
            vmem_limit_bytes=vmem),
    )(ctx, w, b, g, x)


# ---------------------------------------------------------------------------
# Kernel 5: fc2 (hidden reduction, accumulate in output) + LayerScale2 + residual
# ---------------------------------------------------------------------------
def _fc2_residual_kernel(h_ref, w_ref, b_ref, g_ref, x1_ref, o_ref):
    kk = pl.program_id(2)

    @pl.when(kk == 0)
    def _():
        o_ref[...] = jnp.zeros_like(o_ref)

    # Accumulate straight into the f32 output block: its block index (r, c) is
    # constant along the reduction axis, so no separate VMEM accumulator scratch.
    o_ref[...] += jnp.dot(h_ref[...], w_ref[...], preferred_element_type=jnp.float32)

    @pl.when(kk == pl.num_programs(2) - 1)
    def _():
        o_ref[...] = x1_ref[...] + (o_ref[...] + b_ref[...]) * g_ref[...]


def _fc2_residual_call(h, w, b, g, x1, *, tile_r, tile_c, tile_k, vmem):
    R, Hd = h.shape
    C = x1.shape[1]
    return pl.pallas_call(
        _fc2_residual_kernel,
        out_shape=jax.ShapeDtypeStruct((R, C), jnp.float32),
        grid_spec=pltpu.PrefetchScalarGridSpec(
            num_scalar_prefetch=0,
            grid=(R // tile_r, C // tile_c, Hd // tile_k),
            in_specs=[
                pl.BlockSpec((tile_r, tile_k), lambda r, c, k: (r, k)),   # activations
                pl.BlockSpec((tile_k, tile_c), lambda r, c, k: (k, c)),   # streamed W_fc2
                pl.BlockSpec((1, tile_c), lambda r, c, k: (0, c)),        # bias
                pl.BlockSpec((1, tile_c), lambda r, c, k: (0, c)),        # ls2 gamma
                pl.BlockSpec((tile_r, tile_c), lambda r, c, k: (r, c)),   # residual x1
            ],
            out_specs=pl.BlockSpec((tile_r, tile_c), lambda r, c, k: (r, c)),
        ),
        compiler_params=pltpu.CompilerParams(
            dimension_semantics=("parallel", "parallel", "arbitrary"),
            vmem_limit_bytes=vmem),
    )(h, w, b, g, x1)


# ---------------------------------------------------------------------------
# Block forward
# ---------------------------------------------------------------------------
def block_forward(x, params, *, num_heads):
    """x: (B, N, C) float32. params: output of prepare_params (bf16 weights)."""
    B, N, C = x.shape
    H = num_heads
    D = C // H
    Hd = params["w_fc1"].shape[1]
    scale = D ** (-0.5)
    f32, bf16 = jnp.float32, jnp.bfloat16
    cfg = _device_defaults()
    vmem = cfg["vmem"]

    # --- pad the ragged token dim (e.g. N=1025 -> 1152 at production) --------
    if N <= 128:
        n_pad = _round_up(max(N, 8), 8)
    else:
        n_pad = _round_up(N, 128)
    tq = _choose_div(n_pad, (256, 128, 64, 32, 16, 8))            # attn q tile
    tkv = _choose_div(n_pad, (512, 384, 256, 128, 64, 32, 16, 8))  # attn kv tile
    r_pad = B * n_pad

    # --- generation-aware matmul tiles ----------------------------------------
    tr = _pick_tile(r_pad, cfg["tr"], 8)   # token-row tile (~512 / ~1024 at scale)
    tc3 = _pick_tile(3 * C, 512, 128)      # QKV output slab
    tcp = _pick_tile(C, 512, 128)          # proj output slab
    th = _pick_tile(Hd, 512, 128)          # fc1 hidden slab
    tk2 = _pick_tile(Hd, 512, 128)         # fc2 contraction slab
    tc5 = _pick_tile(C, 640, 128)          # fc2 output slab (keeps tr large on v7x)

    x = x.astype(f32)
    if n_pad != N:
        x = jnp.pad(x, ((0, 0), (0, n_pad - N), (0, 0)))  # padded KV masked, rows dropped
    x2d = x.reshape(r_pad, C)

    # 1) LN1 + QKV projection (bf16 out; softmax scale applied inside attention).
    qkv = _ln_matmul_call(x2d, params["ln1_g"], params["ln1_b"],
                          params["w_qkv"], params["b_qkv"],
                          tile_r=tr, tile_c=tc3, out_dtype=bf16,
                          apply_gelu=False, vmem=vmem)

    # 2) Flash attention.
    if D % 128 == 0:
        ctx2d = _flash_attention_fused_layout(
            qkv.reshape(B, n_pad, 3 * C), num_heads=H, head_dim=D,
            tile_q=tq, tile_k=tkv, n_valid=N, scale=scale, vmem=vmem,
        ).reshape(r_pad, C)
    else:
        # Small-head_dim fallback (test shapes): explicit head split/merge.
        qkv5 = qkv.reshape(B, n_pad, 3, H, D).transpose(2, 0, 3, 1, 4)
        q = qkv5[0].reshape(B * H, n_pad, D)
        k = qkv5[1].reshape(B * H, n_pad, D)
        v = qkv5[2].reshape(B * H, n_pad, D)
        ctx = _flash_attention_split_layout(q, k, v, tile_q=tq, tile_k=tkv,
                                            n_valid=N, scale=scale, vmem=vmem)
        ctx2d = ctx.reshape(B, H, n_pad, D).transpose(0, 2, 1, 3).reshape(r_pad, C)

    # 3) proj + LayerScale1 + residual.
    x1 = _proj_residual_call(ctx2d, params["w_proj"], params["b_proj"],
                             params["ls1_gamma"], x2d,
                             tile_r=tr, tile_c=tcp, vmem=vmem)

    # 4) LN2 + fc1 + exact GELU.
    h = _ln_matmul_call(x1, params["ln2_g"], params["ln2_b"],
                        params["w_fc1"], params["b_fc1"],
                        tile_r=tr, tile_c=th, out_dtype=bf16,
                        apply_gelu=True, vmem=vmem)

    # 5) fc2 + LayerScale2 + residual.
    out2d = _fc2_residual_call(h, params["w_fc2"], params["b_fc2"],
                               params["ls2_gamma"], x1,
                               tile_r=tr, tile_c=tc5, tile_k=tk2, vmem=vmem)

    out = out2d.reshape(B, n_pad, C)
    if n_pad != N:
        out = out[:, :N, :]
    return out


# ---------------------------------------------------------------------------
# Parameters
# ---------------------------------------------------------------------------
def init_params(key, dim, num_heads, mlp_ratio=4.0, init_values=0.1):
    hidden = int(dim * mlp_ratio)
    ks = jax.random.split(key, 8)
    s = 0.02
    return {
        "ln1_g": jnp.ones((1, dim), jnp.float32),
        "ln1_b": jnp.zeros((1, dim), jnp.float32),
        # Stored pre-transposed: y = x @ W + b  (W is PyTorch weight.T)
        "w_qkv": s * jax.random.normal(ks[0], (dim, 3 * dim), jnp.float32),
        "b_qkv": s * jax.random.normal(ks[1], (1, 3 * dim), jnp.float32),
        "w_proj": s * jax.random.normal(ks[2], (dim, dim), jnp.float32),
        "b_proj": s * jax.random.normal(ks[3], (1, dim), jnp.float32),
        "ls1_gamma": init_values * jnp.ones((1, dim), jnp.float32),
        "ln2_g": jnp.ones((1, dim), jnp.float32),
        "ln2_b": jnp.zeros((1, dim), jnp.float32),
        "w_fc1": s * jax.random.normal(ks[4], (dim, hidden), jnp.float32),
        "b_fc1": s * jax.random.normal(ks[5], (1, hidden), jnp.float32),
        "w_fc2": s * jax.random.normal(ks[6], (hidden, dim), jnp.float32),
        "b_fc2": s * jax.random.normal(ks[7], (1, dim), jnp.float32),
        "ls2_gamma": init_values * jnp.ones((1, dim), jnp.float32),
    }


def prepare_params(params):
    """One-time (per model) preparation: matmul weights pre-cast to bf16 so no
    per-forward f32->bf16 weight traffic; LN/bias/gamma stay f32."""
    p = dict(params)
    for k in ("w_qkv", "w_proj", "w_fc1", "w_fc2"):
        p[k] = params[k].astype(jnp.bfloat16)
    return p


# ---------------------------------------------------------------------------
# Pure-JAX f32 reference mirroring the PyTorch forward (for validation)
# ---------------------------------------------------------------------------
def block_forward_ref(x, params, *, num_heads):
    B, N, C = x.shape
    hd = C // num_heads
    scale = hd ** (-0.5)

    def ln(z, g, b):
        mu = jnp.mean(z, axis=-1, keepdims=True)
        var = jnp.mean((z - mu) ** 2, axis=-1, keepdims=True)
        return (z - mu) / jnp.sqrt(var + LN_EPS) * g + b

    xn = ln(x, params["ln1_g"], params["ln1_b"])
    qkv = xn @ params["w_qkv"] + params["b_qkv"]
    qkv = qkv.reshape(B, N, 3, num_heads, hd).transpose(2, 0, 3, 1, 4)
    q, k, v = qkv[0], qkv[1], qkv[2]
    attn = (q * scale) @ jnp.swapaxes(k, -2, -1)
    attn = jax.nn.softmax(attn, axis=-1)
    out = (attn @ v).transpose(0, 2, 1, 3).reshape(B, N, C)
    out = out @ params["w_proj"] + params["b_proj"]
    x1 = x + out * params["ls1_gamma"]

    xn2 = ln(x1, params["ln2_g"], params["ln2_b"])
    h = xn2 @ params["w_fc1"] + params["b_fc1"]
    h = 0.5 * h * (1.0 + jax.lax.erf(h / jnp.sqrt(2.0)))
    h = h @ params["w_fc2"] + params["b_fc2"]
    return x1 + h * params["ls2_gamma"]


if __name__ == "__main__":
    key = jax.random.PRNGKey(0)

    def run_case(B, N, C, num_heads, case_key):
        kx, kp = jax.random.split(case_key)
        x = jax.random.normal(kx, (B, N, C), jnp.float32)
        params = init_params(kp, C, num_heads)
        pparams = prepare_params(params)
        fwd = jax.jit(functools.partial(block_forward, num_heads=num_heads))
        out = jax.block_until_ready(fwd(x, pparams))
        ref = block_forward_ref(x, params, num_heads=num_heads)
        assert out.shape == ref.shape
        err = float(jnp.max(jnp.abs(out - ref)))
        # bf16 matmul operands + approx-reciprocal softmax => loosened tolerance.
        assert err < 2e-2, err

    # Case 1: head_dim = 128 -> exercises the transpose-free production attention path.
    run_case(B=2, N=8, C=256, num_heads=2, case_key=jax.random.fold_in(key, 0))
    # Case 2: ragged N (padding + KV masking) + small-head_dim fallback path.
    run_case(B=2, N=7, C=32, num_heads=4, case_key=jax.random.fold_in(key, 1))

    print("KERNEL_OK")
</pallas_src>

<mosaic_0001>
module attributes {stable_mosaic.version = 11 : i64} {
  func.func @_flash_attn_kernel(%arg0: i32, %arg1: i32, %arg2: i32, %arg3: i32, %arg4: memref<1x8x128xbf16, #tpu.memory_space<vmem>>, %arg5: memref<1x8x128xbf16, #tpu.memory_space<vmem>>, %arg6: memref<1x8x128xbf16, #tpu.memory_space<vmem>>, %arg7: memref<1x8x128xbf16, #tpu.memory_space<vmem>>, %arg8: memref<8x1xf32, #tpu.memory_space<vmem>>, %arg9: memref<8x1xf32, #tpu.memory_space<vmem>>, %arg10: memref<8x128xf32, #tpu.memory_space<vmem>>) attributes {dimension_semantics = [#tpu.dimension_semantics<parallel>, #tpu.dimension_semantics<parallel>, #tpu.dimension_semantics<parallel>, #tpu.dimension_semantics<arbitrary>], iteration_bounds = array<i64: 2, 2, 1, 1>, scalar_prefetch = 0 : i64, scratch_operands = 3 : i64, tpu.core_type = #tpu.core_type<tc>, window_params = [{transform_indices = @transform_0, window_bounds = array<i64: 1, 8, 128>}, {transform_indices = @transform_1, window_bounds = array<i64: 1, 8, 128>}, {transform_indices = @transform_2, window_bounds = array<i64: 1, 8, 128>}, {transform_indices = @transform_3, window_bounds = array<i64: 1, 8, 128>}]} {
    %c0_i32 = arith.constant 0 : i32
    %0 = arith.cmpi eq, %arg3, %c0_i32 : i32
    %1 = arith.extui %0 : i1 to i32
    %c0_i32_0 = arith.constant 0 : i32
    %2 = arith.cmpi ne, %1, %c0_i32_0 : i32
    scf.if %2 {
      %cst_27 = arith.constant -1.000000e+30 : f32
      %38 = vector.broadcast %cst_27 : f32 to vector<8x1xf32>
      %c0_28 = arith.constant 0 : index
      %c0_29 = arith.constant 0 : index
      %39 = vector.load %arg8[%c0_28, %c0_29] : memref<8x1xf32, #tpu.memory_space<vmem>>, vector<8x1xf32>
      tpu.vector_store %arg8[%c0_28, %c0_29], %38 {strides = array<i32>} : memref<8x1xf32, #tpu.memory_space<vmem>>, vector<8x1xf32>,
      %cst_30 = arith.constant 0.000000e+00 : f32
      %40 = vector.broadcast %cst_30 : f32 to vector<8x1xf32>
      %c0_31 = arith.constant 0 : index
      %c0_32 = arith.constant 0 : index
      %41 = vector.load %arg9[%c0_31, %c0_32] : memref<8x1xf32, #tpu.memory_space<vmem>>, vector<8x1xf32>
      tpu.vector_store %arg9[%c0_31, %c0_32], %40 {strides = array<i32>} : memref<8x1xf32, #tpu.memory_space<vmem>>, vector<8x1xf32>,
      %cst_33 = arith.constant 0.000000e+00 : f32
      %42 = vector.broadcast %cst_33 : f32 to vector<8x128xf32>
      %c0_34 = arith.constant 0 : index
      %c0_35 = arith.constant 0 : index
      %43 = vector.load %arg10[%c0_34, %c0_35] : memref<8x128xf32, #tpu.memory_space<vmem>>, vector<8x128xf32>
      tpu.vector_store %arg10[%c0_34, %c0_35], %42 {strides = array<i32>} : memref<8x128xf32, #tpu.memory_space<vmem>>, vector<8x128xf32>,
    } else {
    }
    %c0 = arith.constant 0 : index
    %c0_1 = arith.constant 0 : index
    %c0_2 = arith.constant 0 : index
    %3 = vector.load %arg4[%c0, %c0_1, %c0_2] : memref<1x8x128xbf16, #tpu.memory_space<vmem>>, vector<1x8x128xbf16>
    %4 = vector.shape_cast %3 : vector<1x8x128xbf16> to vector<8x128xbf16>
    %c0_3 = arith.constant 0 : index
    %c0_4 = arith.constant 0 : index
    %c0_5 = arith.constant 0 : index
    %5 = vector.load %arg5[%c0_3, %c0_4, %c0_5] : memref<1x8x128xbf16, #tpu.memory_space<vmem>>, vector<1x8x128xbf16>
    %6 = vector.shape_cast %5 : vector<1x8x128xbf16> to vector<8x128xbf16>
    %cst = arith.constant dense<0.000000e+00> : vector<8x8xf32>
    %7 = tpu.matmul %4, %6, %cst {dimension_numbers = #tpu.dot_dimension_numbers<[1], [1], [0], [0], [0, 0, 1, 0], [], []>} : vector<8x128xbf16>, vector<8x128xbf16>, vector<8x8xf32> -> vector<8x8xf32>
    %cst_6 = arith.constant 0.0883883461 : f32
    %8 = vector.broadcast %cst_6 : f32 to vector<8x8xf32>
    %9 = arith.mulf %7, %8 : vector<8x8xf32>
    %c0_7 = arith.constant 0 : index
    %c0_8 = arith.constant 0 : index
    %10 = vector.load %arg8[%c0_7, %c0_8] : memref<8x1xf32, #tpu.memory_space<vmem>>, vector<8x1xf32>
    %cst_9 = arith.constant dense<0xFF800000> : vector<8xf32>
    %11 = vector.multi_reduction <maximumf>, %9, %cst_9 [1] : vector<8x8xf32> to vector<8xf32>
    %12 = vector.shape_cast %11 : vector<8xf32> to vector<8x1xf32>
    %13 = arith.maximumf %10, %12 : vector<8x1xf32>
    %14 = arith.subf %10, %13 : vector<8x1xf32>
    %15 = math.exp %14 : vector<8x1xf32>
    %16 = vector.broadcast %13 : vector<8x1xf32> to vector<8x8xf32>
    %17 = arith.subf %9, %16 : vector<8x8xf32>
    %18 = math.exp %17 : vector<8x8xf32>
    %c0_10 = arith.constant 0 : index
    %c0_11 = arith.constant 0 : index
    %19 = vector.load %arg9[%c0_10, %c0_11] : memref<8x1xf32, #tpu.memory_space<vmem>>, vector<8x1xf32>
    %20 = arith.mulf %15, %19 : vector<8x1xf32>
    %cst_12 = arith.constant dense<0.000000e+00> : vector<8xf32>
    %21 = vector.multi_reduction <add>, %18, %cst_12 [1] : vector<8x8xf32> to vector<8xf32>
    %22 = vector.shape_cast %21 : vector<8xf32> to vector<8x1xf32>
    %23 = arith.addf %20, %22 : vector<8x1xf32>
    %c0_13 = arith.constant 0 : index
    %c0_14 = arith.constant 0 : index
    %24 = vector.load %arg9[%c0_13, %c0_14] : memref<8x1xf32, #tpu.memory_space<vmem>>, vector<8x1xf32>
    tpu.vector_store %arg9[%c0_13, %c0_14], %23 {strides = array<i32>} : memref<8x1xf32, #tpu.memory_space<vmem>>, vector<8x1xf32>,
    %c0_15 = arith.constant 0 : index
    %c0_16 = arith.constant 0 : index
    %25 = vector.load %arg10[%c0_15, %c0_16] : memref<8x128xf32, #tpu.memory_space<vmem>>, vector<8x128xf32>
    %26 = vector.broadcast %15 : vector<8x1xf32> to vector<8x128xf32>
    %27 = arith.mulf %26, %25 : vector<8x128xf32>
    %28 = arith.truncf %18 : vector<8x8xf32> to vector<8x8xbf16>
    %c0_17 = arith.constant 0 : index
    %c0_18 = arith.constant 0 : index
    %c0_19 = arith.constant 0 : index
    %29 = vector.load %arg6[%c0_17, %c0_18, %c0_19] : memref<1x8x128xbf16, #tpu.memory_space<vmem>>, vector<1x8x128xbf16>
    %30 = vector.shape_cast %29 : vector<1x8x128xbf16> to vector<8x128xbf16>
    %cst_20 = arith.constant dense<0.000000e+00> : vector<8x128xf32>
    %31 = tpu.matmul %28, %30, %cst_20 {dimension_numbers = #tpu.dot_dimension_numbers<[1], [0], [0], [1], [0, 0, 1, 1], [], []>} : vector<8x8xbf16>, vector<8x128xbf16>, vector<8x128xf32> -> vector<8x128xf32>
    %32 = arith.addf %27, %31 : vector<8x128xf32>
    %c0_21 = arith.constant 0 : index
    %c0_22 = arith.constant 0 : index
    %33 = vector.load %arg10[%c0_21, %c0_22] : memref<8x128xf32, #tpu.memory_space<vmem>>, vector<8x128xf32>
    tpu.vector_store %arg10[%c0_21, %c0_22], %32 {strides = array<i32>} : memref<8x128xf32, #tpu.memory_space<vmem>>, vector<8x128xf32>,
    %c0_23 = arith.constant 0 : index
    %c0_24 = arith.constant 0 : index
    %34 = vector.load %arg8[%c0_23, %c0_24] : memref<8x1xf32, #tpu.memory_space<vmem>>, vector<8x1xf32>
    tpu.vector_store %arg8[%c0_23, %c0_24], %13 {strides = array<i32>} : memref<8x1xf32, #tpu.memory_space<vmem>>, vector<8x1xf32>,
    %c0_i32_25 = arith.constant 0 : i32
    %35 = arith.cmpi eq, %arg3, %c0_i32_25 : i32
    %36 = arith.extui %35 : i1 to i32
    %c0_i32_26 = arith.constant 0 : i32
    %37 = arith.cmpi ne, %36, %c0_i32_26 : i32
    scf.if %37 {
      %c0_27 = arith.constant 0 : index
      %c0_28 = arith.constant 0 : index
      %38 = vector.load %arg10[%c0_27, %c0_28] : memref<8x128xf32, #tpu.memory_space<vmem>>, vector<8x128xf32>
      %c0_29 = arith.constant 0 : index
      %c0_30 = arith.constant 0 : index
      %39 = vector.load %arg9[%c0_29, %c0_30] : memref<8x1xf32, #tpu.memory_space<vmem>>, vector<8x1xf32>
      %40 = tpu.reciprocal %39 {approx = true} : vector<8x1xf32> -> vector<8x1xf32>
      %41 = vector.broadcast %40 : vector<8x1xf32> to vector<8x128xf32>
      %42 = arith.mulf %38, %41 : vector<8x128xf32>
      %43 = arith.truncf %42 : vector<8x128xf32> to vector<8x128xbf16>
      %c0_31 = arith.constant 0 : index
      %c0_32 = arith.constant 0 : index
      %c0_33 = arith.constant 0 : index
      %44 = vector.load %arg7[%c0_31, %c0_32, %c0_33] : memref<1x8x128xbf16, #tpu.memory_space<vmem>>, vector<1x8x128xbf16>
      %45 = vector.shape_cast %44 : vector<1x8x128xbf16> to vector<8x128xbf16>
      %46 = vector.shape_cast %43 : vector<8x128xbf16> to vector<1x8x128xbf16>
      tpu.vector_store %arg7[%c0_31, %c0_32, %c0_33], %46 {strides = array<i32>} : memref<1x8x128xbf16, #tpu.memory_space<vmem>>, vector<1x8x128xbf16>,
    } else {
    }
    return
  }
  func.func @transform_0(%arg0: i32, %arg1: i32, %arg2: i32, %arg3: i32) -> (i32, i32, i32) {
    %c0_i32 = arith.constant 0 : i32
    return %arg0, %arg2, %arg1 : i32, i32, i32
  }
  func.func @transform_1(%arg0: i32, %arg1: i32, %arg2: i32, %arg3: i32) -> (i32, i32, i32) {
    %c2_i32 = arith.constant 2 : i32
    %0 = arith.addi %c2_i32, %arg1 : i32
    %c0_i32 = arith.constant 0 : i32
    return %arg0, %arg3, %0 : i32, i32, i32
  }
  func.func @transform_2(%arg0: i32, %arg1: i32, %arg2: i32, %arg3: i32) -> (i32, i32, i32) {
    %c4_i32 = arith.constant 4 : i32
    %0 = arith.addi %c4_i32, %arg1 : i32
    %c0_i32 = arith.constant 0 : i32
    return %arg0, %arg3, %0 : i32, i32, i32
  }
  func.func @transform_3(%arg0: i32, %arg1: i32, %arg2: i32, %arg3: i32) -> (i32, i32, i32) {
    %c0_i32 = arith.constant 0 : i32
    return %arg0, %arg2, %arg1 : i32, i32, i32
  }
}

module attributes {stable_mosaic.version = 11 : i64} {
  func.func @_proj_residual_kernel(%arg0: i32, %arg1: i32, %arg2: memref<16x256xbf16, #tpu.memory_space<vmem>>, %arg3: memref<256x256xbf16, #tpu.memory_space<vmem>>, %arg4: memref<1x256xf32, #tpu.memory_space<vmem>>, %arg5: memref<1x256xf32, #tpu.memory_space<vmem>>, %arg6: memref<16x256xf32, #tpu.memory_space<vmem>>, %arg7: memref<16x256xf32, #tpu.memory_space<vmem>>) attributes {dimension_semantics = [#tpu.dimension_semantics<parallel>, #tpu.dimension_semantics<parallel>], iteration_bounds = array<i64: 1, 1>, scalar_prefetch = 0 : i64, scratch_operands = 0 : i64, tpu.core_type = #tpu.core_type<tc>, window_params = [{transform_indices = @transform_0, window_bounds = array<i64: 16, 256>}, {transform_indices = @transform_1, window_bounds = array<i64: 256, 256>}, {transform_indices = @transform_2, window_bounds = array<i64: 1, 256>}, {transform_indices = @transform_3, window_bounds = array<i64: 1, 256>}, {transform_indices = @transform_4, window_bounds = array<i64: 16, 256>}, {transform_indices = @transform_5, window_bounds = array<i64: 16, 256>}]} {
    %c0 = arith.constant 0 : index
    %c0_0 = arith.constant 0 : index
    %0 = vector.load %arg2[%c0, %c0_0] : memref<16x256xbf16, #tpu.memory_space<vmem>>, vector<16x256xbf16>
    %c0_1 = arith.constant 0 : index
    %c0_2 = arith.constant 0 : index
    %1 = vector.load %arg3[%c0_1, %c0_2] : memref<256x256xbf16, #tpu.memory_space<vmem>>, vector<256x256xbf16>
    %cst = arith.constant dense<0.000000e+00> : vector<16x256xf32>
    %2 = tpu.matmul %0, %1, %cst {dimension_numbers = #tpu.dot_dimension_numbers<[1], [0], [0], [1], [0, 0, 1, 1], [], []>} : vector<16x256xbf16>, vector<256x256xbf16>, vector<16x256xf32> -> vector<16x256xf32>
    %c0_3 = arith.constant 0 : index
    %c0_4 = arith.constant 0 : index
    %3 = vector.load %arg4[%c0_3, %c0_4] : memref<1x256xf32, #tpu.memory_space<vmem>>, vector<1x256xf32>
    %4 = vector.broadcast %3 : vector<1x256xf32> to vector<16x256xf32>
    %5 = arith.addf %2, %4 : vector<16x256xf32>
    %c0_5 = arith.constant 0 : index
    %c0_6 = arith.constant 0 : index
    %6 = vector.load %arg6[%c0_5, %c0_6] : memref<16x256xf32, #tpu.memory_space<vmem>>, vector<16x256xf32>
    %c0_7 = arith.constant 0 : index
    %c0_8 = arith.constant 0 : index
    %7 = vector.load %arg5[%c0_7, %c0_8] : memref<1x256xf32, #tpu.memory_space<vmem>>, vector<1x256xf32>
    %8 = vector.broadcast %7 : vector<1x256xf32> to vector<16x256xf32>
    %9 = arith.mulf %5, %8 : vector<16x256xf32>
    %10 = arith.addf %6, %9 : vector<16x256xf32>
    %c0_9 = arith.constant 0 : index
    %c0_10 = arith.constant 0 : index
    %11 = vector.load %arg7[%c0_9, %c0_10] : memref<16x256xf32, #tpu.memory_space<vmem>>, vector<16x256xf32>
    tpu.vector_store %arg7[%c0_9, %c0_10], %10 {strides = array<i32>} : memref<16x256xf32, #tpu.memory_space<vmem>>, vector<16x256xf32>,
    return
  }
  func.func @transform_0(%arg0: i32, %arg1: i32) -> (i32, i32) {
    %c0_i32 = arith.constant 0 : i32
    %c0_i32_0 = arith.constant 0 : i32
    return %arg0, %c0_i32 : i32, i32
  }
  func.func @transform_1(%arg0: i32, %arg1: i32) -> (i32, i32) {
    %c0_i32 = arith.constant 0 : i32
    %c0_i32_0 = arith.constant 0 : i32
    return %c0_i32, %arg1 : i32, i32
  }
  func.func @transform_2(%arg0: i32, %arg1: i32) -> (i32, i32) {
    %c0_i32 = arith.constant 0 : i32
    %c0_i32_0 = arith.constant 0 : i32
    return %c0_i32, %arg1 : i32, i32
  }
  func.func @transform_3(%arg0: i32, %arg1: i32) -> (i32, i32) {
    %c0_i32 = arith.constant 0 : i32
    %c0_i32_0 = arith.constant 0 : i32
    return %c0_i32, %arg1 : i32, i32
  }
  func.func @transform_4(%arg0: i32, %arg1: i32) -> (i32, i32) {
    %c0_i32 = arith.constant 0 : i32
    return %arg0, %arg1 : i32, i32
  }
  func.func @transform_5(%arg0: i32, %arg1: i32) -> (i32, i32) {
    %c0_i32 = arith.constant 0 : i32
    return %arg0, %arg1 : i32, i32
  }
}

module attributes {stable_mosaic.version = 11 : i64} {
  func.func @_ln_matmul_kernel(%arg0: i32, %arg1: i32, %arg2: memref<16x256xf32, #tpu.memory_space<vmem>>, %arg3: memref<1x256xf32, #tpu.memory_space<vmem>>, %arg4: memref<1x256xf32, #tpu.memory_space<vmem>>, %arg5: memref<256x384xbf16, #tpu.memory_space<vmem>>, %arg6: memref<1x384xf32, #tpu.memory_space<vmem>>, %arg7: memref<16x384xbf16, #tpu.memory_space<vmem>>, %arg8: memref<16x256xbf16, #tpu.memory_space<vmem>>) attributes {dimension_semantics = [#tpu.dimension_semantics<parallel>, #tpu.dimension_semantics<arbitrary>], iteration_bounds = array<i64: 1, 2>, scalar_prefetch = 0 : i64, scratch_operands = 1 : i64, tpu.core_type = #tpu.core_type<tc>, window_params = [{transform_indices = @transform_0, window_bounds = array<i64: 16, 256>}, {pipeline_mode = #tpu.pipeline_mode<synchronous>, transform_indices = @transform_1, window_bounds = array<i64: 1, 256>}, {pipeline_mode = #tpu.pipeline_mode<synchronous>, transform_indices = @transform_2, window_bounds = array<i64: 1, 256>}, {transform_indices = @transform_3, window_bounds = array<i64: 256, 384>}, {transform_indices = @transform_4, window_bounds = array<i64: 1, 384>}, {transform_indices = @transform_5, window_bounds = array<i64: 16, 384>}]} {
    %c0_i32 = arith.constant 0 : i32
    %0 = arith.cmpi eq, %arg1, %c0_i32 : i32
    %1 = arith.extui %0 : i1 to i32
    %c0_i32_0 = arith.constant 0 : i32
    %2 = arith.cmpi ne, %1, %c0_i32_0 : i32
    scf.if %2 {
      %c0_8 = arith.constant 0 : index
      %c0_9 = arith.constant 0 : index
      %11 = vector.load %arg2[%c0_8, %c0_9] : memref<16x256xf32, #tpu.memory_space<vmem>>, vector<16x256xf32>
      %cst_10 = arith.constant dense<0.000000e+00> : vector<16xf32>
      %12 = vector.multi_reduction <add>, %11, %cst_10 [1] : vector<16x256xf32> to vector<16xf32>
      %13 = vector.shape_cast %12 : vector<16xf32> to vector<16x1xf32>
      %cst_11 = arith.constant 2.560000e+02 : f32
      %14 = vector.broadcast %cst_11 : f32 to vector<16x1xf32>
      %15 = arith.divf %13, %14 : vector<16x1xf32>
      %16 = vector.broadcast %15 : vector<16x1xf32> to vector<16x256xf32>
      %17 = arith.subf %11, %16 : vector<16x256xf32>
      %18 = arith.mulf %17, %17 : vector<16x256xf32>
      %cst_12 = arith.constant dense<0.000000e+00> : vector<16xf32>
      %19 = vector.multi_reduction <add>, %18, %cst_12 [1] : vector<16x256xf32> to vector<16xf32>
      %20 = vector.shape_cast %19 : vector<16xf32> to vector<16x1xf32>
      %cst_13 = arith.constant 2.560000e+02 : f32
      %21 = vector.broadcast %cst_13 : f32 to vector<16x1xf32>
      %22 = arith.divf %20, %21 : vector<16x1xf32>
      %cst_14 = arith.constant 9.99999974E-6 : f32
      %23 = vector.broadcast %cst_14 : f32 to vector<16x1xf32>
      %24 = arith.addf %22, %23 : vector<16x1xf32>
      %25 = math.rsqrt %24 : vector<16x1xf32>
      %26 = vector.broadcast %25 : vector<16x1xf32> to vector<16x256xf32>
      %27 = arith.mulf %17, %26 : vector<16x256xf32>
      %c0_15 = arith.constant 0 : index
      %c0_16 = arith.constant 0 : index
      %28 = vector.load %arg3[%c0_15, %c0_16] : memref<1x256xf32, #tpu.memory_space<vmem>>, vector<1x256xf32>
      %29 = vector.broadcast %28 : vector<1x256xf32> to vector<16x256xf32>
      %30 = arith.mulf %27, %29 : vector<16x256xf32>
      %c0_17 = arith.constant 0 : index
      %c0_18 = arith.constant 0 : index
      %31 = vector.load %arg4[%c0_17, %c0_18] : memref<1x256xf32, #tpu.memory_space<vmem>>, vector<1x256xf32>
      %32 = vector.broadcast %31 : vector<1x256xf32> to vector<16x256xf32>
      %33 = arith.addf %30, %32 : vector<16x256xf32>
      %34 = arith.truncf %33 : vector<16x256xf32> to vector<16x256xbf16>
      %c0_19 = arith.constant 0 : index
      %c0_20 = arith.constant 0 : index
      %35 = vector.load %arg8[%c0_19, %c0_20] : memref<16x256xbf16, #tpu.memory_space<vmem>>, vector<16x256xbf16>
      tpu.vector_store %arg8[%c0_19, %c0_20], %34 {strides = array<i32>} : memref<16x256xbf16, #tpu.memory_space<vmem>>, vector<16x256xbf16>,
    } else {
    }
    %c0 = arith.constant 0 : index
    %c0_1 = arith.constant 0 : index
    %3 = vector.load %arg8[%c0, %c0_1] : memref<16x256xbf16, #tpu.memory_space<vmem>>, vector<16x256xbf16>
    %c0_2 = arith.constant 0 : index
    %c0_3 = arith.constant 0 : index
    %4 = vector.load %arg5[%c0_2, %c0_3] : memref<256x384xbf16, #tpu.memory_space<vmem>>, vector<256x384xbf16>
    %cst = arith.constant dense<0.000000e+00> : vector<16x384xf32>
    %5 = tpu.matmul %3, %4, %cst {dimension_numbers = #tpu.dot_dimension_numbers<[1], [0], [0], [1], [0, 0, 1, 1], [], []>} : vector<16x256xbf16>, vector<256x384xbf16>, vector<16x384xf32> -> vector<16x384xf32>
    %c0_4 = arith.constant 0 : index
    %c0_5 = arith.constant 0 : index
    %6 = vector.load %arg6[%c0_4, %c0_5] : memref<1x384xf32, #tpu.memory_space<vmem>>, vector<1x384xf32>
    %7 = vector.broadcast %6 : vector<1x384xf32> to vector<16x384xf32>
    %8 = arith.addf %5, %7 : vector<16x384xf32>
    %9 = arith.truncf %8 : vector<16x384xf32> to vector<16x384xbf16>
    %c0_6 = arith.constant 0 : index
    %c0_7 = arith.constant 0 : index
    %10 = vector.load %arg7[%c0_6, %c0_7] : memref<16x384xbf16, #tpu.memory_space<vmem>>, vector<16x384xbf16>
    tpu.vector_store %arg7[%c0_6, %c0_7], %9 {strides = array<i32>} : memref<16x384xbf16, #tpu.memory_space<vmem>>, vector<16x384xbf16>,
    return
  }
  func.func @transform_0(%arg0: i32, %arg1: i32) -> (i32, i32) {
    %c0_i32 = arith.constant 0 : i32
    %c0_i32_0 = arith.constant 0 : i32
    return %arg0, %c0_i32 : i32, i32
  }
  func.func @transform_1(%arg0: i32, %arg1: i32) -> (i32, i32) {
    %c0_i32 = arith.constant 0 : i32
    %c0_i32_0 = arith.constant 0 : i32
    %c0_i32_1 = arith.constant 0 : i32
    return %c0_i32, %c0_i32_0 : i32, i32
  }
  func.func @transform_2(%arg0: i32, %arg1: i32) -> (i32, i32) {
    %c0_i32 = arith.constant 0 : i32
    %c0_i32_0 = arith.constant 0 : i32
    %c0_i32_1 = arith.constant 0 : i32
    return %c0_i32, %c0_i32_0 : i32, i32
  }
  func.func @transform_3(%arg0: i32, %arg1: i32) -> (i32, i32) {
    %c0_i32 = arith.constant 0 : i32
    %c0_i32_0 = arith.constant 0 : i32
    return %c0_i32, %arg1 : i32, i32
  }
  func.func @transform_4(%arg0: i32, %arg1: i32) -> (i32, i32) {
    %c0_i32 = arith.constant 0 : i32
    %c0_i32_0 = arith.constant 0 : i32
    return %c0_i32, %arg1 : i32, i32
  }
  func.func @transform_5(%arg0: i32, %arg1: i32) -> (i32, i32) {
    %c0_i32 = arith.constant 0 : i32
    return %arg0, %arg1 : i32, i32
  }
}

module attributes {stable_mosaic.version = 11 : i64} {
  func.func @_ln_matmul_kernel(%arg0: i32, %arg1: i32, %arg2: memref<16x256xf32, #tpu.memory_space<vmem>>, %arg3: memref<1x256xf32, #tpu.memory_space<vmem>>, %arg4: memref<1x256xf32, #tpu.memory_space<vmem>>, %arg5: memref<256x512xbf16, #tpu.memory_space<vmem>>, %arg6: memref<1x512xf32, #tpu.memory_space<vmem>>, %arg7: memref<16x512xbf16, #tpu.memory_space<vmem>>, %arg8: memref<16x256xbf16, #tpu.memory_space<vmem>>) attributes {dimension_semantics = [#tpu.dimension_semantics<parallel>, #tpu.dimension_semantics<arbitrary>], iteration_bounds = array<i64: 1, 2>, scalar_prefetch = 0 : i64, scratch_operands = 1 : i64, tpu.core_type = #tpu.core_type<tc>, window_params = [{transform_indices = @transform_0, window_bounds = array<i64: 16, 256>}, {pipeline_mode = #tpu.pipeline_mode<synchronous>, transform_indices = @transform_1, window_bounds = array<i64: 1, 256>}, {pipeline_mode = #tpu.pipeline_mode<synchronous>, transform_indices = @transform_2, window_bounds = array<i64: 1, 256>}, {transform_indices = @transform_3, window_bounds = array<i64: 256, 512>}, {transform_indices = @transform_4, window_bounds = array<i64: 1, 512>}, {transform_indices = @transform_5, window_bounds = array<i64: 16, 512>}]} {
    %c0_i32 = arith.constant 0 : i32
    %0 = arith.cmpi eq, %arg1, %c0_i32 : i32
    %1 = arith.extui %0 : i1 to i32
    %c0_i32_0 = arith.constant 0 : i32
    %2 = arith.cmpi ne, %1, %c0_i32_0 : i32
    scf.if %2 {
      %c0_11 = arith.constant 0 : index
      %c0_12 = arith.constant 0 : index
      %19 = vector.load %arg2[%c0_11, %c0_12] : memref<16x256xf32, #tpu.memory_space<vmem>>, vector<16x256xf32>
      %cst_13 = arith.constant dense<0.000000e+00> : vector<16xf32>
      %20 = vector.multi_reduction <add>, %19, %cst_13 [1] : vector<16x256xf32> to vector<16xf32>
      %21 = vector.shape_cast %20 : vector<16xf32> to vector<16x1xf32>
      %cst_14 = arith.constant 2.560000e+02 : f32
      %22 = vector.broadcast %cst_14 : f32 to vector<16x1xf32>
      %23 = arith.divf %21, %22 : vector<16x1xf32>
      %24 = vector.broadcast %23 : vector<16x1xf32> to vector<16x256xf32>
      %25 = arith.subf %19, %24 : vector<16x256xf32>
      %26 = arith.mulf %25, %25 : vector<16x256xf32>
      %cst_15 = arith.constant dense<0.000000e+00> : vector<16xf32>
      %27 = vector.multi_reduction <add>, %26, %cst_15 [1] : vector<16x256xf32> to vector<16xf32>
      %28 = vector.shape_cast %27 : vector<16xf32> to vector<16x1xf32>
      %cst_16 = arith.constant 2.560000e+02 : f32
      %29 = vector.broadcast %cst_16 : f32 to vector<16x1xf32>
      %30 = arith.divf %28, %29 : vector<16x1xf32>
      %cst_17 = arith.constant 9.99999974E-6 : f32
      %31 = vector.broadcast %cst_17 : f32 to vector<16x1xf32>
      %32 = arith.addf %30, %31 : vector<16x1xf32>
      %33 = math.rsqrt %32 : vector<16x1xf32>
      %34 = vector.broadcast %33 : vector<16x1xf32> to vector<16x256xf32>
      %35 = arith.mulf %25, %34 : vector<16x256xf32>
      %c0_18 = arith.constant 0 : index
      %c0_19 = arith.constant 0 : index
      %36 = vector.load %arg3[%c0_18, %c0_19] : memref<1x256xf32, #tpu.memory_space<vmem>>, vector<1x256xf32>
      %37 = vector.broadcast %36 : vector<1x256xf32> to vector<16x256xf32>
      %38 = arith.mulf %35, %37 : vector<16x256xf32>
      %c0_20 = arith.constant 0 : index
      %c0_21 = arith.constant 0 : index
      %39 = vector.load %arg4[%c0_20, %c0_21] : memref<1x256xf32, #tpu.memory_space<vmem>>, vector<1x256xf32>
      %40 = vector.broadcast %39 : vector<1x256xf32> to vector<16x256xf32>
      %41 = arith.addf %38, %40 : vector<16x256xf32>
      %42 = arith.truncf %41 : vector<16x256xf32> to vector<16x256xbf16>
      %c0_22 = arith.constant 0 : index
      %c0_23 = arith.constant 0 : index
      %43 = vector.load %arg8[%c0_22, %c0_23] : memref<16x256xbf16, #tpu.memory_space<vmem>>, vector<16x256xbf16>
      tpu.vector_store %arg8[%c0_22, %c0_23], %42 {strides = array<i32>} : memref<16x256xbf16, #tpu.memory_space<vmem>>, vector<16x256xbf16>,
    } else {
    }
    %c0 = arith.constant 0 : index
    %c0_1 = arith.constant 0 : index
    %3 = vector.load %arg8[%c0, %c0_1] : memref<16x256xbf16, #tpu.memory_space<vmem>>, vector<16x256xbf16>
    %c0_2 = arith.constant 0 : index
    %c0_3 = arith.constant 0 : index
    %4 = vector.load %arg5[%c0_2, %c0_3] : memref<256x512xbf16, #tpu.memory_space<vmem>>, vector<256x512xbf16>
    %cst = arith.constant dense<0.000000e+00> : vector<16x512xf32>
    %5 = tpu.matmul %3, %4, %cst {dimension_numbers = #tpu.dot_dimension_numbers<[1], [0], [0], [1], [0, 0, 1, 1], [], []>} : vector<16x256xbf16>, vector<256x512xbf16>, vector<16x512xf32> -> vector<16x512xf32>
    %c0_4 = arith.constant 0 : index
    %c0_5 = arith.constant 0 : index
    %6 = vector.load %arg6[%c0_4, %c0_5] : memref<1x512xf32, #tpu.memory_space<vmem>>, vector<1x512xf32>
    %7 = vector.broadcast %6 : vector<1x512xf32> to vector<16x512xf32>
    %8 = arith.addf %5, %7 : vector<16x512xf32>
    %cst_6 = arith.constant 5.000000e-01 : f32
    %9 = vector.broadcast %cst_6 : f32 to vector<16x512xf32>
    %10 = arith.mulf %9, %8 : vector<16x512xf32>
    %cst_7 = arith.constant 0.707106769 : f32
    %11 = vector.broadcast %cst_7 : f32 to vector<16x512xf32>
    %12 = arith.mulf %8, %11 : vector<16x512xf32>
    %13 = math.erf %12 : vector<16x512xf32>
    %cst_8 = arith.constant 1.000000e+00 : f32
    %14 = vector.broadcast %cst_8 : f32 to vector<16x512xf32>
    %15 = arith.addf %14, %13 : vector<16x512xf32>
    %16 = arith.mulf %10, %15 : vector<16x512xf32>
    %17 = arith.truncf %16 : vector<16x512xf32> to vector<16x512xbf16>
    %c0_9 = arith.constant 0 : index
    %c0_10 = arith.constant 0 : index
    %18 = vector.load %arg7[%c0_9, %c0_10] : memref<16x512xbf16, #tpu.memory_space<vmem>>, vector<16x512xbf16>
    tpu.vector_store %arg7[%c0_9, %c0_10], %17 {strides = array<i32>} : memref<16x512xbf16, #tpu.memory_space<vmem>>, vector<16x512xbf16>,
    return
  }
  func.func @transform_0(%arg0: i32, %arg1: i32) -> (i32, i32) {
    %c0_i32 = arith.constant 0 : i32
    %c0_i32_0 = arith.constant 0 : i32
    return %arg0, %c0_i32 : i32, i32
  }
  func.func @transform_1(%arg0: i32, %arg1: i32) -> (i32, i32) {
    %c0_i32 = arith.constant 0 : i32
    %c0_i32_0 = arith.constant 0 : i32
    %c0_i32_1 = arith.constant 0 : i32
    return %c0_i32, %c0_i32_0 : i32, i32
  }
  func.func @transform_2(%arg0: i32, %arg1: i32) -> (i32, i32) {
    %c0_i32 = arith.constant 0 : i32
    %c0_i32_0 = arith.constant 0 : i32
    %c0_i32_1 = arith.constant 0 : i32
    return %c0_i32, %c0_i32_0 : i32, i32
  }
  func.func @transform_3(%arg0: i32, %arg1: i32) -> (i32, i32) {
    %c0_i32 = arith.constant 0 : i32
    %c0_i32_0 = arith.constant 0 : i32
    return %c0_i32, %arg1 : i32, i32
  }
  func.func @transform_4(%arg0: i32, %arg1: i32) -> (i32, i32) {
    %c0_i32 = arith.constant 0 : i32
    %c0_i32_0 = arith.constant 0 : i32
    return %c0_i32, %arg1 : i32, i32
  }
  func.func @transform_5(%arg0: i32, %arg1: i32) -> (i32, i32) {
    %c0_i32 = arith.constant 0 : i32
    return %arg0, %arg1 : i32, i32
  }
}

module attributes {stable_mosaic.version = 11 : i64} {
  func.func @_fc2_residual_kernel(%arg0: i32, %arg1: i32, %arg2: i32, %arg3: memref<16x512xbf16, #tpu.memory_space<vmem>>, %arg4: memref<512x256xbf16, #tpu.memory_space<vmem>>, %arg5: memref<1x256xf32, #tpu.memory_space<vmem>>, %arg6: memref<1x256xf32, #tpu.memory_space<vmem>>, %arg7: memref<16x256xf32, #tpu.memory_space<vmem>>, %arg8: memref<16x256xf32, #tpu.memory_space<vmem>>) attributes {dimension_semantics = [#tpu.dimension_semantics<parallel>, #tpu.dimension_semantics<parallel>, #tpu.dimension_semantics<arbitrary>], iteration_bounds = array<i64: 1, 1, 2>, scalar_prefetch = 0 : i64, scratch_operands = 0 : i64, tpu.core_type = #tpu.core_type<tc>, window_params = [{transform_indices = @transform_0, window_bounds = array<i64: 16, 512>}, {transform_indices = @transform_1, window_bounds = array<i64: 512, 256>}, {transform_indices = @transform_2, window_bounds = array<i64: 1, 256>}, {transform_indices = @transform_3, window_bounds = array<i64: 1, 256>}, {transform_indices = @transform_4, window_bounds = array<i64: 16, 256>}, {transform_indices = @transform_5, window_bounds = array<i64: 16, 256>}]} {
    %c0_i32 = arith.constant 0 : i32
    %0 = arith.cmpi eq, %arg2, %c0_i32 : i32
    %1 = arith.extui %0 : i1 to i32
    %c0_i32_0 = arith.constant 0 : i32
    %2 = arith.cmpi ne, %1, %c0_i32_0 : i32
    scf.if %2 {
      %cst_9 = arith.constant 0.000000e+00 : f32
      %12 = vector.broadcast %cst_9 : f32 to vector<16x256xf32>
      %c0_10 = arith.constant 0 : index
      %c0_11 = arith.constant 0 : index
      %13 = vector.load %arg8[%c0_10, %c0_11] : memref<16x256xf32, #tpu.memory_space<vmem>>, vector<16x256xf32>
      tpu.vector_store %arg8[%c0_10, %c0_11], %12 {strides = array<i32>} : memref<16x256xf32, #tpu.memory_space<vmem>>, vector<16x256xf32>,
    } else {
    }
    %c0 = arith.constant 0 : index
    %c0_1 = arith.constant 0 : index
    %3 = vector.load %arg8[%c0, %c0_1] : memref<16x256xf32, #tpu.memory_space<vmem>>, vector<16x256xf32>
    %c0_2 = arith.constant 0 : index
    %c0_3 = arith.constant 0 : index
    %4 = vector.load %arg3[%c0_2, %c0_3] : memref<16x512xbf16, #tpu.memory_space<vmem>>, vector<16x512xbf16>
    %c0_4 = arith.constant 0 : index
    %c0_5 = arith.constant 0 : index
    %5 = vector.load %arg4[%c0_4, %c0_5] : memref<512x256xbf16, #tpu.memory_space<vmem>>, vector<512x256xbf16>
    %cst = arith.constant dense<0.000000e+00> : vector<16x256xf32>
    %6 = tpu.matmul %4, %5, %cst {dimension_numbers = #tpu.dot_dimension_numbers<[1], [0], [0], [1], [0, 0, 1, 1], [], []>} : vector<16x512xbf16>, vector<512x256xbf16>, vector<16x256xf32> -> vector<16x256xf32>
    %7 = arith.addf %3, %6 : vector<16x256xf32>
    %c0_6 = arith.constant 0 : index
    %c0_7 = arith.constant 0 : index
    %8 = vector.load %arg8[%c0_6, %c0_7] : memref<16x256xf32, #tpu.memory_space<vmem>>, vector<16x256xf32>
    tpu.vector_store %arg8[%c0_6, %c0_7], %7 {strides = array<i32>} : memref<16x256xf32, #tpu.memory_space<vmem>>, vector<16x256xf32>,
    %c1_i32 = arith.constant 1 : i32
    %9 = arith.cmpi eq, %arg2, %c1_i32 : i32
    %10 = arith.extui %9 : i1 to i32
    %c0_i32_8 = arith.constant 0 : i32
    %11 = arith.cmpi ne, %10, %c0_i32_8 : i32
    scf.if %11 {
      %c0_9 = arith.constant 0 : index
      %c0_10 = arith.constant 0 : index
      %12 = vector.load %arg7[%c0_9, %c0_10] : memref<16x256xf32, #tpu.memory_space<vmem>>, vector<16x256xf32>
      %c0_11 = arith.constant 0 : index
      %c0_12 = arith.constant 0 : index
      %13 = vector.load %arg8[%c0_11, %c0_12] : memref<16x256xf32, #tpu.memory_space<vmem>>, vector<16x256xf32>
      %c0_13 = arith.constant 0 : index
      %c0_14 = arith.constant 0 : index
      %14 = vector.load %arg5[%c0_13, %c0_14] : memref<1x256xf32, #tpu.memory_space<vmem>>, vector<1x256xf32>
      %15 = vector.broadcast %14 : vector<1x256xf32> to vector<16x256xf32>
      %16 = arith.addf %13, %15 : vector<16x256xf32>
      %c0_15 = arith.constant 0 : index
      %c0_16 = arith.constant 0 : index
      %17 = vector.load %arg6[%c0_15, %c0_16] : memref<1x256xf32, #tpu.memory_space<vmem>>, vector<1x256xf32>
      %18 = vector.broadcast %17 : vector<1x256xf32> to vector<16x256xf32>
      %19 = arith.mulf %16, %18 : vector<16x256xf32>
      %20 = arith.addf %12, %19 : vector<16x256xf32>
      %c0_17 = arith.constant 0 : index
      %c0_18 = arith.constant 0 : index
      %21 = vector.load %arg8[%c0_17, %c0_18] : memref<16x256xf32, #tpu.memory_space<vmem>>, vector<16x256xf32>
      tpu.vector_store %arg8[%c0_17, %c0_18], %20 {strides = array<i32>} : memref<16x256xf32, #tpu.memory_space<vmem>>, vector<16x256xf32>,
    } else {
    }
    return
  }
  func.func @transform_0(%arg0: i32, %arg1: i32, %arg2: i32) -> (i32, i32) {
    %c0_i32 = arith.constant 0 : i32
    return %arg0, %arg2 : i32, i32
  }
  func.func @transform_1(%arg0: i32, %arg1: i32, %arg2: i32) -> (i32, i32) {
    %c0_i32 = arith.constant 0 : i32
    return %arg2, %arg1 : i32, i32
  }
  func.func @transform_2(%arg0: i32, %arg1: i32, %arg2: i32) -> (i32, i32) {
    %c0_i32 = arith.constant 0 : i32
    %c0_i32_0 = arith.constant 0 : i32
    return %c0_i32, %arg1 : i32, i32
  }
  func.func @transform_3(%arg0: i32, %arg1: i32, %arg2: i32) -> (i32, i32) {
    %c0_i32 = arith.constant 0 : i32
    %c0_i32_0 = arith.constant 0 : i32
    return %c0_i32, %arg1 : i32, i32
  }
  func.func @transform_4(%arg0: i32, %arg1: i32, %arg2: i32) -> (i32, i32) {
    %c0_i32 = arith.constant 0 : i32
    return %arg0, %arg1 : i32, i32
  }
  func.func @transform_5(%arg0: i32, %arg1: i32, %arg2: i32) -> (i32, i32) {
    %c0_i32 = arith.constant 0 : i32
    return %arg0, %arg1 : i32, i32
  }
}

</mosaic_0001>

<llo_original>
// kernel: block_forward.7
$region0: #{block_forward.7}
  #allocation0 [shape = 'u32[]', space=smem, size = 0x4, offset = 0x4, fixed_abs, tag = 'smem constant byte address 0x4 - core index']
  #allocation1 [shape = 'u32[72,128]{1,0:T(1,128)}', space=vmem, size = 0x9000, scoped, tag = 'internal scratch']
  %s0 = inlined_call_operand.vmem [shape: bf16[16,256], index: 0, kind: input, shape index: {}]
  %s1 = inlined_call_operand.hbm [shape: bf16[256,256], index: 1, kind: input, shape index: {}]
  %s2 = inlined_call_operand.vmem [shape: f32[1,256], index: 2, kind: input, shape index: {}]
  %s3 = inlined_call_operand.vmem [shape: f32[1,256], index: 3, kind: input, shape index: {}]
  %s4 = inlined_call_operand.hbm [shape: f32[16,256], index: 4, kind: input, shape index: {}]
  %s5 = inlined_call_operand.vmem [shape: f32[16,256], index: 5, kind: output, shape index: {}]
  %s6 = sld [smem:[#allocation0]]
  $region38: #{block_forward.7} parent=0
    _
  %s8 = ssub.s32 1, %s6
  %s9 = scalar_select 0, %s8, %s6
  $region1: #{block_forward.7} parent=0
    #allocation2 [shape = 'u8[131072]{0}', space=vmem, size = 0x20000, scoped, tag = 'input window, operand 1, single buffered']
    #allocation3 [shape = 's32[1]{0}', space=sflag, size = 0x4, scoped, tag = 'scoped memory for block_forward.7']
    #allocation4 [shape = 'u8[16384]{0}', space=vmem, size = 0x4000, scoped, tag = 'input window, operand 4, single buffered']
    #allocation5 [shape = 's32[1]{0}', space=sflag, size = 0x4, scoped, tag = 'scoped memory for block_forward.7']
    %10 = vsyncpa [#allocation3], 0
    %11 = vsyncpa [#allocation5], 0
    // Predicated region
    $region2: #{block_forward.7} parent=1 // pred_check
      _
    $region3: #{block_forward.7} parent=1 // pred_check_branch
      %13 = sbr.rel (0) target = $region5
    $region4: #{block_forward.7} parent=1 // pred_region
      _
    $region5: #{block_forward.7} parent=1 // pred_fallthru
      _
    // Predicated region
    $region6: #{block_forward.7} parent=1 // pred_check
      _
    $region7: #{block_forward.7} parent=1 // pred_check_branch
      %15 = sbr.rel (0) target = $region9
    $region8: #{block_forward.7} parent=1 // pred_region
      %17 = vsyncadd [#allocation3], 0
      %s18 = sshll.u32 %s1, 4
      %s19 = int_to_ptr.hbm [resolvable:$true] %s18
      %s20 = sshll.u32 [#allocation2], 4
      %s21 = int_to_ptr.vmem [resolvable:$true] %s20
      %26 = dma.hbm_to_vmem [thread:$0]  %s19, 4096, %s21, [#allocation3], 128, 128, 8
    $region9: #{block_forward.7} parent=1 // pred_fallthru
      _
    // Predicated region
    $region10: #{block_forward.7} parent=1 // pred_check
      _
    $region11: #{block_forward.7} parent=1 // pred_check_branch
      %28 = sbr.rel (0) target = $region13
    $region12: #{block_forward.7} parent=1 // pred_region
      _
    $region13: #{block_forward.7} parent=1 // pred_fallthru
      _
    // Predicated region
    $region14: #{block_forward.7} parent=1 // pred_check
      _
    $region15: #{block_forward.7} parent=1 // pred_check_branch
      %30 = sbr.rel (0) target = $region17
    $region16: #{block_forward.7} parent=1 // pred_region
      _
    $region17: #{block_forward.7} parent=1 // pred_fallthru
      _
    // Predicated region
    $region18: #{block_forward.7} parent=1 // pred_check
      _
    $region19: #{block_forward.7} parent=1 // pred_check_branch
      %32 = sbr.rel (0) target = $region21
    $region20: #{block_forward.7} parent=1 // pred_region
      %34 = vsyncadd [#allocation5], 0
      %s35 = sshll.u32 %s4, 4
      %s36 = int_to_ptr.hbm [resolvable:$true] %s35
      %s37 = sshll.u32 [#allocation4], 4
      %s38 = int_to_ptr.vmem [resolvable:$true] %s37
      %43 = dma.hbm_to_vmem [thread:$0]  %s36, 512, %s38, [#allocation5], 256, 256, 16
    $region21: #{block_forward.7} parent=1 // pred_fallthru
      _
    // Predicated region
    $region22: #{block_forward.7} parent=1 // pred_check
      _
    $region23: #{block_forward.7} parent=1 // pred_check_branch
      %45 = sbr.rel (0) target = $region25
    $region24: #{block_forward.7} parent=1 // pred_region
      %47 = dma.done [#allocation3], 4096
    $region25: #{block_forward.7} parent=1 // pred_fallthru
      _
    // Predicated region
    $region26: #{block_forward.7} parent=1 // pred_check
      _
    $region27: #{block_forward.7} parent=1 // pred_check_branch
      %49 = sbr.rel (0) target = $region29
    $region28: #{block_forward.7} parent=1 // pred_region
      %51 = dma.done [#allocation5], 512
    $region29: #{block_forward.7} parent=1 // pred_fallthru
      _
    %v52 = vld [vmem:[%s0] sm:$0xff]
    %v53 = vld [vmem:[%s0 + $0x8] sm:$0xff]
    %v54 = vld [vmem:[#allocation2] sm:$0xff]
    %v55 = vld [vmem:[#allocation2 + $0x8] sm:$0xff]
    %v56 = vld [vmem:[#allocation2 + $0x10] sm:$0xff]
    %v57 = vld [vmem:[#allocation2 + $0x18] sm:$0xff]
    %v58 = vld [vmem:[#allocation2 + $0x20] sm:$0xff]
    %v59 = vld [vmem:[#allocation2 + $0x28] sm:$0xff]
    %v60 = vld [vmem:[#allocation2 + $0x30] sm:$0xff]
    %v61 = vld [vmem:[#allocation2 + $0x38] sm:$0xff]
    %v62 = vld [vmem:[#allocation2 + $0x40] sm:$0xff]
    %v63 = vld [vmem:[#allocation2 + $0x48] sm:$0xff]
    %v64 = vld [vmem:[#allocation2 + $0x50] sm:$0xff]
    %v65 = vld [vmem:[#allocation2 + $0x58] sm:$0xff]
    %v66 = vld [vmem:[#allocation2 + $0x60] sm:$0xff]
    %v67 = vld [vmem:[#allocation2 + $0x68] sm:$0xff]
    %v68 = vld [vmem:[#allocation2 + $0x70] sm:$0xff]
    %v69 = vld [vmem:[#allocation2 + $0x78] sm:$0xff]
    %v70 = vld [vmem:[#allocation2 + $0x80] sm:$0xff]
    %v71 = vld [vmem:[#allocation2 + $0x88] sm:$0xff]
    %v72 = vld [vmem:[#allocation2 + $0x90] sm:$0xff]
    %v73 = vld [vmem:[#allocation2 + $0x98] sm:$0xff]
    %v74 = vld [vmem:[#allocation2 + $0xa0] sm:$0xff]
    %v75 = vld [vmem:[#allocation2 + $0xa8] sm:$0xff]
    %v76 = vld [vmem:[#allocation2 + $0xb0] sm:$0xff]
    %v77 = vld [vmem:[#allocation2 + $0xb8] sm:$0xff]
    %v78 = vld [vmem:[#allocation2 + $0xc0] sm:$0xff]
    %v79 = vld [vmem:[#allocation2 + $0xc8] sm:$0xff]
    %v80 = vld [vmem:[#allocation2 + $0xd0] sm:$0xff]
    %v81 = vld [vmem:[#allocation2 + $0xd8] sm:$0xff]
    %v82 = vld [vmem:[#allocation2 + $0xe0] sm:$0xff]
    %v83 = vld [vmem:[#allocation2 + $0xe8] sm:$0xff]
    %v84 = vld [vmem:[#allocation2 + $0xf0] sm:$0xff]
    %v85 = vld [vmem:[#allocation2 + $0xf8] sm:$0xff]
    %v86 = vld [vmem:[%s2] sm:$0x3]
    %v88 = vperm.slane %v86, 0
    %v89 = vperm.slane %v86, 1
    %v94 = vunpack.c.l.b16 %v52
    %v95 = vunpack.c.h.b16 %v52
    %v96 = vunpack.c.l.b16 %v53
    %v97 = vunpack.c.h.b16 %v53
    %v98 = vpack.c.b16 %v96, %v94
    %v99 = vpack.c.b16 %v97, %v95
    %v134 = vunpack.c.l.b16 %v54
    %v135 = vunpack.c.h.b16 %v54
    %v136 = vunpack.c.l.b16 %v55
    %v137 = vunpack.c.h.b16 %v55
    %v138 = vunpack.c.l.b16 %v56
    %v139 = vunpack.c.h.b16 %v56
    %v140 = vunpack.c.l.b16 %v57
    %v141 = vunpack.c.h.b16 %v57
    %v142 = vunpack.c.l.b16 %v58
    %v143 = vunpack.c.h.b16 %v58
    %v144 = vunpack.c.l.b16 %v59
    %v145 = vunpack.c.h.b16 %v59
    %v146 = vunpack.c.l.b16 %v60
    %v147 = vunpack.c.h.b16 %v60
    %v148 = vunpack.c.l.b16 %v61
    %v149 = vunpack.c.h.b16 %v61
    %v150 = vunpack.c.l.b16 %v62
    %v151 = vunpack.c.h.b16 %v62
    %v152 = vunpack.c.l.b16 %v63
    %v153 = vunpack.c.h.b16 %v63
    %v154 = vunpack.c.l.b16 %v64
    %v155 = vunpack.c.h.b16 %v64
    %v156 = vunpack.c.l.b16 %v65
    %v157 = vunpack.c.h.b16 %v65
    %v158 = vunpack.c.l.b16 %v66
    %v159 = vunpack.c.h.b16 %v66
    %v160 = vunpack.c.l.b16 %v67
    %v161 = vunpack.c.h.b16 %v67
    %v162 = vunpack.c.l.b16 %v68
    %v163 = vunpack.c.h.b16 %v68
    %v164 = vunpack.c.l.b16 %v69
    %v165 = vunpack.c.h.b16 %v69
    %v166 = vunpack.c.l.b16 %v70
    %v167 = vunpack.c.h.b16 %v70
    %v168 = vunpack.c.l.b16 %v71
    %v169 = vunpack.c.h.b16 %v71
    %v170 = vunpack.c.l.b16 %v72
    %v171 = vunpack.c.h.b16 %v72
    %v172 = vunpack.c.l.b16 %v73
    %v173 = vunpack.c.h.b16 %v73
    %v174 = vunpack.c.l.b16 %v74
    %v175 = vunpack.c.h.b16 %v74
    %v176 = vunpack.c.l.b16 %v75
    %v177 = vunpack.c.h.b16 %v75
    %v178 = vunpack.c.l.b16 %v76
    %v179 = vunpack.c.h.b16 %v76
    %v180 = vunpack.c.l.b16 %v77
    %v181 = vunpack.c.h.b16 %v77
    %v182 = vunpack.c.l.b16 %v78
    %v183 = vunpack.c.h.b16 %v78
    %v184 = vunpack.c.l.b16 %v79
    %v185 = vunpack.c.h.b16 %v79
    %v186 = vunpack.c.l.b16 %v80
    %v187 = vunpack.c.h.b16 %v80
    %v188 = vunpack.c.l.b16 %v81
    %v189 = vunpack.c.h.b16 %v81
    %v190 = vunpack.c.l.b16 %v82
    %v191 = vunpack.c.h.b16 %v82
    %v192 = vunpack.c.l.b16 %v83
    %v193 = vunpack.c.h.b16 %v83
    %v194 = vunpack.c.l.b16 %v84
    %v195 = vunpack.c.h.b16 %v84
    %v196 = vunpack.c.l.b16 %v85
    %v197 = vunpack.c.h.b16 %v85
    %v198 = vpack.c.b16 %v136, %v134
    %v199 = vpack.c.b16 %v137, %v135
    %v200 = vpack.c.b16 %v140, %v138
    %v201 = vpack.c.b16 %v141, %v139
    %v202 = vpack.c.b16 %v144, %v142
    %v203 = vpack.c.b16 %v145, %v143
    %v204 = vpack.c.b16 %v148, %v146
    %v205 = vpack.c.b16 %v149, %v147
    %v206 = vpack.c.b16 %v152, %v150
    %v207 = vpack.c.b16 %v153, %v151
    %v208 = vpack.c.b16 %v156, %v154
    %v209 = vpack.c.b16 %v157, %v155
    %v210 = vpack.c.b16 %v160, %v158
    %v211 = vpack.c.b16 %v161, %v159
    %v212 = vpack.c.b16 %v164, %v162
    %v213 = vpack.c.b16 %v165, %v163
    %v214 = vpack.c.b16 %v168, %v166
    %v215 = vpack.c.b16 %v169, %v167
    %v216 = vpack.c.b16 %v172, %v170
    %v217 = vpack.c.b16 %v173, %v171
    %v218 = vpack.c.b16 %v176, %v174
    %v219 = vpack.c.b16 %v177, %v175
    %v220 = vpack.c.b16 %v180, %v178
    %v221 = vpack.c.b16 %v181, %v179
    %v222 = vpack.c.b16 %v184, %v182
    %v223 = vpack.c.b16 %v185, %v183
    %v224 = vpack.c.b16 %v188, %v186
    %v225 = vpack.c.b16 %v189, %v187
    %v226 = vpack.c.b16 %v192, %v190
    %v227 = vpack.c.b16 %v193, %v191
    %v228 = vpack.c.b16 %v196, %v194
    %v229 = vpack.c.b16 %v197, %v195
    %262 = vmatpush.bf16.msra.mxu0 %v212
    %263 = vmatpush.bf16.msra.mxu0 %v210
    %264 = vmatpush.bf16.msra.mxu0 %v208
    %265 = vmatpush.bf16.msra.mxu0 %v206
    %266 = vmatpush.bf16.msra.mxu0 %v204
    %267 = vmatpush.bf16.msra.mxu0 %v202
    %268 = vmatpush.bf16.msra.mxu0 %v200
    %269 = vmatpush.bf16.msra.mxu0 %v198
    %270 = vmatmul.bf16.gmra.mxu0 %v98
    %v271 = vpop.f32.mrf.mxu0
    %v272 = vadd.f32 %v88, %v271
    %v273 = vpop.f32.mrf.mxu0
    %v274 = vadd.f32 %v88, %v273
    %275 = vdwg.mxu0
    %276 = vmatpush.bf16.msra.mxu0 %v228
    %277 = vmatpush.bf16.msra.mxu0 %v226
    %278 = vmatpush.bf16.msra.mxu0 %v224
    %279 = vmatpush.bf16.msra.mxu0 %v222
    %280 = vmatpush.bf16.msra.mxu0 %v220
    %281 = vmatpush.bf16.msra.mxu0 %v218
    %282 = vmatpush.bf16.msra.mxu0 %v216
    %283 = vmatpush.bf16.msra.mxu0 %v214
    %284 = vmatmul.bf16.gmra.mxu0 %v99
    %v285 = vpop.f32.mrf.mxu0
    %v286 = vadd.f32 %v272, %v285
    %v287 = vpop.f32.mrf.mxu0
    %v288 = vadd.f32 %v274, %v287
    %289 = vdwg.mxu0
    %290 = vmatpush.bf16.msra.mxu0 %v213
    %291 = vmatpush.bf16.msra.mxu0 %v211
    %292 = vmatpush.bf16.msra.mxu0 %v209
    %293 = vmatpush.bf16.msra.mxu0 %v207
    %294 = vmatpush.bf16.msra.mxu0 %v205
    %295 = vmatpush.bf16.msra.mxu0 %v203
    %296 = vmatpush.bf16.msra.mxu0 %v201
    %297 = vmatpush.bf16.msra.mxu0 %v199
    %298 = vmatmul.bf16.gmra.mxu0 %v98
    %v299 = vpop.f32.mrf.mxu0
    %v300 = vadd.f32 %v89, %v299
    %v301 = vpop.f32.mrf.mxu0
    %v302 = vadd.f32 %v89, %v301
    %303 = vdwg.mxu0
    %304 = vmatpush.bf16.msra.mxu0 %v229
    %305 = vmatpush.bf16.msra.mxu0 %v227
    %306 = vmatpush.bf16.msra.mxu0 %v225
    %307 = vmatpush.bf16.msra.mxu0 %v223
    %308 = vmatpush.bf16.msra.mxu0 %v221
    %309 = vmatpush.bf16.msra.mxu0 %v219
    %310 = vmatpush.bf16.msra.mxu0 %v217
    %311 = vmatpush.bf16.msra.mxu0 %v215
    %312 = vmatmul.bf16.gmra.mxu0 %v99
    %v313 = vpop.f32.mrf.mxu0
    %v314 = vadd.f32 %v300, %v313
    %v315 = vpop.f32.mrf.mxu0
    %v316 = vadd.f32 %v302, %v315
    %317 = vdwg.mxu0
    %v318 = vld [vmem:[#allocation4] sm:$0xff]
    %v319 = vld [vmem:[#allocation4 + $0x8] sm:$0xff]
    %v320 = vld [vmem:[#allocation4 + $0x10] sm:$0xff]
    %v321 = vld [vmem:[#allocation4 + $0x18] sm:$0xff]
    %v322 = vld [vmem:[%s3] sm:$0x3]
    %v324 = vperm.slane %v322, 0
    %v325 = vperm.slane %v322, 1
    %v328 = vmul.f32 %v286, %v324
    %v329 = vmul.f32 %v314, %v325
    %v330 = vmul.f32 %v288, %v324
    %v331 = vmul.f32 %v316, %v325
    %v332 = vadd.f32 %v318, %v328
    %v333 = vadd.f32 %v319, %v329
    %v334 = vadd.f32 %v320, %v330
    %v335 = vadd.f32 %v321, %v331
    %336 = vst [vmem:[%s5] sm:$0xff] %v332
    %337 = vst [vmem:[%s5 + $0x8] sm:$0xff] %v333
    %338 = vst [vmem:[%s5 + $0x10] sm:$0xff] %v334
    %339 = vst [vmem:[%s5 + $0x18] sm:$0xff] %v335
    // Predicated region
    $region30: #{block_forward.7} parent=1 // pred_check
      _
    $region31: #{block_forward.7} parent=1 // pred_check_branch
      %341 = sbr.rel (0) target = $region33
    $region32: #{block_forward.7} parent=1 // pred_region
      _
    $region33: #{block_forward.7} parent=1 // pred_fallthru
      _
    // Predicated region
    $region34: #{block_forward.7} parent=1 // pred_check
      _
    $region35: #{block_forward.7} parent=1 // pred_check_branch
      %343 = sbr.rel (0) target = $region37
    $region36: #{block_forward.7} parent=1 // pred_region
      _
    $region37: #{block_forward.7} parent=1 // pred_fallthru
      _
    %344 = vsyncpa [#allocation3], 1
    %345 = vsyncpa [#allocation5], 1

// kernel: block_forward.6
$region0: #{block_forward.6}
  #allocation0 [shape = 'u32[]', space=smem, size = 0x4, offset = 0x4, fixed_abs, tag = 'smem constant byte address 0x4 - core index']
  #allocation1 [shape = 'u32[72,128]{1,0:T(1,128)}', space=vmem, size = 0x9000, scoped, tag = 'internal scratch']
  #allocation2 [shape = 'f32[8,1]{1,0:T(8,128)}', space=vmem, size = 0x1000, scoped, tag = 'scratch operand']
  #allocation3 [shape = 'f32[8,1]{1,0:T(8,128)}', space=vmem, size = 0x1000, scoped, tag = 'scratch operand']
  #allocation4 [shape = 'f32[8,128]{1,0:T(8,128)}', space=vmem, size = 0x1000, scoped, tag = 'scratch operand']
  %s0 = inlined_call_operand.vmem [shape: bf16[2,8,768], index: 0, kind: input, shape index: {}, may-alias: {0,1,2}]
  %s1 = inlined_call_operand.vmem [shape: bf16[2,8,768], index: 1, kind: input, shape index: {}, may-alias: {0,1,2}]
  %s2 = inlined_call_operand.vmem [shape: bf16[2,8,768], index: 2, kind: input, shape index: {}, may-alias: {0,1,2}]
  %s3 = inlined_call_operand.vmem [shape: bf16[2,8,256], index: 3, kind: output, shape index: {}]
  %s4 = sld [smem:[#allocation0]]
  $region53: #{block_forward.6} parent=0
    _
  %s6 = ssub.s32 1, %s4
  %s7 = scalar_select 0, %s6, %s4
  loop: start=0, step=1, limit=6
  $region2: #{block_forward.6} parent=0 // loop_pre_header
    _
  $region3: #{block_forward.6} parent=0 // loop_header
    %s9 = sphi 0, %s13
    %p10 = scmp.ge.s32.totalorder %s9, 6
    %s16 = sphi 0, %s42
    %s17 = sphi 0, %s38
    %s18 = sphi 0, %s34
    %s19 = sphi 0, %s30
    %s20 = sphi 0, %s16
    %s21 = sphi 0, %s17
    %s22 = sphi 0, %s18
    %s23 = sphi 0, %s19
    %s24 = sphi 0, %s20
    %s25 = sphi 0, %s21
    %s26 = sphi 0, %s22
    %s27 = sphi 0, %s23
    %s49 = sphi 0, %s51
    %s52 = sphi 0, %s49
    %s53 = sphi 0, %s52
    %s69 = sphi 0, %s53
    %s81 = sphi 0, %s83
    %s84 = sphi 0, %s81
    %s85 = sphi 0, %s84
    %s101 = sphi 0, %s85
    %s113 = sphi 0, %s115
    %s116 = sphi 0, %s113
    %s117 = sphi 0, %s116
    %s133 = sphi 0, %s117
    %s143 = sphi 0, %s145
    %s146 = sphi 0, %s143
    %s147 = sphi 0, %s146
    %s163 = sphi 0, %s147
  $region4: #{block_forward.6} parent=0 // loop_header_branch
    %12 = sbr.rel (%p10) target = $region8
  $region5: #{block_forward.6} parent=0 // loop_body
    %s14 = ssub.s32 %s9, 1
    %s15 = ssub.s32 %s9, 2
    %s28 = sadd.s32 1, %s19
    %p29 = scmp.ge.s32.totalorder %s28, 1
    %s30 = scalar_select %p29, 0, %s28
    %s31 = sadd.s32 1, %s18
    %s32 = scalar_select %p29, %s31, %s18
    %p33 = scmp.ge.s32.totalorder %s32, 1
    %s34 = scalar_select %p33, 0, %s32
    %s35 = sadd.s32 1, %s17
    %s36 = scalar_select %p33, %s35, %s17
    %p37 = scmp.ge.s32.totalorder %s36, 2
    %s38 = scalar_select %p37, 0, %s36
    %s39 = sadd.s32 1, %s16
    %s40 = scalar_select %p37, %s39, %s16
    %p41 = scmp.ge.s32.totalorder %s40, 2
    %s42 = scalar_select %p41, 0, %s40
    %s43 = ssub.s32 %s16, %s42
    %s44 = ssub.s32 %s18, %s34
    %s45 = sor.u32 %s43, %s44
    %s46 = ssub.s32 %s17, %s38
    %s47 = sor.u32 %s45, %s46
    %p48 = scmp.eq.s32.totalorder %s47, 0
    %s50 = sadd.s32 %s49, 1
    %s51 = scalar_select %p48, %s49, %s50
    %p54 = pneg %p48
    %p55 = scmp.eq.s32.totalorder %s9, 3
    %p56 = por %p54, %p55
    %p57 = scmp.ne.s32.totalorder %s49, %s52
    %p58 = scmp.eq.s32.totalorder %s9, 0
    %p59 = por %p57, %p58
    %p60 = scmp.ne.s32.totalorder %s49, %s52
    %p61 = scmp.eq.s32.totalorder %s14, 3
    %p62 = por %p60, %p61
    %p63 = scmp.ne.s32.totalorder %s52, %s53
    %p64 = scmp.eq.s32.totalorder %s14, 0
    %p65 = por %p63, %p64
    %p66 = scmp.ne.s32.totalorder %s52, %s53
    %p67 = scmp.eq.s32.totalorder %s15, 3
    %p68 = por %p66, %p67
    %p70 = scmp.ne.s32.totalorder %s53, %s69
    %p71 = scmp.eq.s32.totalorder %s15, 0
    %p72 = por %p70, %p71
    %s73 = sadd.s32 %s17, 2
    %s74 = sadd.s32 %s38, 2
    %s75 = ssub.s32 %s16, %s42
    %s76 = ssub.s32 %s19, %s30
    %s77 = sor.u32 %s75, %s76
    %s78 = ssub.s32 %s73, %s74
    %s79 = sor.u32 %s77, %s78
    %p80 = scmp.eq.s32.totalorder %s79, 0
    %s82 = sadd.s32 %s81, 1
    %s83 = scalar_select %p80, %s81, %s82
    %p86 = pneg %p80
    %p87 = scmp.eq.s32.totalorder %s9, 3
    %p88 = por %p86, %p87
    %p89 = scmp.ne.s32.totalorder %s81, %s84
    %p90 = scmp.eq.s32.totalorder %s9, 0
    %p91 = por %p89, %p90
    %p92 = scmp.ne.s32.totalorder %s81, %s84
    %p93 = scmp.eq.s32.totalorder %s14, 3
    %p94 = por %p92, %p93
    %p95 = scmp.ne.s32.totalorder %s84, %s85
    %p96 = scmp.eq.s32.totalorder %s14, 0
    %p97 = por %p95, %p96
    %p98 = scmp.ne.s32.totalorder %s84, %s85
    %p99 = scmp.eq.s32.totalorder %s15, 3
    %p100 = por %p98, %p99
    %p102 = scmp.ne.s32.totalorder %s85, %s101
    %p103 = scmp.eq.s32.totalorder %s15, 0
    %p104 = por %p102, %p103
    %s105 = sadd.s32 %s17, 4
    %s106 = sadd.s32 %s38, 4
    %s107 = ssub.s32 %s16, %s42
    %s108 = ssub.s32 %s19, %s30
    %s109 = sor.u32 %s107, %s108
    %s110 = ssub.s32 %s105, %s106
    %s111 = sor.u32 %s109, %s110
    %p112 = scmp.eq.s32.totalorder %s111, 0
    %s114 = sadd.s32 %s113, 1
    %s115 = scalar_select %p112, %s113, %s114
    %p118 = pneg %p112
    %p119 = scmp.eq.s32.totalorder %s9, 3
    %p120 = por %p118, %p119
    %p121 = scmp.ne.s32.totalorder %s113, %s116
    %p122 = scmp.eq.s32.totalorder %s9, 0
    %p123 = por %p121, %p122
    %p124 = scmp.ne.s32.totalorder %s113, %s116
    %p125 = scmp.eq.s32.totalorder %s14, 3
    %p126 = por %p124, %p125
    %p127 = scmp.ne.s32.totalorder %s116, %s117
    %p128 = scmp.eq.s32.totalorder %s14, 0
    %p129 = por %p127, %p128
    %p130 = scmp.ne.s32.totalorder %s116, %s117
    %p131 = scmp.eq.s32.totalorder %s15, 3
    %p132 = por %p130, %p131
    %p134 = scmp.ne.s32.totalorder %s117, %s133
    %p135 = scmp.eq.s32.totalorder %s15, 0
    %p136 = por %p134, %p135
    %s137 = ssub.s32 %s16, %s42
    %s138 = ssub.s32 %s18, %s34
    %s139 = sor.u32 %s137, %s138
    %s140 = ssub.s32 %s17, %s38
    %s141 = sor.u32 %s139, %s140
    %p142 = scmp.eq.s32.totalorder %s141, 0
    %s144 = sadd.s32 %s143, 1
    %s145 = scalar_select %p142, %s143, %s144
    %p148 = pneg %p142
    %p149 = scmp.eq.s32.totalorder %s9, 3
    %p150 = por %p148, %p149
    %p151 = scmp.ne.s32.totalorder %s143, %s146
    %p152 = scmp.eq.s32.totalorder %s9, 0
    %p153 = por %p151, %p152
    %p154 = scmp.ne.s32.totalorder %s143, %s146
    %p155 = scmp.eq.s32.totalorder %s14, 3
    %p156 = por %p154, %p155
    %p157 = scmp.ne.s32.totalorder %s146, %s147
    %p158 = scmp.eq.s32.totalorder %s14, 0
    %p159 = por %p157, %p158
    %p160 = scmp.ne.s32.totalorder %s146, %s147
    %p161 = scmp.eq.s32.totalorder %s15, 3
    %p162 = por %p160, %p161
    %p164 = scmp.ne.s32.totalorder %s147, %s163
    %p165 = scmp.eq.s32.totalorder %s15, 0
    %p166 = por %p164, %p165
    %p167 = scmp.le.s32.totalorder 1, %s9
    %p168 = scmp.lt.s32.totalorder %s9, 5
    %p169 = pnand %p167, %p168
    %p170 = pneg %p169
    // Predicated region
    $region9: #{block_forward.6} parent=5 // pred_check
      _
    $region10: #{block_forward.6} parent=5 // pred_check_branch
      %172 = sbr.rel (%p169) target = $region12
    $region11: #{block_forward.6} parent=5 // pred_region
      %s173 = ssub.s32 %s9, 1
    $region12: #{block_forward.6} parent=5 // pred_fallthru
      _
    %p174 = scmp.lt.s32.totalorder %s9, 4
    // Predicated region
    $region13: #{block_forward.6} parent=5 // pred_check
      %p175 = pneg %p174
    $region14: #{block_forward.6} parent=5 // pred_check_branch
      %177 = sbr.rel (%p175) target = $region16
    $region15: #{block_forward.6} parent=5 // pred_region
      // Predicated region
      $region17: #{block_forward.6} parent=15 // pred_check
        %p178 = pneg %p59
      $region18: #{block_forward.6} parent=15 // pred_check_branch
        %180 = sbr.rel (%p178) target = $region20
      $region19: #{block_forward.6} parent=15 // pred_region
        %p181 = scmp.lt.s32.totalorder %s16, 1
        %s182 = scalar_select %p181, %s16, 1
        %p183 = scmp.lt.s32.totalorder %s18, 0
        %s184 = scalar_select %p183, %s18, 0
        %p185 = scmp.lt.s32.totalorder %s17, 5
        %s186 = scalar_select %p185, %s17, 5
        %s187 = smul.addr %s184, 6
        %s188 = sadd.s32 %s186, %s187
        %s189 = smul.addr %s182, 6
        %s190 = sadd.s32 %s188, %s189
        %s191 = smul.addr %s190, 4
        %s192 = scalar_lea.vmem %s0, %s191
      $region20: #{block_forward.6} parent=15 // pred_fallthru
        _
      // Predicated region
      $region21: #{block_forward.6} parent=15 // pred_check
        %p193 = pneg %p91
      $region22: #{block_forward.6} parent=15 // pred_check_branch
        %195 = sbr.rel (%p193) target = $region24
      $region23: #{block_forward.6} parent=15 // pred_region
        %s196 = sadd.s32 %s17, 2
        %p197 = scmp.lt.s32.totalorder %s16, 1
        %s198 = scalar_select %p197, %s16, 1
        %p199 = scmp.lt.s32.totalorder %s19, 0
        %s200 = scalar_select %p199, %s19, 0
        %p201 = scmp.lt.s32.totalorder %s196, 5
        %s202 = scalar_select %p201, %s196, 5
        %s203 = smul.addr %s200, 6
        %s204 = sadd.s32 %s202, %s203
        %s205 = smul.addr %s198, 6
        %s206 = sadd.s32 %s204, %s205
        %s207 = smul.addr %s206, 4
        %s208 = scalar_lea.vmem %s1, %s207
        %s209 = sadd.s32 %s17, 2
      $region24: #{block_forward.6} parent=15 // pred_fallthru
        _
      // Predicated region
      $region25: #{block_forward.6} parent=15 // pred_check
        %p210 = pneg %p123
      $region26: #{block_forward.6} parent=15 // pred_check_branch
        %212 = sbr.rel (%p210) target = $region28
      $region27: #{block_forward.6} parent=15 // pred_region
        %s213 = sadd.s32 %s17, 4
        %p214 = scmp.lt.s32.totalorder %s16, 1
        %s215 = scalar_select %p214, %s16, 1
        %p216 = scmp.lt.s32.totalorder %s19, 0
        %s217 = scalar_select %p216, %s19, 0
        %p218 = scmp.lt.s32.totalorder %s213, 5
        %s219 = scalar_select %p218, %s213, 5
        %s220 = smul.addr %s217, 6
        %s221 = sadd.s32 %s219, %s220
        %s222 = smul.addr %s215, 6
        %s223 = sadd.s32 %s221, %s222
        %s224 = smul.addr %s223, 4
        %s225 = scalar_lea.vmem %s2, %s224
        %s226 = sadd.s32 %s17, 4
      $region28: #{block_forward.6} parent=15 // pred_fallthru
        _
    $region16: #{block_forward.6} parent=5 // pred_fallthru
      _
    %p227 = scmp.le.s32.totalorder 1, %s9
    %p228 = scmp.lt.s32.totalorder %s9, 5
    %p229 = pnand %p227, %p228
    %p230 = pneg %p229
    // Predicated region
    $region29: #{block_forward.6} parent=5 // pred_check
      _
    $region30: #{block_forward.6} parent=5 // pred_check_branch
      %232 = sbr.rel (%p229) target = $region32
    $region31: #{block_forward.6} parent=5 // pred_region
      %s233 = ssub.s32 %s9, 1
      %p234 = scmp.lt.s32.totalorder %s20, 1
      %s235 = scalar_select %p234, %s20, 1
      %p236 = scmp.lt.s32.totalorder %s22, 0
      %s237 = scalar_select %p236, %s22, 0
      %p238 = scmp.lt.s32.totalorder %s21, 5
      %s239 = scalar_select %p238, %s21, 5
      %s240 = smul.addr %s237, 6
      %s241 = sadd.s32 %s239, %s240
      %s242 = smul.addr %s235, 6
      %s243 = sadd.s32 %s241, %s242
      %s244 = smul.addr %s243, 4
      %s245 = scalar_lea.vmem %s0, %s244
      %p246 = pneg %p65
      %p247 = pneg %p62
      %s248 = sadd.s32 %s21, 2
      %p249 = scmp.lt.s32.totalorder %s20, 1
      %s250 = scalar_select %p249, %s20, 1
      %p251 = scmp.lt.s32.totalorder %s23, 0
      %s252 = scalar_select %p251, %s23, 0
      %p253 = scmp.lt.s32.totalorder %s248, 5
      %s254 = scalar_select %p253, %s248, 5
      %s255 = smul.addr %s252, 6
      %s256 = sadd.s32 %s254, %s255
      %s257 = smul.addr %s250, 6
      %s258 = sadd.s32 %s256, %s257
      %s259 = smul.addr %s258, 4
      %s260 = scalar_lea.vmem %s1, %s259
      %p261 = pneg %p97
      %p262 = pneg %p94
      %s263 = sadd.s32 %s21, 4
      %p264 = scmp.lt.s32.totalorder %s20, 1
      %s265 = scalar_select %p264, %s20, 1
      %p266 = scmp.lt.s32.totalorder %s23, 0
      %s267 = scalar_select %p266, %s23, 0
      %p268 = scmp.lt.s32.totalorder %s263, 5
      %s269 = scalar_select %p268, %s263, 5
      %s270 = smul.addr %s267, 6
      %s271 = sadd.s32 %s269, %s270
      %s272 = smul.addr %s265, 6
      %s273 = sadd.s32 %s271, %s272
      %s274 = smul.addr %s273, 4
      %s275 = scalar_lea.vmem %s2, %s274
      %p276 = pneg %p129
      %p277 = pneg %p126
      %p278 = pneg %p159
      %p279 = pneg %p156
      %p280 = scmp.lt.s32.totalorder %s20, 1
      %s281 = scalar_select %p280, %s20, 1
      %p282 = scmp.lt.s32.totalorder %s22, 0
      %s283 = scalar_select %p282, %s22, 0
      %p284 = scmp.lt.s32.totalorder %s21, 1
      %s285 = scalar_select %p284, %s21, 1
      %s286 = smul.addr %s283, 2
      %s287 = sadd.s32 %s285, %s286
      %s288 = smul.addr %s281, 2
      %s289 = sadd.s32 %s287, %s288
      %s290 = smul.addr %s289, 4
      %s291 = scalar_lea.vmem %s3, %s290
      %p292 = scmp.lt.s32.totalorder %s20, 1
      %s293 = scalar_select %p292, %s20, 1
      %p294 = scmp.lt.s32.totalorder %s22, 0
      %s295 = scalar_select %p294, %s22, 0
      %p296 = scmp.lt.s32.totalorder %s21, 5
      %s297 = scalar_select %p296, %s21, 5
      %s298 = smul.addr %s295, 6
      %s299 = sadd.s32 %s297, %s298
      %s300 = smul.addr %s293, 6
      %s301 = sadd.s32 %s299, %s300
      %s302 = smul.addr %s301, 4
      %s303 = scalar_lea.vmem %s0, %s302
      %s304 = sadd.s32 %s21, 2
      %p305 = scmp.lt.s32.totalorder %s20, 1
      %s306 = scalar_select %p305, %s20, 1
      %p307 = scmp.lt.s32.totalorder %s23, 0
      %s308 = scalar_select %p307, %s23, 0
      %p309 = scmp.lt.s32.totalorder %s304, 5
      %s310 = scalar_select %p309, %s304, 5
      %s311 = smul.addr %s308, 6
      %s312 = sadd.s32 %s310, %s311
      %s313 = smul.addr %s306, 6
      %s314 = sadd.s32 %s312, %s313
      %s315 = smul.addr %s314, 4
      %s316 = scalar_lea.vmem %s1, %s315
      %s317 = sadd.s32 %s21, 2
      %s318 = sadd.s32 %s21, 4
      %p319 = scmp.lt.s32.totalorder %s20, 1
      %s320 = scalar_select %p319, %s20, 1
      %p321 = scmp.lt.s32.totalorder %s23, 0
      %s322 = scalar_select %p321, %s23, 0
      %p323 = scmp.lt.s32.totalorder %s318, 5
      %s324 = scalar_select %p323, %s318, 5
      %s325 = smul.addr %s322, 6
      %s326 = sadd.s32 %s324, %s325
      %s327 = smul.addr %s320, 6
      %s328 = sadd.s32 %s326, %s327
      %s329 = smul.addr %s328, 4
      %s330 = scalar_lea.vmem %s2, %s329
      %s331 = sadd.s32 %s21, 4
      %p332 = scmp.lt.s32.totalorder %s20, 1
      %s333 = scalar_select %p332, %s20, 1
      %p334 = scmp.lt.s32.totalorder %s22, 0
      %s335 = scalar_select %p334, %s22, 0
      %p336 = scmp.lt.s32.totalorder %s21, 1
      %s337 = scalar_select %p336, %s21, 1
      %s338 = smul.addr %s335, 2
      %s339 = sadd.s32 %s337, %s338
      %s340 = smul.addr %s333, 2
      %s341 = sadd.s32 %s339, %s340
      %s342 = smul.addr %s341, 4
      %s343 = scalar_lea.vmem %s3, %s342
      %p345 = scmp.eq.s32.totalorder %s23, 0
      // Predicated region
      $region33: #{block_forward.6} parent=31 // pred_check
        %p346 = pneg %p345
      $region34: #{block_forward.6} parent=31 // pred_check_branch
        %348 = sbr.rel (%p346) target = $region36
      $region35: #{block_forward.6} parent=31 // pred_region
        %vm349 = vcmask 7168
        %350 = vst.msk [vmem:[#allocation2] sm:$0xff] %vm349, -1e+30
        %351 = vst.msk [vmem:[#allocation3] sm:$0xff] %vm349, 0.0
        %352 = vst [vmem:[#allocation4] sm:$0xff] 0.0
      $region36: #{block_forward.6} parent=31 // pred_fallthru
        _
      %v353 = vld [vmem:[%s303] sm:$0xf]
      %v354 = vld [vmem:[%s316] sm:$0xf]
      %355 = vmatpush.bf16.xpose.msra.mxu0 0
      %356 = vmatpush.bf16.xpose.msra.mxu0 0
      %357 = vmatpush.bf16.xpose.msra.mxu0 0
      %358 = vmatpush.bf16.xpose.msra.mxu0 0
      %359 = vmatpush.bf16.xpose.msra.mxu0 0
      %360 = vmatpush.bf16.xpose.msra.mxu0 0
      %361 = vmatpush.bf16.xpose.msra.mxu0 0
      %362 = vmatpush.bf16.xpose.msra.mxu0 %v354
      %363 = vmatmul.bf16.gmra.mxu0 %v353
      %v364 = vpop.f32.mrf.mxu0
      %v365 = vadd.f32 0.0, %v364
      %v366 = vpop.f32.mrf.mxu0
      %367 = vdwg.mxu0
      %v368 = vmul.f32 %v365, 0.088388346
      %v369 = vld [vmem:[#allocation2] sm:$0xff]
      %vm370 = vcmask 64512
      %v371 = vsel %vm370, %v368, -inf
      %372 = vmax.xlane.f32.xlu0 %v371
      %v373 = vpop.xlane.xlu0 %372
      %v374 = vmax.f32 %v369, %v373
      %v375 = vsub.f32 %v369, %v374
      %v376 = vmul.f32 %v375, 1.442695
      %v377 = vpow.pop %v376
      %379 = vset.pattern.permute.xlu0 0
      %380 = vperm.xlu0 %379, %v374
      %v381 = vpop.permute.xlu0 %380
      %v383 = vsub.f32 %v368, %v381
      %v384 = vmul.f32 %v383, 1.442695
      %v385 = vpow.pop %v384
      %v386 = vld [vmem:[#allocation3] sm:$0xff]
      %v387 = vmul.f32 %v377, %v386
      %v388 = vsel %vm370, %v385, 0.0
      %389 = vadd.xlane.f32.xlu0 %v388
      %v390 = vpop.xlane.xlu0 %389
      %v391 = vadd.f32 %v387, %v390
      %vm392 = vcmask 7168
      %393 = vst.msk [vmem:[#allocation3] sm:$0xff] %vm392, %v391
      %v394 = vld [vmem:[#allocation4] sm:$0xff]
      %396 = vset.pattern.permute.xlu0 0
      %397 = vperm.xlu0 %396, %v377
      %v398 = vpop.permute.xlu0 %397
      %v400 = vmul.f32 %v398, %v394
      %v401 = vpack.c.bf16 %v385, %v385
      %v402 = vld [vmem:[%s330] sm:$0xf]
      %v404 = vsel %vm370, %v401, 0
      %vm406 = vcmask 1043456
      %v408 = vsel %vm406, %v402, 0
      %410 = vmatpush.bf16.msra.mxu0 0
      %411 = vmatpush.bf16.msra.mxu0 0
      %412 = vmatpush.bf16.msra.mxu0 0
      %413 = vmatpush.bf16.msra.mxu0 0
      %414 = vmatpush.bf16.msra.mxu0 0
      %415 = vmatpush.bf16.msra.mxu0 0
      %416 = vmatpush.bf16.msra.mxu0 0
      %417 = vmatpush.bf16.msra.mxu0 %v408
      %418 = vmatmul.bf16.gmra.mxu0 %v404
      %v419 = vpop.f32.mrf.mxu0
      %v420 = vadd.f32 0.0, %v419
      %v421 = vpop.f32.mrf.mxu0
      %422 = vdwg.mxu0
      %v423 = vadd.f32 %v400, %v420
      %424 = vst [vmem:[#allocation4] sm:$0xff] %v423
      %425 = vst.msk [vmem:[#allocation2] sm:$0xff] %vm392, %v374
      // Predicated region
      $region37: #{block_forward.6} parent=31 // pred_check
        %p426 = pneg %p345
      $region38: #{block_forward.6} parent=31 // pred_check_branch
        %428 = sbr.rel (%p426) target = $region40
      $region39: #{block_forward.6} parent=31 // pred_region
        %v429 = vld [vmem:[#allocation4] sm:$0xff]
        %v430 = vld [vmem:[#allocation3] sm:$0xff]
        %v431 = vrcp.pop %v430
        %433 = vset.pattern.permute.xlu0 0
        %434 = vperm.xlu0 %433, %v431
        %v435 = vpop.permute.xlu0 %434
        %v437 = vmul.f32 %v429, %v435
        %v438 = vpack.c.bf16 %v437, %v437
        %439 = vst [vmem:[%s343] sm:$0xf] %v438
      $region40: #{block_forward.6} parent=31 // pred_fallthru
        _
      %p440 = scmp.lt.s32.totalorder %s20, 1
      %s441 = scalar_select %p440, %s20, 1
      %p442 = scmp.lt.s32.totalorder %s22, 0
      %s443 = scalar_select %p442, %s22, 0
      %p444 = scmp.lt.s32.totalorder %s21, 1
      %s445 = scalar_select %p444, %s21, 1
      %s446 = smul.addr %s443, 2
      %s447 = sadd.s32 %s445, %s446
      %s448 = smul.addr %s441, 2
      %s449 = sadd.s32 %s447, %s448
      %s450 = smul.addr %s449, 4
      %s451 = scalar_lea.vmem %s3, %s450
      // Predicated region
      $region41: #{block_forward.6} parent=31 // pred_check
        %p452 = pneg %p156
      $region42: #{block_forward.6} parent=31 // pred_check_branch
        %454 = sbr.rel (%p452) target = $region44
      $region43: #{block_forward.6} parent=31 // pred_region
        _
      $region44: #{block_forward.6} parent=31 // pred_fallthru
        _
    $region32: #{block_forward.6} parent=5 // pred_fallthru
      _
    %p455 = scmp.le.s32.totalorder 2, %s9
    // Predicated region
    $region45: #{block_forward.6} parent=5 // pred_check
      %p456 = pneg %p455
    $region46: #{block_forward.6} parent=5 // pred_check_branch
      %458 = sbr.rel (%p456) target = $region48
    $region47: #{block_forward.6} parent=5 // pred_region
      %s459 = ssub.s32 %s9, 2
      // Predicated region
      $region49: #{block_forward.6} parent=47 // pred_check
        %p460 = pneg %p162
      $region50: #{block_forward.6} parent=47 // pred_check_branch
        %462 = sbr.rel (%p460) target = $region52
      $region51: #{block_forward.6} parent=47 // pred_region
        %p463 = scmp.lt.s32.totalorder %s24, 1
        %s464 = scalar_select %p463, %s24, 1
        %p465 = scmp.lt.s32.totalorder %s26, 0
        %s466 = scalar_select %p465, %s26, 0
        %p467 = scmp.lt.s32.totalorder %s25, 1
        %s468 = scalar_select %p467, %s25, 1
        %s469 = smul.addr %s466, 2
        %s470 = sadd.s32 %s468, %s469
        %s471 = smul.addr %s464, 2
        %s472 = sadd.s32 %s470, %s471
        %s473 = smul.addr %s472, 4
        %s474 = scalar_lea.vmem %s3, %s473
      $region52: #{block_forward.6} parent=47 // pred_fallthru
        _
    $region48: #{block_forward.6} parent=5 // pred_fallthru
      _
  $region6: #{block_forward.6} parent=0 // loop_footer
    %s13 = sadd.s32 1, %s9
  $region7: #{block_forward.6} parent=0 // loop_footer_branch
    %8 = sbr.rel target = $region3
  $region8: #{block_forward.6} parent=0 // loop_exit
    _

// kernel: block_forward.8
$region0: #{block_forward.8}
  #allocation0 [shape = 'u32[]', space=smem, size = 0x4, offset = 0x4, fixed_abs, tag = 'smem constant byte address 0x4 - core index']
  #allocation1 [shape = 'u32[72,128]{1,0:T(1,128)}', space=vmem, size = 0x9000, scoped, tag = 'internal scratch']
  #allocation2 [shape = 'bf16[16,256]{1,0:T(8,128)(2,1)}', space=vmem, size = 0x2000, scoped, tag = 'scratch operand']
  %s0 = inlined_call_operand.vmem [shape: f32[16,256], index: 0, kind: input, shape index: {}]
  %s1 = inlined_call_operand.vmem [shape: f32[1,256], index: 1, kind: input, shape index: {}]
  %s2 = inlined_call_operand.hbm [shape: f32[1,256], index: 2, kind: input, shape index: {}]
  %s3 = inlined_call_operand.hbm [shape: bf16[256,1024], index: 3, kind: input, shape index: {}]
  %s4 = inlined_call_operand.hbm [shape: f32[1,1024], index: 4, kind: input, shape index: {}]
  %s5 = inlined_call_operand.vmem [shape: bf16[16,1024], index: 5, kind: output, shape index: {}]
  %s6 = sld [smem:[#allocation0]]
  $region88: #{block_forward.8} parent=0
    _
  %s8 = ssub.s32 1, %s6
  %s9 = scalar_select 0, %s8, %s6
  $region1: #{block_forward.8} parent=0
    #allocation3 [shape = 'u8[1024]{0}', space=vmem, size = 0x400, scoped, tag = 'input window, operand 2, single buffered']
    #allocation4 [shape = 's32[2]{0}', space=sflag, size = 0x8, scoped, tag = 'scoped memory for block_forward.8']
    #allocation5 [shape = 'u8[524288]{0}', space=vmem, size = 0x80000, scoped, tag = 'input window, operand 3']
    #allocation6 [shape = 's32[2]{0}', space=sflag, size = 0x8, scoped, tag = 'scoped memory for block_forward.8']
    #allocation7 [shape = 'u8[4096]{0}', space=vmem, size = 0x1000, scoped, tag = 'input window, operand 4']
    #allocation8 [shape = 'u8[32768]{0}', space=vmem, size = 0x8000, scoped, tag = 'output window, operand 0']
    %10 = vsyncpa [#allocation4], 0
    %11 = vsyncpa [#allocation6], 0
    %s12 = scalar_lea.sflag [#allocation6], 1
    %13 = vsyncpa %s12, 0
    loop: start=0, step=1, limit=4
    $region2: #{block_forward.8} parent=1 // loop_pre_header
      _
    $region3: #{block_forward.8} parent=1 // loop_header
      %s15 = sphi 0, %s19
      %p16 = scmp.ge.s32.totalorder %s15, 4
      %s22 = sphi 0, %s34
      %s23 = sphi 0, %s30
      %s24 = sphi 0, %s22
      %s25 = sphi 0, %s23
      %s26 = sphi 0, %s24
      %s27 = sphi 0, %s25
      %s37 = sphi 0, %s39
      %s40 = sphi 0, %s37
      %s41 = sphi 0, %s40
      %s57 = sphi 0, %s41
      %s61 = sphi 0, %s61
      %s63 = sphi 0, %s61
      %s64 = sphi 0, %s63
      %s78 = sphi 0, %s64
      %s82 = sphi 0, %s82
      %s84 = sphi 0, %s82
      %s85 = sphi 0, %s84
      %s99 = sphi 0, %s85
      %s105 = sphi 0, %s107
      %s108 = sphi 0, %s105
      %s109 = sphi 0, %s108
      %s125 = sphi 0, %s109
      %s131 = sphi 0, %s133
      %s134 = sphi 0, %s131
      %s135 = sphi 0, %s134
      %s151 = sphi 0, %s135
      %s159 = sphi 0, %s161
      %s162 = sphi 0, %s159
      %s163 = sphi 0, %s162
      %s179 = sphi 0, %s163
    $region4: #{block_forward.8} parent=1 // loop_header_branch
      %18 = sbr.rel (%p16) target = $region8
    $region5: #{block_forward.8} parent=1 // loop_body
      %s20 = ssub.s32 %s15, 1
      %s21 = ssub.s32 %s15, 2
      %s28 = sadd.s32 1, %s23
      %p29 = scmp.ge.s32.totalorder %s28, 2
      %s30 = scalar_select %p29, 0, %s28
      %s31 = sadd.s32 1, %s22
      %s32 = scalar_select %p29, %s31, %s22
      %p33 = scmp.ge.s32.totalorder %s32, 1
      %s34 = scalar_select %p33, 0, %s32
      %s35 = ssub.s32 %s22, %s34
      %p36 = scmp.eq.s32.totalorder %s35, 0
      %s38 = sadd.s32 %s37, 1
      %s39 = scalar_select %p36, %s37, %s38
      %p42 = pneg %p36
      %p43 = scmp.eq.s32.totalorder %s15, 1
      %p44 = por %p42, %p43
      %p45 = scmp.ne.s32.totalorder %s37, %s40
      %p46 = scmp.eq.s32.totalorder %s15, 0
      %p47 = por %p45, %p46
      %p48 = scmp.ne.s32.totalorder %s37, %s40
      %p49 = scmp.eq.s32.totalorder %s20, 1
      %p50 = por %p48, %p49
      %p51 = scmp.ne.s32.totalorder %s40, %s41
      %p52 = scmp.eq.s32.totalorder %s20, 0
      %p53 = por %p51, %p52
      %p54 = scmp.ne.s32.totalorder %s40, %s41
      %p55 = scmp.eq.s32.totalorder %s21, 1
      %p56 = por %p54, %p55
      %p58 = scmp.ne.s32.totalorder %s41, %s57
      %p59 = scmp.eq.s32.totalorder %s21, 0
      %p60 = por %p58, %p59
      %s62 = sadd.s32 %s61, 1
      %p65 = scmp.eq.s32.totalorder %s15, 1
      %p66 = scmp.ne.s32.totalorder %s61, %s63
      %p67 = scmp.eq.s32.totalorder %s15, 0
      %p68 = por %p66, %p67
      %p69 = scmp.ne.s32.totalorder %s61, %s63
      %p70 = scmp.eq.s32.totalorder %s20, 1
      %p71 = por %p69, %p70
      %p72 = scmp.ne.s32.totalorder %s63, %s64
      %p73 = scmp.eq.s32.totalorder %s20, 0
      %p74 = por %p72, %p73
      %p75 = scmp.ne.s32.totalorder %s63, %s64
      %p76 = scmp.eq.s32.totalorder %s21, 1
      %p77 = por %p75, %p76
      %p79 = scmp.ne.s32.totalorder %s64, %s78
      %p80 = scmp.eq.s32.totalorder %s21, 0
      %p81 = por %p79, %p80
      %s83 = sadd.s32 %s82, 1
      %p86 = scmp.eq.s32.totalorder %s15, 1
      %p87 = scmp.ne.s32.totalorder %s82, %s84
      %p88 = scmp.eq.s32.totalorder %s15, 0
      %p89 = por %p87, %p88
      %p90 = scmp.ne.s32.totalorder %s82, %s84
      %p91 = scmp.eq.s32.totalorder %s20, 1
      %p92 = por %p90, %p91
      %p93 = scmp.ne.s32.totalorder %s84, %s85
      %p94 = scmp.eq.s32.totalorder %s20, 0
      %p95 = por %p93, %p94
      %p96 = scmp.ne.s32.totalorder %s84, %s85
      %p97 = scmp.eq.s32.totalorder %s21, 1
      %p98 = por %p96, %p97
      %p100 = scmp.ne.s32.totalorder %s85, %s99
      %p101 = scmp.eq.s32.totalorder %s21, 0
      %p102 = por %p100, %p101
      %s103 = ssub.s32 %s23, %s30
      %p104 = scmp.eq.s32.totalorder %s103, 0
      %s106 = sadd.s32 %s105, 1
      %s107 = scalar_select %p104, %s105, %s106
      %p110 = pneg %p104
      %p111 = scmp.eq.s32.totalorder %s15, 1
      %p112 = por %p110, %p111
      %p113 = scmp.ne.s32.totalorder %s105, %s108
      %p114 = scmp.eq.s32.totalorder %s15, 0
      %p115 = por %p113, %p114
      %p116 = scmp.ne.s32.totalorder %s105, %s108
      %p117 = scmp.eq.s32.totalorder %s20, 1
      %p118 = por %p116, %p117
      %p119 = scmp.ne.s32.totalorder %s108, %s109
      %p120 = scmp.eq.s32.totalorder %s20, 0
      %p121 = por %p119, %p120
      %p122 = scmp.ne.s32.totalorder %s108, %s109
      %p123 = scmp.eq.s32.totalorder %s21, 1
      %p124 = por %p122, %p123
      %p126 = scmp.ne.s32.totalorder %s109, %s125
      %p127 = scmp.eq.s32.totalorder %s21, 0
      %p128 = por %p126, %p127
      %s129 = ssub.s32 %s23, %s30
      %p130 = scmp.eq.s32.totalorder %s129, 0
      %s132 = sadd.s32 %s131, 1
      %s133 = scalar_select %p130, %s131, %s132
      %p136 = pneg %p130
      %p137 = scmp.eq.s32.totalorder %s15, 1
      %p138 = por %p136, %p137
      %p139 = scmp.ne.s32.totalorder %s131, %s134
      %p140 = scmp.eq.s32.totalorder %s15, 0
      %p141 = por %p139, %p140
      %p142 = scmp.ne.s32.totalorder %s131, %s134
      %p143 = scmp.eq.s32.totalorder %s20, 1
      %p144 = por %p142, %p143
      %p145 = scmp.ne.s32.totalorder %s134, %s135
      %p146 = scmp.eq.s32.totalorder %s20, 0
      %p147 = por %p145, %p146
      %p148 = scmp.ne.s32.totalorder %s134, %s135
      %p149 = scmp.eq.s32.totalorder %s21, 1
      %p150 = por %p148, %p149
      %p152 = scmp.ne.s32.totalorder %s135, %s151
      %p153 = scmp.eq.s32.totalorder %s21, 0
      %p154 = por %p152, %p153
      %s155 = ssub.s32 %s22, %s34
      %s156 = ssub.s32 %s23, %s30
      %s157 = sor.u32 %s155, %s156
      %p158 = scmp.eq.s32.totalorder %s157, 0
      %s160 = sadd.s32 %s159, 1
      %s161 = scalar_select %p158, %s159, %s160
      %p164 = pneg %p158
      %p165 = scmp.eq.s32.totalorder %s15, 1
      %p166 = por %p164, %p165
      %p167 = scmp.ne.s32.totalorder %s159, %s162
      %p168 = scmp.eq.s32.totalorder %s15, 0
      %p169 = por %p167, %p168
      %p170 = scmp.ne.s32.totalorder %s159, %s162
      %p171 = scmp.eq.s32.totalorder %s20, 1
      %p172 = por %p170, %p171
      %p173 = scmp.ne.s32.totalorder %s162, %s163
      %p174 = scmp.eq.s32.totalorder %s20, 0
      %p175 = por %p173, %p174
      %p176 = scmp.ne.s32.totalorder %s162, %s163
      %p177 = scmp.eq.s32.totalorder %s21, 1
      %p178 = por %p176, %p177
      %p180 = scmp.ne.s32.totalorder %s163, %s179
      %p181 = scmp.eq.s32.totalorder %s21, 0
      %p182 = por %p180, %p181
      %p183 = scmp.le.s32.totalorder 1, %s15
      %p184 = scmp.lt.s32.totalorder %s15, 3
      %p185 = pnand %p183, %p184
      %p186 = pneg %p185
      // Predicated region
      $region9: #{block_forward.8} parent=5 // pred_check
        _
      $region10: #{block_forward.8} parent=5 // pred_check_branch
        %188 = sbr.rel (%p185) target = $region12
      $region11: #{block_forward.8} parent=5 // pred_region
        %s189 = ssub.s32 %s15, 1
        // Predicated region
        $region13: #{block_forward.8} parent=11 // pred_check
          %p190 = pneg %p53
        $region14: #{block_forward.8} parent=11 // pred_check_branch
          %192 = sbr.rel (%p190) target = $region16
        $region15: #{block_forward.8} parent=11 // pred_region
          %s193 = smul.u32 2, %s24
          %p194 = scmp.lt.s32.totalorder %s193, 1
          %s195 = scalar_select %p194, %s193, 1
          %s196 = smul.addr %s195, 2
          %s197 = smul.addr %s196, 8
          %s198 = scalar_lea.vmem %s0, %s197
          %s199 = smul.u32 2, %s24
        $region16: #{block_forward.8} parent=11 // pred_fallthru
          _
        // Predicated region
        $region17: #{block_forward.8} parent=11 // pred_check
          %p200 = pneg %p74
        $region18: #{block_forward.8} parent=11 // pred_check_branch
          %202 = sbr.rel (%p200) target = $region20
        $region19: #{block_forward.8} parent=11 // pred_region
          _
        $region20: #{block_forward.8} parent=11 // pred_fallthru
          _
        // Predicated region
        $region21: #{block_forward.8} parent=11 // pred_check
          %p203 = pneg %p95
        $region22: #{block_forward.8} parent=11 // pred_check_branch
          %205 = sbr.rel (%p203) target = $region24
        $region23: #{block_forward.8} parent=11 // pred_region
          %207 = vsyncadd [#allocation4], 0
          %s209 = sshll.u32 %s2, 4
          %s210 = int_to_ptr.hbm [resolvable:$true] %s209
          %s211 = sshll.u32 [#allocation3], 4
          %s212 = int_to_ptr.vmem [resolvable:$true] %s211
          %214 = dma.hbm_to_vmem [thread:$0]  %s210, 32, %s212, [#allocation4]
        $region24: #{block_forward.8} parent=11 // pred_fallthru
          _
      $region12: #{block_forward.8} parent=5 // pred_fallthru
        _
      %p215 = scmp.lt.s32.totalorder %s15, 2
      // Predicated region
      $region25: #{block_forward.8} parent=5 // pred_check
        %p216 = pneg %p215
      $region26: #{block_forward.8} parent=5 // pred_check_branch
        %218 = sbr.rel (%p216) target = $region28
      $region27: #{block_forward.8} parent=5 // pred_region
        // Predicated region
        $region29: #{block_forward.8} parent=27 // pred_check
          %p219 = pneg %p115
        $region30: #{block_forward.8} parent=27 // pred_check_branch
          %221 = sbr.rel (%p219) target = $region32
        $region31: #{block_forward.8} parent=27 // pred_region
          %s222 = sand.u32 %s15, 1
          %s223 = scalar_lea.sflag [#allocation6], %s222
          %s224 = sand.u32 %s105, 1
          %s225 = smul.addr %s224, 512
          %s226 = scalar_lea.vmem [#allocation5], %s225
          %s227 = smul.u32 4, %s23
          %229 = vsyncadd %s223, 0
          %s230 = smul.addr %s227, 4
          %s231 = scalar_lea.hbm %s3, %s230
          %s232 = sshll.u32 %s231, 4
          %s233 = int_to_ptr.hbm [resolvable:$true] %s232
          %s234 = sshll.u32 %s226, 4
          %s235 = int_to_ptr.vmem [resolvable:$true] %s234
          %240 = dma.hbm_to_vmem [thread:$0]  %s233, 8192, %s235, %s223, 512, 256, 16
        $region32: #{block_forward.8} parent=27 // pred_fallthru
          _
        // Predicated region
        $region33: #{block_forward.8} parent=27 // pred_check
          %p241 = pneg %p141
        $region34: #{block_forward.8} parent=27 // pred_check_branch
          %243 = sbr.rel (%p241) target = $region36
        $region35: #{block_forward.8} parent=27 // pred_region
          %s244 = sand.u32 %s15, 1
          %s245 = scalar_lea.sflag [#allocation6], %s244
          %s246 = sand.u32 %s131, 1
          %s247 = smul.addr %s246, 4
          %s248 = scalar_lea.vmem [#allocation7], %s247
          %s249 = smul.u32 4, %s23
          %251 = vsyncadd %s245, 0
          %s252 = scalar_lea.hbm %s4, %s249
          %s254 = sshll.u32 %s252, 4
          %s255 = int_to_ptr.hbm [resolvable:$true] %s254
          %s256 = sshll.u32 %s248, 4
          %s257 = int_to_ptr.vmem [resolvable:$true] %s256
          %259 = dma.hbm_to_vmem [thread:$0]  %s255, 64, %s257, %s245
        $region36: #{block_forward.8} parent=27 // pred_fallthru
          _
      $region28: #{block_forward.8} parent=5 // pred_fallthru
        _
      %p260 = scmp.le.s32.totalorder 1, %s15
      %p261 = scmp.lt.s32.totalorder %s15, 3
      %p262 = pnand %p260, %p261
      %p263 = pneg %p262
      // Predicated region
      $region37: #{block_forward.8} parent=5 // pred_check
        _
      $region38: #{block_forward.8} parent=5 // pred_check_branch
        %265 = sbr.rel (%p262) target = $region40
      $region39: #{block_forward.8} parent=5 // pred_region
        %s266 = ssub.s32 %s15, 1
        // Predicated region
        $region41: #{block_forward.8} parent=39 // pred_check
          %p267 = pneg %p95
        $region42: #{block_forward.8} parent=39 // pred_check_branch
          %269 = sbr.rel (%p267) target = $region44
        $region43: #{block_forward.8} parent=39 // pred_region
          %271 = dma.done [#allocation4], 32
        $region44: #{block_forward.8} parent=39 // pred_fallthru
          _
        %s272 = sand.u32 %s20, 1
        %s273 = scalar_lea.sflag [#allocation6], %s272
        %s274 = sand.u32 %s108, 1
        %s275 = smul.addr %s274, 512
        %s276 = scalar_lea.vmem [#allocation5], %s275
        // Predicated region
        $region45: #{block_forward.8} parent=39 // pred_check
          %p277 = pneg %p121
        $region46: #{block_forward.8} parent=39 // pred_check_branch
          %279 = sbr.rel (%p277) target = $region48
        $region47: #{block_forward.8} parent=39 // pred_region
          %281 = dma.done %s273, 8192
        $region48: #{block_forward.8} parent=39 // pred_fallthru
          _
        %s282 = sand.u32 %s20, 1
        %s283 = scalar_lea.sflag [#allocation6], %s282
        %s284 = sand.u32 %s134, 1
        %s285 = smul.addr %s284, 4
        %s286 = scalar_lea.vmem [#allocation7], %s285
        // Predicated region
        $region49: #{block_forward.8} parent=39 // pred_check
          %p287 = pneg %p147
        $region50: #{block_forward.8} parent=39 // pred_check_branch
          %289 = sbr.rel (%p287) target = $region52
        $region51: #{block_forward.8} parent=39 // pred_region
          %291 = dma.done %s283, 64
        $region52: #{block_forward.8} parent=39 // pred_fallthru
          _
        %s292 = smul.u32 2, %s24
        %p293 = scmp.lt.s32.totalorder %s292, 1
        %s294 = scalar_select %p293, %s292, 1
        %s295 = smul.addr %s294, 2
        %s296 = smul.addr %s295, 8
        %s297 = scalar_lea.vmem %s0, %s296
        %p298 = pneg %p53
        %p299 = pneg %p50
        %p300 = pneg %p74
        %p301 = pneg %p71
        %p302 = pneg %p95
        %p303 = pneg %p92
        %s304 = sand.u32 %s20, 1
        %s305 = scalar_lea.sflag [#allocation6], %s304
        %s306 = sand.u32 %s108, 1
        %s307 = smul.addr %s306, 512
        %s308 = scalar_lea.vmem [#allocation5], %s307
        %p309 = pneg %p121
        %p310 = pneg %p118
        %s311 = sand.u32 %s20, 1
        %s312 = scalar_lea.sflag [#allocation6], %s311
        %s313 = sand.u32 %s134, 1
        %s314 = smul.addr %s313, 4
        %s315 = scalar_lea.vmem [#allocation7], %s314
        %p316 = pneg %p147
        %p317 = pneg %p144
        %p318 = pneg %p175
        %p319 = pneg %p172
        %s320 = sand.u32 %s162, 1
        %s321 = sand.u32 %s162, 1
        %s322 = smul.addr %s321, 32
        %s323 = scalar_lea.vmem [#allocation8], %s322
        %s324 = smul.u32 2, %s24
        %p325 = scmp.lt.s32.totalorder %s324, 1
        %s326 = scalar_select %p325, %s324, 1
        %s327 = smul.addr %s326, 2
        %s328 = smul.addr %s327, 8
        %s329 = scalar_lea.vmem %s0, %s328
        %s330 = smul.u32 2, %s24
        %s331 = smul.u32 4, %s25
        %s332 = smul.u32 4, %s25
        %s333 = smul.u32 2, %s24
        %s334 = smul.u32 4, %s25
        %p335 = scmp.eq.s32.totalorder %s25, 0
        // Predicated region
        $region53: #{block_forward.8} parent=39 // pred_check
          %p336 = pneg %p335
        $region54: #{block_forward.8} parent=39 // pred_check_branch
          %338 = sbr.rel (%p336) target = $region56
        $region55: #{block_forward.8} parent=39 // pred_region
          %v339 = vld [vmem:[%s329] sm:$0xff]
          %v340 = vld [vmem:[%s329 + $0x8] sm:$0xff]
          %v341 = vld [vmem:[%s329 + $0x10] sm:$0xff]
          %v342 = vld [vmem:[%s329 + $0x18] sm:$0xff]
          %v343 = vadd.f32 %v339, %v340
          %344 = vadd.xlane.f32.xlu0 %v343
          %v345 = vpop.xlane.xlu0 %344
          %v346 = vadd.f32 %v341, %v342
          %347 = vadd.xlane.f32.xlu0 %v346
          %v348 = vpop.xlane.xlu0 %347
          %v349 = vrcp.pop 256.0
          %v350 = vmul.f32 256.0, %v349
          %v351 = vsub.f32 1.0, %v350
          %v352 = vmul.f32 %v349, %v351
          %v353 = vadd.f32 %v349, %v352
          %vm354 = vweird.f32 %v349
          %v355 = vsel %vm354, %v349, %v353
          %v356 = vmul.f32 %v345, %v355
          %v357 = vmul.f32 %v348, %v355
          %v358 = vsub.f32 %v339, %v356
          %v359 = vsub.f32 %v340, %v356
          %v360 = vsub.f32 %v341, %v357
          %v361 = vsub.f32 %v342, %v357
          %v362 = vmul.f32 %v358, %v358
          %v363 = vmul.f32 %v359, %v359
          %v364 = vmul.f32 %v360, %v360
          %v365 = vmul.f32 %v361, %v361
          %v366 = vadd.f32 %v362, %v363
          %367 = vadd.xlane.f32.xlu0 %v366
          %v368 = vpop.xlane.xlu0 %367
          %v369 = vadd.f32 %v364, %v365
          %370 = vadd.xlane.f32.xlu0 %v369
          %v371 = vpop.xlane.xlu0 %370
          %v372 = vmul.f32 %v368, %v355
          %v373 = vmul.f32 %v371, %v355
          %v374 = vadd.f32 %v372, 1e-05
          %v375 = vadd.f32 %v373, 1e-05
          %v376 = vrsqrt.pop %v374
          %v377 = vmul.f32 %v376, %v374
          %v378 = vmul.f32 %v377, %v376
          %v379 = vmul.f32 0.5, %v378
          %v380 = vsub.f32 1.5, %v379
          %v381 = vmul.f32 %v376, %v380
          %vm382 = vweird.f32 %v374
          %vm383 = vweird.f32 %v376
          %vm384 = vmor %vm382, %vm383
          %v385 = vsel %vm384, %v376, %v381
          %v386 = vrsqrt.pop %v375
          %v387 = vmul.f32 %v386, %v375
          %v388 = vmul.f32 %v387, %v386
          %v389 = vmul.f32 0.5, %v388
          %v390 = vsub.f32 1.5, %v389
          %v391 = vmul.f32 %v386, %v390
          %vm392 = vweird.f32 %v375
          %vm393 = vweird.f32 %v386
          %vm394 = vmor %vm392, %vm393
          %v395 = vsel %vm394, %v386, %v391
          %v396 = vmul.f32 %v358, %v385
          %v397 = vmul.f32 %v359, %v385
          %v398 = vmul.f32 %v360, %v395
          %v399 = vmul.f32 %v361, %v395
          %v400 = vld [vmem:[%s1] sm:$0x3]
          %v402 = vperm.slane %v400, 0
          %v403 = vperm.slane %v400, 1
          %v406 = vmul.f32 %v396, %v402
          %v407 = vmul.f32 %v397, %v403
          %v408 = vmul.f32 %v398, %v402
          %v409 = vmul.f32 %v399, %v403
          %v410 = vld [vmem:[#allocation3] sm:$0x3]
          %v412 = vperm.slane %v410, 0
          %v413 = vperm.slane %v410, 1
          %v416 = vadd.f32 %v406, %v412
          %v417 = vadd.f32 %v407, %v413
          %v418 = vadd.f32 %v408, %v412
          %v419 = vadd.f32 %v409, %v413
          %v420 = vpack.c.bf16 %v417, %v416
          %v421 = vpack.c.bf16 %v419, %v418
          %422 = vst [vmem:[#allocation2] sm:$0xff] %v420
          %423 = vst [vmem:[#allocation2 + $0x8] sm:$0xff] %v421
        $region56: #{block_forward.8} parent=39 // pred_fallthru
          _
        %v424 = vld [vmem:[#allocation2] sm:$0xff]
        %v425 = vld [vmem:[#allocation2 + $0x8] sm:$0xff]
        %v426 = vld [vmem:[%s276] sm:$0xff]
        %v427 = vld [vmem:[%s276 + $0x8] sm:$0xff]
        %v428 = vld [vmem:[%s276 + $0x10] sm:$0xff]
        %v429 = vld [vmem:[%s276 + $0x18] sm:$0xff]
        %v430 = vld [vmem:[%s276 + $0x20] sm:$0xff]
        %v431 = vld [vmem:[%s276 + $0x28] sm:$0xff]
        %v432 = vld [vmem:[%s276 + $0x30] sm:$0xff]
        %v433 = vld [vmem:[%s276 + $0x38] sm:$0xff]
        %v434 = vld [vmem:[%s276 + $0x40] sm:$0xff]
        %v435 = vld [vmem:[%s276 + $0x48] sm:$0xff]
        %v436 = vld [vmem:[%s276 + $0x50] sm:$0xff]
        %v437 = vld [vmem:[%s276 + $0x58] sm:$0xff]
        %v438 = vld [vmem:[%s276 + $0x60] sm:$0xff]
        %v439 = vld [vmem:[%s276 + $0x68] sm:$0xff]
        %v440 = vld [vmem:[%s276 + $0x70] sm:$0xff]
        %v441 = vld [vmem:[%s276 + $0x78] sm:$0xff]
        %v442 = vld [vmem:[%s276 + $0x80] sm:$0xff]
        %v443 = vld [vmem:[%s276 + $0x88] sm:$0xff]
        %v444 = vld [vmem:[%s276 + $0x90] sm:$0xff]
        %v445 = vld [vmem:[%s276 + $0x98] sm:$0xff]
        %v446 = vld [vmem:[%s276 + $0xa0] sm:$0xff]
        %v447 = vld [vmem:[%s276 + $0xa8] sm:$0xff]
        %v448 = vld [vmem:[%s276 + $0xb0] sm:$0xff]
        %v449 = vld [vmem:[%s276 + $0xb8] sm:$0xff]
        %v450 = vld [vmem:[%s276 + $0xc0] sm:$0xff]
        %v451 = vld [vmem:[%s276 + $0xc8] sm:$0xff]
        %v452 = vld [vmem:[%s276 + $0xd0] sm:$0xff]
        %v453 = vld [vmem:[%s276 + $0xd8] sm:$0xff]
        %v454 = vld [vmem:[%s276 + $0xe0] sm:$0xff]
        %v455 = vld [vmem:[%s276 + $0xe8] sm:$0xff]
        %v456 = vld [vmem:[%s276 + $0xf0] sm:$0xff]
        %v457 = vld [vmem:[%s276 + $0xf8] sm:$0xff]
        %v458 = vld [vmem:[%s276 + $0x100] sm:$0xff]
        %v459 = vld [vmem:[%s276 + $0x108] sm:$0xff]
        %v460 = vld [vmem:[%s276 + $0x110] sm:$0xff]
        %v461 = vld [vmem:[%s276 + $0x118] sm:$0xff]
        %v462 = vld [vmem:[%s276 + $0x120] sm:$0xff]
        %v463 = vld [vmem:[%s276 + $0x128] sm:$0xff]
        %v464 = vld [vmem:[%s276 + $0x130] sm:$0xff]
        %v465 = vld [vmem:[%s276 + $0x138] sm:$0xff]
        %v466 = vld [vmem:[%s276 + $0x140] sm:$0xff]
        %v467 = vld [vmem:[%s276 + $0x148] sm:$0xff]
        %v468 = vld [vmem:[%s276 + $0x150] sm:$0xff]
        %v469 = vld [vmem:[%s276 + $0x158] sm:$0xff]
        %v470 = vld [vmem:[%s276 + $0x160] sm:$0xff]
        %v471 = vld [vmem:[%s276 + $0x168] sm:$0xff]
        %v472 = vld [vmem:[%s276 + $0x170] sm:$0xff]
        %v473 = vld [vmem:[%s276 + $0x178] sm:$0xff]
        %v474 = vld [vmem:[%s276 + $0x180] sm:$0xff]
        %v475 = vld [vmem:[%s276 + $0x188] sm:$0xff]
        %v476 = vld [vmem:[%s276 + $0x190] sm:$0xff]
        %v477 = vld [vmem:[%s276 + $0x198] sm:$0xff]
        %v478 = vld [vmem:[%s276 + $0x1a0] sm:$0xff]
        %v479 = vld [vmem:[%s276 + $0x1a8] sm:$0xff]
        %v480 = vld [vmem:[%s276 + $0x1b0] sm:$0xff]
        %v481 = vld [vmem:[%s276 + $0x1b8] sm:$0xff]
        %v482 = vld [vmem:[%s276 + $0x1c0] sm:$0xff]
        %v483 = vld [vmem:[%s276 + $0x1c8] sm:$0xff]
        %v484 = vld [vmem:[%s276 + $0x1d0] sm:$0xff]
        %v485 = vld [vmem:[%s276 + $0x1d8] sm:$0xff]
        %v486 = vld [vmem:[%s276 + $0x1e0] sm:$0xff]
        %v487 = vld [vmem:[%s276 + $0x1e8] sm:$0xff]
        %v488 = vld [vmem:[%s276 + $0x1f0] sm:$0xff]
        %v489 = vld [vmem:[%s276 + $0x1f8] sm:$0xff]
        %v490 = vld [vmem:[%s286] sm:$0xf]
        %v492 = vperm.slane %v490, 0
        %v493 = vperm.slane %v490, 1
        %v494 = vperm.slane %v490, 2
        %v495 = vperm.slane %v490, 3
        %v502 = vunpack.c.l.b16 %v424
        %v503 = vunpack.c.h.b16 %v424
        %v504 = vunpack.c.l.b16 %v425
        %v505 = vunpack.c.h.b16 %v425
        %v506 = vpack.c.b16 %v504, %v502
        %v507 = vpack.c.b16 %v505, %v503
        %v574 = vunpack.c.l.b16 %v426
        %v575 = vunpack.c.h.b16 %v426
        %v576 = vunpack.c.l.b16 %v427
        %v577 = vunpack.c.h.b16 %v427
        %v578 = vunpack.c.l.b16 %v428
        %v579 = vunpack.c.h.b16 %v428
        %v580 = vunpack.c.l.b16 %v429
        %v581 = vunpack.c.h.b16 %v429
        %v582 = vunpack.c.l.b16 %v430
        %v583 = vunpack.c.h.b16 %v430
        %v584 = vunpack.c.l.b16 %v431
        %v585 = vunpack.c.h.b16 %v431
        %v586 = vunpack.c.l.b16 %v432
        %v587 = vunpack.c.h.b16 %v432
        %v588 = vunpack.c.l.b16 %v433
        %v589 = vunpack.c.h.b16 %v433
        %v590 = vunpack.c.l.b16 %v434
        %v591 = vunpack.c.h.b16 %v434
        %v592 = vunpack.c.l.b16 %v435
        %v593 = vunpack.c.h.b16 %v435
        %v594 = vunpack.c.l.b16 %v436
        %v595 = vunpack.c.h.b16 %v436
        %v596 = vunpack.c.l.b16 %v437
        %v597 = vunpack.c.h.b16 %v437
        %v598 = vunpack.c.l.b16 %v438
        %v599 = vunpack.c.h.b16 %v438
        %v600 = vunpack.c.l.b16 %v439
        %v601 = vunpack.c.h.b16 %v439
        %v602 = vunpack.c.l.b16 %v440
        %v603 = vunpack.c.h.b16 %v440
        %v604 = vunpack.c.l.b16 %v441
        %v605 = vunpack.c.h.b16 %v441
        %v606 = vunpack.c.l.b16 %v442
        %v607 = vunpack.c.h.b16 %v442
        %v608 = vunpack.c.l.b16 %v443
        %v609 = vunpack.c.h.b16 %v443
        %v610 = vunpack.c.l.b16 %v444
        %v611 = vunpack.c.h.b16 %v444
        %v612 = vunpack.c.l.b16 %v445
        %v613 = vunpack.c.h.b16 %v445
        %v614 = vunpack.c.l.b16 %v446
        %v615 = vunpack.c.h.b16 %v446
        %v616 = vunpack.c.l.b16 %v447
        %v617 = vunpack.c.h.b16 %v447
        %v618 = vunpack.c.l.b16 %v448
        %v619 = vunpack.c.h.b16 %v448
        %v620 = vunpack.c.l.b16 %v449
        %v621 = vunpack.c.h.b16 %v449
        %v622 = vunpack.c.l.b16 %v450
        %v623 = vunpack.c.h.b16 %v450
        %v624 = vunpack.c.l.b16 %v451
        %v625 = vunpack.c.h.b16 %v451
        %v626 = vunpack.c.l.b16 %v452
        %v627 = vunpack.c.h.b16 %v452
        %v628 = vunpack.c.l.b16 %v453
        %v629 = vunpack.c.h.b16 %v453
        %v630 = vunpack.c.l.b16 %v454
        %v631 = vunpack.c.h.b16 %v454
        %v632 = vunpack.c.l.b16 %v455
        %v633 = vunpack.c.h.b16 %v455
        %v634 = vunpack.c.l.b16 %v456
        %v635 = vunpack.c.h.b16 %v456
        %v636 = vunpack.c.l.b16 %v457
        %v637 = vunpack.c.h.b16 %v457
        %v638 = vunpack.c.l.b16 %v458
        %v639 = vunpack.c.h.b16 %v458
        %v640 = vunpack.c.l.b16 %v459
        %v641 = vunpack.c.h.b16 %v459
        %v642 = vunpack.c.l.b16 %v460
        %v643 = vunpack.c.h.b16 %v460
        %v644 = vunpack.c.l.b16 %v461
        %v645 = vunpack.c.h.b16 %v461
        %v646 = vunpack.c.l.b16 %v462
        %v647 = vunpack.c.h.b16 %v462
        %v648 = vunpack.c.l.b16 %v463
        %v649 = vunpack.c.h.b16 %v463
        %v650 = vunpack.c.l.b16 %v464
        %v651 = vunpack.c.h.b16 %v464
        %v652 = vunpack.c.l.b16 %v465
        %v653 = vunpack.c.h.b16 %v465
        %v654 = vunpack.c.l.b16 %v466
        %v655 = vunpack.c.h.b16 %v466
        %v656 = vunpack.c.l.b16 %v467
        %v657 = vunpack.c.h.b16 %v467
        %v658 = vunpack.c.l.b16 %v468
        %v659 = vunpack.c.h.b16 %v468
        %v660 = vunpack.c.l.b16 %v469
        %v661 = vunpack.c.h.b16 %v469
        %v662 = vunpack.c.l.b16 %v470
        %v663 = vunpack.c.h.b16 %v470
        %v664 = vunpack.c.l.b16 %v471
        %v665 = vunpack.c.h.b16 %v471
        %v666 = vunpack.c.l.b16 %v472
        %v667 = vunpack.c.h.b16 %v472
        %v668 = vunpack.c.l.b16 %v473
        %v669 = vunpack.c.h.b16 %v473
        %v670 = vunpack.c.l.b16 %v474
        %v671 = vunpack.c.h.b16 %v474
        %v672 = vunpack.c.l.b16 %v475
        %v673 = vunpack.c.h.b16 %v475
        %v674 = vunpack.c.l.b16 %v476
        %v675 = vunpack.c.h.b16 %v476
        %v676 = vunpack.c.l.b16 %v477
        %v677 = vunpack.c.h.b16 %v477
        %v678 = vunpack.c.l.b16 %v478
        %v679 = vunpack.c.h.b16 %v478
        %v680 = vunpack.c.l.b16 %v479
        %v681 = vunpack.c.h.b16 %v479
        %v682 = vunpack.c.l.b16 %v480
        %v683 = vunpack.c.h.b16 %v480
        %v684 = vunpack.c.l.b16 %v481
        %v685 = vunpack.c.h.b16 %v481
        %v686 = vunpack.c.l.b16 %v482
        %v687 = vunpack.c.h.b16 %v482
        %v688 = vunpack.c.l.b16 %v483
        %v689 = vunpack.c.h.b16 %v483
        %v690 = vunpack.c.l.b16 %v484
        %v691 = vunpack.c.h.b16 %v484
        %v692 = vunpack.c.l.b16 %v485
        %v693 = vunpack.c.h.b16 %v485
        %v694 = vunpack.c.l.b16 %v486
        %v695 = vunpack.c.h.b16 %v486
        %v696 = vunpack.c.l.b16 %v487
        %v697 = vunpack.c.h.b16 %v487
        %v698 = vunpack.c.l.b16 %v488
        %v699 = vunpack.c.h.b16 %v488
        %v700 = vunpack.c.l.b16 %v489
        %v701 = vunpack.c.h.b16 %v489
        %v702 = vpack.c.b16 %v578, %v574
        %v703 = vpack.c.b16 %v579, %v575
        %v704 = vpack.c.b16 %v580, %v576
        %v705 = vpack.c.b16 %v581, %v577
        %v706 = vpack.c.b16 %v586, %v582
        %v707 = vpack.c.b16 %v587, %v583
        %v708 = vpack.c.b16 %v588, %v584
        %v709 = vpack.c.b16 %v589, %v585
        %v710 = vpack.c.b16 %v594, %v590
        %v711 = vpack.c.b16 %v595, %v591
        %v712 = vpack.c.b16 %v596, %v592
        %v713 = vpack.c.b16 %v597, %v593
        %v714 = vpack.c.b16 %v602, %v598
        %v715 = vpack.c.b16 %v603, %v599
        %v716 = vpack.c.b16 %v604, %v600
        %v717 = vpack.c.b16 %v605, %v601
        %v718 = vpack.c.b16 %v610, %v606
        %v719 = vpack.c.b16 %v611, %v607
        %v720 = vpack.c.b16 %v612, %v608
        %v721 = vpack.c.b16 %v613, %v609
        %v722 = vpack.c.b16 %v618, %v614
        %v723 = vpack.c.b16 %v619, %v615
        %v724 = vpack.c.b16 %v620, %v616
        %v725 = vpack.c.b16 %v621, %v617
        %v726 = vpack.c.b16 %v626, %v622
        %v727 = vpack.c.b16 %v627, %v623
        %v728 = vpack.c.b16 %v628, %v624
        %v729 = vpack.c.b16 %v629, %v625
        %v730 = vpack.c.b16 %v634, %v630
        %v731 = vpack.c.b16 %v635, %v631
        %v732 = vpack.c.b16 %v636, %v632
        %v733 = vpack.c.b16 %v637, %v633
        %v734 = vpack.c.b16 %v642, %v638
        %v735 = vpack.c.b16 %v643, %v639
        %v736 = vpack.c.b16 %v644, %v640
        %v737 = vpack.c.b16 %v645, %v641
        %v738 = vpack.c.b16 %v650, %v646
        %v739 = vpack.c.b16 %v651, %v647
        %v740 = vpack.c.b16 %v652, %v648
        %v741 = vpack.c.b16 %v653, %v649
        %v742 = vpack.c.b16 %v658, %v654
        %v743 = vpack.c.b16 %v659, %v655
        %v744 = vpack.c.b16 %v660, %v656
        %v745 = vpack.c.b16 %v661, %v657
        %v746 = vpack.c.b16 %v666, %v662
        %v747 = vpack.c.b16 %v667, %v663
        %v748 = vpack.c.b16 %v668, %v664
        %v749 = vpack.c.b16 %v669, %v665
        %v750 = vpack.c.b16 %v674, %v670
        %v751 = vpack.c.b16 %v675, %v671
        %v752 = vpack.c.b16 %v676, %v672
        %v753 = vpack.c.b16 %v677, %v673
        %v754 = vpack.c.b16 %v682, %v678
        %v755 = vpack.c.b16 %v683, %v679
        %v756 = vpack.c.b16 %v684, %v680
        %v757 = vpack.c.b16 %v685, %v681
        %v758 = vpack.c.b16 %v690, %v686
        %v759 = vpack.c.b16 %v691, %v687
        %v760 = vpack.c.b16 %v692, %v688
        %v761 = vpack.c.b16 %v693, %v689
        %v762 = vpack.c.b16 %v698, %v694
        %v763 = vpack.c.b16 %v699, %v695
        %v764 = vpack.c.b16 %v700, %v696
        %v765 = vpack.c.b16 %v701, %v697
        %830 = vmatpush.bf16.msra.mxu0 %v730
        %831 = vmatpush.bf16.msra.mxu0 %v726
        %832 = vmatpush.bf16.msra.mxu0 %v722
        %833 = vmatpush.bf16.msra.mxu0 %v718
        %834 = vmatpush.bf16.msra.mxu0 %v714
        %835 = vmatpush.bf16.msra.mxu0 %v710
        %836 = vmatpush.bf16.msra.mxu0 %v706
        %837 = vmatpush.bf16.msra.mxu0 %v702
        %838 = vmatmul.bf16.gmra.mxu0 %v506
        %v839 = vpop.f32.mrf.mxu0
        %v840 = vadd.f32 %v492, %v839
        %v841 = vpop.f32.mrf.mxu0
        %v842 = vadd.f32 %v492, %v841
        %843 = vdwg.mxu0
        %844 = vmatpush.bf16.msra.mxu0 %v762
        %845 = vmatpush.bf16.msra.mxu0 %v758
        %846 = vmatpush.bf16.msra.mxu0 %v754
        %847 = vmatpush.bf16.msra.mxu0 %v750
        %848 = vmatpush.bf16.msra.mxu0 %v746
        %849 = vmatpush.bf16.msra.mxu0 %v742
        %850 = vmatpush.bf16.msra.mxu0 %v738
        %851 = vmatpush.bf16.msra.mxu0 %v734
        %852 = vmatmul.bf16.gmra.mxu0 %v507
        %v853 = vpop.f32.mrf.mxu0
        %v854 = vadd.f32 %v840, %v853
        %v855 = vpop.f32.mrf.mxu0
        %v856 = vadd.f32 %v842, %v855
        %857 = vdwg.mxu0
        %858 = vmatpush.bf16.msra.mxu0 %v731
        %859 = vmatpush.bf16.msra.mxu0 %v727
        %860 = vmatpush.bf16.msra.mxu0 %v723
        %861 = vmatpush.bf16.msra.mxu0 %v719
        %862 = vmatpush.bf16.msra.mxu0 %v715
        %863 = vmatpush.bf16.msra.mxu0 %v711
        %864 = vmatpush.bf16.msra.mxu0 %v707
        %865 = vmatpush.bf16.msra.mxu0 %v703
        %866 = vmatmul.bf16.gmra.mxu0 %v506
        %v867 = vpop.f32.mrf.mxu0
        %v868 = vadd.f32 %v493, %v867
        %v869 = vpop.f32.mrf.mxu0
        %v870 = vadd.f32 %v493, %v869
        %871 = vdwg.mxu0
        %872 = vmatpush.bf16.msra.mxu0 %v763
        %873 = vmatpush.bf16.msra.mxu0 %v759
        %874 = vmatpush.bf16.msra.mxu0 %v755
        %875 = vmatpush.bf16.msra.mxu0 %v751
        %876 = vmatpush.bf16.msra.mxu0 %v747
        %877 = vmatpush.bf16.msra.mxu0 %v743
        %878 = vmatpush.bf16.msra.mxu0 %v739
        %879 = vmatpush.bf16.msra.mxu0 %v735
        %880 = vmatmul.bf16.gmra.mxu0 %v507
        %v881 = vpop.f32.mrf.mxu0
        %v882 = vadd.f32 %v868, %v881
        %v883 = vpop.f32.mrf.mxu0
        %v884 = vadd.f32 %v870, %v883
        %885 = vdwg.mxu0
        %886 = vmatpush.bf16.msra.mxu0 %v732
        %887 = vmatpush.bf16.msra.mxu0 %v728
        %888 = vmatpush.bf16.msra.mxu0 %v724
        %889 = vmatpush.bf16.msra.mxu0 %v720
        %890 = vmatpush.bf16.msra.mxu0 %v716
        %891 = vmatpush.bf16.msra.mxu0 %v712
        %892 = vmatpush.bf16.msra.mxu0 %v708
        %893 = vmatpush.bf16.msra.mxu0 %v704
        %894 = vmatmul.bf16.gmra.mxu0 %v506
        %v895 = vpop.f32.mrf.mxu0
        %v896 = vadd.f32 %v494, %v895
        %v897 = vpop.f32.mrf.mxu0
        %v898 = vadd.f32 %v494, %v897
        %899 = vdwg.mxu0
        %900 = vmatpush.bf16.msra.mxu0 %v764
        %901 = vmatpush.bf16.msra.mxu0 %v760
        %902 = vmatpush.bf16.msra.mxu0 %v756
        %903 = vmatpush.bf16.msra.mxu0 %v752
        %904 = vmatpush.bf16.msra.mxu0 %v748
        %905 = vmatpush.bf16.msra.mxu0 %v744
        %906 = vmatpush.bf16.msra.mxu0 %v740
        %907 = vmatpush.bf16.msra.mxu0 %v736
        %908 = vmatmul.bf16.gmra.mxu0 %v507
        %v909 = vpop.f32.mrf.mxu0
        %v910 = vadd.f32 %v896, %v909
        %v911 = vpop.f32.mrf.mxu0
        %v912 = vadd.f32 %v898, %v911
        %913 = vdwg.mxu0
        %914 = vmatpush.bf16.msra.mxu0 %v733
        %915 = vmatpush.bf16.msra.mxu0 %v729
        %916 = vmatpush.bf16.msra.mxu0 %v725
        %917 = vmatpush.bf16.msra.mxu0 %v721
        %918 = vmatpush.bf16.msra.mxu0 %v717
        %919 = vmatpush.bf16.msra.mxu0 %v713
        %920 = vmatpush.bf16.msra.mxu0 %v709
        %921 = vmatpush.bf16.msra.mxu0 %v705
        %922 = vmatmul.bf16.gmra.mxu0 %v506
        %v923 = vpop.f32.mrf.mxu0
        %v924 = vadd.f32 %v495, %v923
        %v925 = vpop.f32.mrf.mxu0
        %v926 = vadd.f32 %v495, %v925
        %927 = vdwg.mxu0
        %928 = vmatpush.bf16.msra.mxu0 %v765
        %929 = vmatpush.bf16.msra.mxu0 %v761
        %930 = vmatpush.bf16.msra.mxu0 %v757
        %931 = vmatpush.bf16.msra.mxu0 %v753
        %932 = vmatpush.bf16.msra.mxu0 %v749
        %933 = vmatpush.bf16.msra.mxu0 %v745
        %934 = vmatpush.bf16.msra.mxu0 %v741
        %935 = vmatpush.bf16.msra.mxu0 %v737
        %936 = vmatmul.bf16.gmra.mxu0 %v507
        %v937 = vpop.f32.mrf.mxu0
        %v938 = vadd.f32 %v924, %v937
        %v939 = vpop.f32.mrf.mxu0
        %v940 = vadd.f32 %v926, %v939
        %941 = vdwg.mxu0
        %v942 = vmul.f32 %v854, 0.5
        %v943 = vmul.f32 %v882, 0.5
        %v944 = vmul.f32 %v910, 0.5
        %v945 = vmul.f32 %v938, 0.5
        %v946 = vmul.f32 %v856, 0.5
        %v947 = vmul.f32 %v884, 0.5
        %v948 = vmul.f32 %v912, 0.5
        %v949 = vmul.f32 %v940, 0.5
        %v950 = vmul.f32 %v854, 0.70710677
        %v951 = vmul.f32 %v882, 0.70710677
        %v952 = vmul.f32 %v910, 0.70710677
        %v953 = vmul.f32 %v938, 0.70710677
        %v954 = vmul.f32 %v856, 0.70710677
        %v955 = vmul.f32 %v884, 0.70710677
        %v956 = vmul.f32 %v912, 0.70710677
        %v957 = vmul.f32 %v940, 0.70710677
        %v958 = vmul.f32 %v950, %v950
        %v959 = vmin.f32 16.0, %v958
        %v960 = vmul.f32 %v959, 2.1237322e-06
        %v961 = vadd.f32 %v960, 0.00028619796
        %v962 = vmul.f32 %v959, %v961
        %v963 = vadd.f32 %v962, 0.0036580483
        %v964 = vmul.f32 %v959, %v963
        %v965 = vadd.f32 %v964, 0.05243302
        %v966 = vmul.f32 %v959, %v965
        %v967 = vadd.f32 %v966, 0.18741608
        %v968 = vmul.f32 %v959, %v967
        %v969 = vadd.f32 %v968, 1.1283791
        %v970 = vmul.f32 %v950, %v969
        %v971 = vmul.f32 %v959, 3.8918573e-05
        %v972 = vadd.f32 %v971, 0.001143296
        %v973 = vmul.f32 %v959, %v972
        %v974 = vadd.f32 %v973, 0.014752088
        %v975 = vmul.f32 %v959, %v974
        %v976 = vadd.f32 %v975, 0.112945676
        %v977 = vmul.f32 %v959, %v976
        %v978 = vadd.f32 %v977, 0.4994258
        %v979 = vmul.f32 %v959, %v978
        %v980 = vadd.f32 %v979, 1.0
        %v981 = vrcp.pop %v980
        %v982 = vmul.f32 %v980, %v981
        %v983 = vsub.f32 1.0, %v982
        %v984 = vmul.f32 %v981, %v983
        %v985 = vadd.f32 %v981, %v984
        %vm986 = vweird.f32 %v980
        %vm987 = vweird.f32 %v981
        %vm988 = vmor %vm986, %vm987
        %v989 = vsel %vm988, %v981, %v985
        %v990 = vand.u32 2147483647, %v980
        %vm991 = vcmp.eq.f32.partialorder %v990, 8.507059e+37
        %v992 = vand.u32 %v980, 2147483648
        %v993 = vor.u32 1.1754944e-38, %v992
        %v994 = vsel %vm991, %v993, %v989
        %v995 = vmul.f32 %v970, %v994
        %v996 = vmin.f32 %v995, 1.0
        %v997 = vmax.f32 %v996, -1.0
        %v998 = vmul.f32 %v951, %v951
        %v999 = vmin.f32 16.0, %v998
        %v1000 = vmul.f32 %v999, 2.1237322e-06
        %v1001 = vadd.f32 %v1000, 0.00028619796
        %v1002 = vmul.f32 %v999, %v1001
        %v1003 = vadd.f32 %v1002, 0.0036580483
        %v1004 = vmul.f32 %v999, %v1003
        %v1005 = vadd.f32 %v1004, 0.05243302
        %v1006 = vmul.f32 %v999, %v1005
        %v1007 = vadd.f32 %v1006, 0.18741608
        %v1008 = vmul.f32 %v999, %v1007
        %v1009 = vadd.f32 %v1008, 1.1283791
        %v1010 = vmul.f32 %v951, %v1009
        %v1011 = vmul.f32 %v999, 3.8918573e-05
        %v1012 = vadd.f32 %v1011, 0.001143296
        %v1013 = vmul.f32 %v999, %v1012
        %v1014 = vadd.f32 %v1013, 0.014752088
        %v1015 = vmul.f32 %v999, %v1014
        %v1016 = vadd.f32 %v1015, 0.112945676
        %v1017 = vmul.f32 %v999, %v1016
        %v1018 = vadd.f32 %v1017, 0.4994258
        %v1019 = vmul.f32 %v999, %v1018
        %v1020 = vadd.f32 %v1019, 1.0
        %v1021 = vrcp.pop %v1020
        %v1022 = vmul.f32 %v1020, %v1021
        %v1023 = vsub.f32 1.0, %v1022
        %v1024 = vmul.f32 %v1021, %v1023
        %v1025 = vadd.f32 %v1021, %v1024
        %vm1026 = vweird.f32 %v1020
        %vm1027 = vweird.f32 %v1021
        %vm1028 = vmor %vm1026, %vm1027
        %v1029 = vsel %vm1028, %v1021, %v1025
        %v1030 = vand.u32 2147483647, %v1020
        %vm1031 = vcmp.eq.f32.partialorder %v1030, 8.507059e+37
        %v1032 = vand.u32 %v1020, 2147483648
        %v1033 = vor.u32 1.1754944e-38, %v1032
        %v1034 = vsel %vm1031, %v1033, %v1029
        %v1035 = vmul.f32 %v1010, %v1034
        %v1036 = vmin.f32 %v1035, 1.0
        %v1037 = vmax.f32 %v1036, -1.0
        %v1038 = vmul.f32 %v952, %v952
        %v1039 = vmin.f32 16.0, %v1038
        %v1040 = vmul.f32 %v1039, 2.1237322e-06
        %v1041 = vadd.f32 %v1040, 0.00028619796
        %v1042 = vmul.f32 %v1039, %v1041
        %v1043 = vadd.f32 %v1042, 0.0036580483
        %v1044 = vmul.f32 %v1039, %v1043
        %v1045 = vadd.f32 %v1044, 0.05243302
        %v1046 = vmul.f32 %v1039, %v1045
        %v1047 = vadd.f32 %v1046, 0.18741608
        %v1048 = vmul.f32 %v1039, %v1047
        %v1049 = vadd.f32 %v1048, 1.1283791
        %v1050 = vmul.f32 %v952, %v1049
        %v1051 = vmul.f32 %v1039, 3.8918573e-05
        %v1052 = vadd.f32 %v1051, 0.001143296
        %v1053 = vmul.f32 %v1039, %v1052
        %v1054 = vadd.f32 %v1053, 0.014752088
        %v1055 = vmul.f32 %v1039, %v1054
        %v1056 = vadd.f32 %v1055, 0.112945676
        %v1057 = vmul.f32 %v1039, %v1056
        %v1058 = vadd.f32 %v1057, 0.4994258
        %v1059 = vmul.f32 %v1039, %v1058
        %v1060 = vadd.f32 %v1059, 1.0
        %v1061 = vrcp.pop %v1060
        %v1062 = vmul.f32 %v1060, %v1061
        %v1063 = vsub.f32 1.0, %v1062
        %v1064 = vmul.f32 %v1061, %v1063
        %v1065 = vadd.f32 %v1061, %v1064
        %vm1066 = vweird.f32 %v1060
        %vm1067 = vweird.f32 %v1061
        %vm1068 = vmor %vm1066, %vm1067
        %v1069 = vsel %vm1068, %v1061, %v1065
        %v1070 = vand.u32 2147483647, %v1060
        %vm1071 = vcmp.eq.f32.partialorder %v1070, 8.507059e+37
        %v1072 = vand.u32 %v1060, 2147483648
        %v1073 = vor.u32 1.1754944e-38, %v1072
        %v1074 = vsel %vm1071, %v1073, %v1069
        %v1075 = vmul.f32 %v1050, %v1074
        %v1076 = vmin.f32 %v1075, 1.0
        %v1077 = vmax.f32 %v1076, -1.0
        %v1078 = vmul.f32 %v953, %v953
        %v1079 = vmin.f32 16.0, %v1078
        %v1080 = vmul.f32 %v1079, 2.1237322e-06
        %v1081 = vadd.f32 %v1080, 0.00028619796
        %v1082 = vmul.f32 %v1079, %v1081
        %v1083 = vadd.f32 %v1082, 0.0036580483
        %v1084 = vmul.f32 %v1079, %v1083
        %v1085 = vadd.f32 %v1084, 0.05243302
        %v1086 = vmul.f32 %v1079, %v1085
        %v1087 = vadd.f32 %v1086, 0.18741608
        %v1088 = vmul.f32 %v1079, %v1087
        %v1089 = vadd.f32 %v1088, 1.1283791
        %v1090 = vmul.f32 %v953, %v1089
        %v1091 = vmul.f32 %v1079, 3.8918573e-05
        %v1092 = vadd.f32 %v1091, 0.001143296
        %v1093 = vmul.f32 %v1079, %v1092
        %v1094 = vadd.f32 %v1093, 0.014752088
        %v1095 = vmul.f32 %v1079, %v1094
        %v1096 = vadd.f32 %v1095, 0.112945676
        %v1097 = vmul.f32 %v1079, %v1096
        %v1098 = vadd.f32 %v1097, 0.4994258
        %v1099 = vmul.f32 %v1079, %v1098
        %v1100 = vadd.f32 %v1099, 1.0
        %v1101 = vrcp.pop %v1100
        %v1102 = vmul.f32 %v1100, %v1101
        %v1103 = vsub.f32 1.0, %v1102
        %v1104 = vmul.f32 %v1101, %v1103
        %v1105 = vadd.f32 %v1101, %v1104
        %vm1106 = vweird.f32 %v1100
        %vm1107 = vweird.f32 %v1101
        %vm1108 = vmor %vm1106, %vm1107
        %v1109 = vsel %vm1108, %v1101, %v1105
        %v1110 = vand.u32 2147483647, %v1100
        %vm1111 = vcmp.eq.f32.partialorder %v1110, 8.507059e+37
        %v1112 = vand.u32 %v1100, 2147483648
        %v1113 = vor.u32 1.1754944e-38, %v1112
        %v1114 = vsel %vm1111, %v1113, %v1109
        %v1115 = vmul.f32 %v1090, %v1114
        %v1116 = vmin.f32 %v1115, 1.0
        %v1117 = vmax.f32 %v1116, -1.0
        %v1118 = vmul.f32 %v954, %v954
        %v1119 = vmin.f32 16.0, %v1118
        %v1120 = vmul.f32 %v1119, 2.1237322e-06
        %v1121 = vadd.f32 %v1120, 0.00028619796
        %v1122 = vmul.f32 %v1119, %v1121
        %v1123 = vadd.f32 %v1122, 0.0036580483
        %v1124 = vmul.f32 %v1119, %v1123
        %v1125 = vadd.f32 %v1124, 0.05243302
        %v1126 = vmul.f32 %v1119, %v1125
        %v1127 = vadd.f32 %v1126, 0.18741608
        %v1128 = vmul.f32 %v1119, %v1127
        %v1129 = vadd.f32 %v1128, 1.1283791
        %v1130 = vmul.f32 %v954, %v1129
        %v1131 = vmul.f32 %v1119, 3.8918573e-05
        %v1132 = vadd.f32 %v1131, 0.001143296
        %v1133 = vmul.f32 %v1119, %v1132
        %v1134 = vadd.f32 %v1133, 0.014752088
        %v1135 = vmul.f32 %v1119, %v1134
        %v1136 = vadd.f32 %v1135, 0.112945676
        %v1137 = vmul.f32 %v1119, %v1136
        %v1138 = vadd.f32 %v1137, 0.4994258
        %v1139 = vmul.f32 %v1119, %v1138
        %v1140 = vadd.f32 %v1139, 1.0
        %v1141 = vrcp.pop %v1140
        %v1142 = vmul.f32 %v1140, %v1141
        %v1143 = vsub.f32 1.0, %v1142
        %v1144 = vmul.f32 %v1141, %v1143
        %v1145 = vadd.f32 %v1141, %v1144
        %vm1146 = vweird.f32 %v1140
        %vm1147 = vweird.f32 %v1141
        %vm1148 = vmor %vm1146, %vm1147
        %v1149 = vsel %vm1148, %v1141, %v1145
        %v1150 = vand.u32 2147483647, %v1140
        %vm1151 = vcmp.eq.f32.partialorder %v1150, 8.507059e+37
        %v1152 = vand.u32 %v1140, 2147483648
        %v1153 = vor.u32 1.1754944e-38, %v1152
        %v1154 = vsel %vm1151, %v1153, %v1149
        %v1155 = vmul.f32 %v1130, %v1154
        %v1156 = vmin.f32 %v1155, 1.0
        %v1157 = vmax.f32 %v1156, -1.0
        %v1158 = vmul.f32 %v955, %v955
        %v1159 = vmin.f32 16.0, %v1158
        %v1160 = vmul.f32 %v1159, 2.1237322e-06
        %v1161 = vadd.f32 %v1160, 0.00028619796
        %v1162 = vmul.f32 %v1159, %v1161
        %v1163 = vadd.f32 %v1162, 0.0036580483
        %v1164 = vmul.f32 %v1159, %v1163
        %v1165 = vadd.f32 %v1164, 0.05243302
        %v1166 = vmul.f32 %v1159, %v1165
        %v1167 = vadd.f32 %v1166, 0.18741608
        %v1168 = vmul.f32 %v1159, %v1167
        %v1169 = vadd.f32 %v1168, 1.1283791
        %v1170 = vmul.f32 %v955, %v1169
        %v1171 = vmul.f32 %v1159, 3.8918573e-05
        %v1172 = vadd.f32 %v1171, 0.001143296
        %v1173 = vmul.f32 %v1159, %v1172
        %v1174 = vadd.f32 %v1173, 0.014752088
        %v1175 = vmul.f32 %v1159, %v1174
        %v1176 = vadd.f32 %v1175, 0.112945676
        %v1177 = vmul.f32 %v1159, %v1176
        %v1178 = vadd.f32 %v1177, 0.4994258
        %v1179 = vmul.f32 %v1159, %v1178
        %v1180 = vadd.f32 %v1179, 1.0
        %v1181 = vrcp.pop %v1180
        %v1182 = vmul.f32 %v1180, %v1181
        %v1183 = vsub.f32 1.0, %v1182
        %v1184 = vmul.f32 %v1181, %v1183
        %v1185 = vadd.f32 %v1181, %v1184
        %vm1186 = vweird.f32 %v1180
        %vm1187 = vweird.f32 %v1181
        %vm1188 = vmor %vm1186, %vm1187
        %v1189 = vsel %vm1188, %v1181, %v1185
        %v1190 = vand.u32 2147483647, %v1180
        %vm1191 = vcmp.eq.f32.partialorder %v1190, 8.507059e+37
        %v1192 = vand.u32 %v1180, 2147483648
        %v1193 = vor.u32 1.1754944e-38, %v1192
        %v1194 = vsel %vm1191, %v1193, %v1189
        %v1195 = vmul.f32 %v1170, %v1194
        %v1196 = vmin.f32 %v1195, 1.0
        %v1197 = vmax.f32 %v1196, -1.0
        %v1198 = vmul.f32 %v956, %v956
        %v1199 = vmin.f32 16.0, %v1198
        %v1200 = vmul.f32 %v1199, 2.1237322e-06
        %v1201 = vadd.f32 %v1200, 0.00028619796
        %v1202 = vmul.f32 %v1199, %v1201
        %v1203 = vadd.f32 %v1202, 0.0036580483
        %v1204 = vmul.f32 %v1199, %v1203
        %v1205 = vadd.f32 %v1204, 0.05243302
        %v1206 = vmul.f32 %v1199, %v1205
        %v1207 = vadd.f32 %v1206, 0.18741608
        %v1208 = vmul.f32 %v1199, %v1207
        %v1209 = vadd.f32 %v1208, 1.1283791
        %v1210 = vmul.f32 %v956, %v1209
        %v1211 = vmul.f32 %v1199, 3.8918573e-05
        %v1212 = vadd.f32 %v1211, 0.001143296
        %v1213 = vmul.f32 %v1199, %v1212
        %v1214 = vadd.f32 %v1213, 0.014752088
        %v1215 = vmul.f32 %v1199, %v1214
        %v1216 = vadd.f32 %v1215, 0.112945676
        %v1217 = vmul.f32 %v1199, %v1216
        %v1218 = vadd.f32 %v1217, 0.4994258
        %v1219 = vmul.f32 %v1199, %v1218
        %v1220 = vadd.f32 %v1219, 1.0
        %v1221 = vrcp.pop %v1220
        %v1222 = vmul.f32 %v1220, %v1221
        %v1223 = vsub.f32 1.0, %v1222
        %v1224 = vmul.f32 %v1221, %v1223
        %v1225 = vadd.f32 %v1221, %v1224
        %vm1226 = vweird.f32 %v1220
        %vm1227 = vweird.f32 %v1221
        %vm1228 = vmor %vm1226, %vm1227
        %v1229 = vsel %vm1228, %v1221, %v1225
        %v1230 = vand.u32 2147483647, %v1220
        %vm1231 = vcmp.eq.f32.partialorder %v1230, 8.507059e+37
        %v1232 = vand.u32 %v1220, 2147483648
        %v1233 = vor.u32 1.1754944e-38, %v1232
        %v1234 = vsel %vm1231, %v1233, %v1229
        %v1235 = vmul.f32 %v1210, %v1234
        %v1236 = vmin.f32 %v1235, 1.0
        %v1237 = vmax.f32 %v1236, -1.0
        %v1238 = vmul.f32 %v957, %v957
        %v1239 = vmin.f32 16.0, %v1238
        %v1240 = vmul.f32 %v1239, 2.1237322e-06
        %v1241 = vadd.f32 %v1240, 0.00028619796
        %v1242 = vmul.f32 %v1239, %v1241
        %v1243 = vadd.f32 %v1242, 0.0036580483
        %v1244 = vmul.f32 %v1239, %v1243
        %v1245 = vadd.f32 %v1244, 0.05243302
        %v1246 = vmul.f32 %v1239, %v1245
        %v1247 = vadd.f32 %v1246, 0.18741608
        %v1248 = vmul.f32 %v1239, %v1247
        %v1249 = vadd.f32 %v1248, 1.1283791
        %v1250 = vmul.f32 %v957, %v1249
        %v1251 = vmul.f32 %v1239, 3.8918573e-05
        %v1252 = vadd.f32 %v1251, 0.001143296
        %v1253 = vmul.f32 %v1239, %v1252
        %v1254 = vadd.f32 %v1253, 0.014752088
        %v1255 = vmul.f32 %v1239, %v1254
        %v1256 = vadd.f32 %v1255, 0.112945676
        %v1257 = vmul.f32 %v1239, %v1256
        %v1258 = vadd.f32 %v1257, 0.4994258
        %v1259 = vmul.f32 %v1239, %v1258
        %v1260 = vadd.f32 %v1259, 1.0
        %v1261 = vrcp.pop %v1260
        %v1262 = vmul.f32 %v1260, %v1261
        %v1263 = vsub.f32 1.0, %v1262
        %v1264 = vmul.f32 %v1261, %v1263
        %v1265 = vadd.f32 %v1261, %v1264
        %vm1266 = vweird.f32 %v1260
        %vm1267 = vweird.f32 %v1261
        %vm1268 = vmor %vm1266, %vm1267
        %v1269 = vsel %vm1268, %v1261, %v1265
        %v1270 = vand.u32 2147483647, %v1260
        %vm1271 = vcmp.eq.f32.partialorder %v1270, 8.507059e+37
        %v1272 = vand.u32 %v1260, 2147483648
        %v1273 = vor.u32 1.1754944e-38, %v1272
        %v1274 = vsel %vm1271, %v1273, %v1269
        %v1275 = vmul.f32 %v1250, %v1274
        %v1276 = vmin.f32 %v1275, 1.0
        %v1277 = vmax.f32 %v1276, -1.0
        %v1278 = vadd.f32 %v997, 1.0
        %v1279 = vadd.f32 %v1037, 1.0
        %v1280 = vadd.f32 %v1077, 1.0
        %v1281 = vadd.f32 %v1117, 1.0
        %v1282 = vadd.f32 %v1157, 1.0
        %v1283 = vadd.f32 %v1197, 1.0
        %v1284 = vadd.f32 %v1237, 1.0
        %v1285 = vadd.f32 %v1277, 1.0
        %v1286 = vmul.f32 %v942, %v1278
        %v1287 = vmul.f32 %v943, %v1279
        %v1288 = vmul.f32 %v944, %v1280
        %v1289 = vmul.f32 %v945, %v1281
        %v1290 = vmul.f32 %v946, %v1282
        %v1291 = vmul.f32 %v947, %v1283
        %v1292 = vmul.f32 %v948, %v1284
        %v1293 = vmul.f32 %v949, %v1285
        %v1294 = vpack.c.bf16 %v1287, %v1286
        %v1295 = vpack.c.bf16 %v1289, %v1288
        %v1296 = vpack.c.bf16 %v1291, %v1290
        %v1297 = vpack.c.bf16 %v1293, %v1292
        %1298 = vst [vmem:[%s323] sm:$0xff] %v1294
        %1299 = vst [vmem:[%s323 + $0x8] sm:$0xff] %v1295
        %1300 = vst [vmem:[%s323 + $0x10] sm:$0xff] %v1296
        %1301 = vst [vmem:[%s323 + $0x18] sm:$0xff] %v1297
        %s1302 = sand.u32 %s162, 1
        %s1303 = sand.u32 %s162, 1
        %s1304 = smul.addr %s1303, 32
        %s1305 = scalar_lea.vmem [#allocation8], %s1304
        // Predicated region
        $region57: #{block_forward.8} parent=39 // pred_check
          %p1306 = pneg %p172
        $region58: #{block_forward.8} parent=39 // pred_check_branch
          %1308 = sbr.rel (%p1306) target = $region60
        $region59: #{block_forward.8} parent=39 // pred_region
          %s1309 = smul.u32 2, %s24
          %s1310 = smul.u32 4, %s25
          %s1311 = smul.addr %s1309, 8
          %s1312 = sadd.s32 %s1310, %s1311
          %s1313 = smul.addr %s1312, 4
          %s1314 = scalar_lea.vmem %s5, %s1313
          // Predicated region
          $region61: #{block_forward.8} parent=59 // pred_check
            _
          $region62: #{block_forward.8} parent=59 // pred_check_branch
            %1316 = sbr.rel (0) target = $region64
          $region63: #{block_forward.8} parent=59 // pred_region
            // Predicated region
            $region65: #{block_forward.8} parent=63 // pred_check
              _
            $region66: #{block_forward.8} parent=63 // pred_check_branch
              %1318 = sbr.rel (0) target = $region68
            $region67: #{block_forward.8} parent=63 // pred_region
              loop: start=0, step=1, limit=1
              $region69: #{block_forward.8} parent=67 // loop_pre_header
                _
              $region70: #{block_forward.8} parent=67 // loop_header
                %s1320 = sphi 0, %s1324
                %p1321 = scmp.ge.s32.totalorder %s1320, 1
                %s1325 = sphi %s1305, %s1305
                %s1326 = sphi %s1314, %s1314
              $region71: #{block_forward.8} parent=67 // loop_header_branch
                %1323 = sbr.rel (%p1321) target = $region75
              $region72: #{block_forward.8} parent=67 // loop_body
                %v1327 = vld [vmem:[%s1325] sm:$0xff]
                %1328 = vst [vmem:[%s1326] sm:$0xff] %v1327
                %v1329 = vld [vmem:[%s1325 + $0x8] sm:$0xff]
                %1330 = vst [vmem:[%s1326 + $0x8] sm:$0xff] %v1329
                %v1331 = vld [vmem:[%s1325 + $0x10] sm:$0xff]
                %1332 = vst [vmem:[%s1326 + $0x20] sm:$0xff] %v1331
                %v1333 = vld [vmem:[%s1325 + $0x18] sm:$0xff]
                %1334 = vst [vmem:[%s1326 + $0x28] sm:$0xff] %v1333
              $region73: #{block_forward.8} parent=67 // loop_footer
                %s1324 = sadd.s32 1, %s1320
              $region74: #{block_forward.8} parent=67 // loop_footer_branch
                %1319 = sbr.rel target = $region70
              $region75: #{block_forward.8} parent=67 // loop_exit
                _
            $region68: #{block_forward.8} parent=63 // pred_fallthru
              _
            // Predicated region
            $region76: #{block_forward.8} parent=63 // pred_check
              _
            $region77: #{block_forward.8} parent=63 // pred_check_branch
              %1336 = sbr.rel target = $region79
            $region78: #{block_forward.8} parent=63 // pred_region
              _
            $region79: #{block_forward.8} parent=63 // pred_fallthru
              _
          $region64: #{block_forward.8} parent=59 // pred_fallthru
            _
          %1337 = vnop
        $region60: #{block_forward.8} parent=39 // pred_fallthru
          _
      $region40: #{block_forward.8} parent=5 // pred_fallthru
        _
      %p1338 = scmp.le.s32.totalorder 2, %s15
      // Predicated region
      $region80: #{block_forward.8} parent=5 // pred_check
        %p1339 = pneg %p1338
      $region81: #{block_forward.8} parent=5 // pred_check_branch
        %1341 = sbr.rel (%p1339) target = $region83
      $region82: #{block_forward.8} parent=5 // pred_region
        %s1342 = ssub.s32 %s15, 2
        // Predicated region
        $region84: #{block_forward.8} parent=82 // pred_check
          %p1343 = pneg %p178
        $region85: #{block_forward.8} parent=82 // pred_check_branch
          %1345 = sbr.rel (%p1343) target = $region87
        $region86: #{block_forward.8} parent=82 // pred_region
          %s1346 = sand.u32 %s163, 1
          %s1347 = sand.u32 %s163, 1
          %s1348 = smul.addr %s1347, 32
          %s1349 = scalar_lea.vmem [#allocation8], %s1348
        $region87: #{block_forward.8} parent=82 // pred_fallthru
          _
      $region83: #{block_forward.8} parent=5 // pred_fallthru
        _
    $region6: #{block_forward.8} parent=1 // loop_footer
      %s19 = sadd.s32 1, %s15
    $region7: #{block_forward.8} parent=1 // loop_footer_branch
      %14 = sbr.rel target = $region3
    $region8: #{block_forward.8} parent=1 // loop_exit
      _
    %1350 = vsyncpa [#allocation4], 1
    %s1351 = scalar_lea.sflag [#allocation4], 1
    %1352 = vsyncpa %s1351, 1
    %1353 = vsyncpa [#allocation6], 1
    %s1354 = scalar_lea.sflag [#allocation6], 1
    %1355 = vsyncpa %s1354, 1

// kernel: block_forward.5
$region0: #{block_forward.5}
  #allocation0 [shape = 'u32[]', space=smem, size = 0x4, offset = 0x4, fixed_abs, tag = 'smem constant byte address 0x4 - core index']
  #allocation1 [shape = 'u32[72,128]{1,0:T(1,128)}', space=vmem, size = 0x9000, scoped, tag = 'internal scratch']
  #allocation2 [shape = 'bf16[16,256]{1,0:T(8,128)(2,1)}', space=vmem, size = 0x2000, scoped, tag = 'scratch operand']
  %s0 = inlined_call_operand.hbm [shape: f32[16,256], index: 0, kind: input, shape index: {}]
  %s1 = inlined_call_operand.vmem [shape: f32[1,256], index: 1, kind: input, shape index: {}]
  %s2 = inlined_call_operand.vmem [shape: f32[1,256], index: 2, kind: input, shape index: {}]
  %s3 = inlined_call_operand.hbm [shape: bf16[256,768], index: 3, kind: input, shape index: {}]
  %s4 = inlined_call_operand.hbm [shape: f32[1,768], index: 4, kind: input, shape index: {}]
  %s5 = inlined_call_operand.vmem [shape: bf16[16,768], index: 5, kind: output, shape index: {}]
  %s6 = sld [smem:[#allocation0]]
  $region91: #{block_forward.5} parent=0
    _
  %s8 = ssub.s32 1, %s6
  %s9 = scalar_select 0, %s8, %s6
  $region1: #{block_forward.5} parent=0
    #allocation3 [shape = 'u8[16384]{0}', space=vmem, size = 0x4000, scoped, tag = 'input window, operand 0, single buffered']
    #allocation4 [shape = 's32[2]{0}', space=sflag, size = 0x8, scoped, tag = 'scoped memory for block_forward.5']
    #allocation5 [shape = 'u8[393216]{0}', space=vmem, size = 0x60000, scoped, tag = 'input window, operand 3']
    #allocation6 [shape = 's32[2]{0}', space=sflag, size = 0x8, scoped, tag = 'scoped memory for block_forward.5']
    #allocation7 [shape = 'u8[3072]{0}', space=vmem, size = 0xc00, scoped, tag = 'input window, operand 4']
    #allocation8 [shape = 'u8[24576]{0}', space=vmem, size = 0x6000, scoped, tag = 'output window, operand 0']
    %10 = vsyncpa [#allocation4], 0
    %11 = vsyncpa [#allocation6], 0
    %s12 = scalar_lea.sflag [#allocation6], 1
    %13 = vsyncpa %s12, 0
    loop: start=0, step=1, limit=4
    $region2: #{block_forward.5} parent=1 // loop_pre_header
      _
    $region3: #{block_forward.5} parent=1 // loop_header
      %s15 = sphi 0, %s19
      %p16 = scmp.ge.s32.totalorder %s15, 4
      %s22 = sphi 0, %s34
      %s23 = sphi 0, %s30
      %s24 = sphi 0, %s22
      %s25 = sphi 0, %s23
      %s26 = sphi 0, %s24
      %s27 = sphi 0, %s25
      %s37 = sphi 0, %s39
      %s40 = sphi 0, %s37
      %s41 = sphi 0, %s40
      %s57 = sphi 0, %s41
      %s61 = sphi 0, %s61
      %s63 = sphi 0, %s61
      %s64 = sphi 0, %s63
      %s78 = sphi 0, %s64
      %s82 = sphi 0, %s82
      %s84 = sphi 0, %s82
      %s85 = sphi 0, %s84
      %s99 = sphi 0, %s85
      %s105 = sphi 0, %s107
      %s108 = sphi 0, %s105
      %s109 = sphi 0, %s108
      %s125 = sphi 0, %s109
      %s131 = sphi 0, %s133
      %s134 = sphi 0, %s131
      %s135 = sphi 0, %s134
      %s151 = sphi 0, %s135
      %s159 = sphi 0, %s161
      %s162 = sphi 0, %s159
      %s163 = sphi 0, %s162
      %s179 = sphi 0, %s163
    $region4: #{block_forward.5} parent=1 // loop_header_branch
      %18 = sbr.rel (%p16) target = $region8
    $region5: #{block_forward.5} parent=1 // loop_body
      %s20 = ssub.s32 %s15, 1
      %s21 = ssub.s32 %s15, 2
      %s28 = sadd.s32 1, %s23
      %p29 = scmp.ge.s32.totalorder %s28, 2
      %s30 = scalar_select %p29, 0, %s28
      %s31 = sadd.s32 1, %s22
      %s32 = scalar_select %p29, %s31, %s22
      %p33 = scmp.ge.s32.totalorder %s32, 1
      %s34 = scalar_select %p33, 0, %s32
      %s35 = ssub.s32 %s22, %s34
      %p36 = scmp.eq.s32.totalorder %s35, 0
      %s38 = sadd.s32 %s37, 1
      %s39 = scalar_select %p36, %s37, %s38
      %p42 = pneg %p36
      %p43 = scmp.eq.s32.totalorder %s15, 1
      %p44 = por %p42, %p43
      %p45 = scmp.ne.s32.totalorder %s37, %s40
      %p46 = scmp.eq.s32.totalorder %s15, 0
      %p47 = por %p45, %p46
      %p48 = scmp.ne.s32.totalorder %s37, %s40
      %p49 = scmp.eq.s32.totalorder %s20, 1
      %p50 = por %p48, %p49
      %p51 = scmp.ne.s32.totalorder %s40, %s41
      %p52 = scmp.eq.s32.totalorder %s20, 0
      %p53 = por %p51, %p52
      %p54 = scmp.ne.s32.totalorder %s40, %s41
      %p55 = scmp.eq.s32.totalorder %s21, 1
      %p56 = por %p54, %p55
      %p58 = scmp.ne.s32.totalorder %s41, %s57
      %p59 = scmp.eq.s32.totalorder %s21, 0
      %p60 = por %p58, %p59
      %s62 = sadd.s32 %s61, 1
      %p65 = scmp.eq.s32.totalorder %s15, 1
      %p66 = scmp.ne.s32.totalorder %s61, %s63
      %p67 = scmp.eq.s32.totalorder %s15, 0
      %p68 = por %p66, %p67
      %p69 = scmp.ne.s32.totalorder %s61, %s63
      %p70 = scmp.eq.s32.totalorder %s20, 1
      %p71 = por %p69, %p70
      %p72 = scmp.ne.s32.totalorder %s63, %s64
      %p73 = scmp.eq.s32.totalorder %s20, 0
      %p74 = por %p72, %p73
      %p75 = scmp.ne.s32.totalorder %s63, %s64
      %p76 = scmp.eq.s32.totalorder %s21, 1
      %p77 = por %p75, %p76
      %p79 = scmp.ne.s32.totalorder %s64, %s78
      %p80 = scmp.eq.s32.totalorder %s21, 0
      %p81 = por %p79, %p80
      %s83 = sadd.s32 %s82, 1
      %p86 = scmp.eq.s32.totalorder %s15, 1
      %p87 = scmp.ne.s32.totalorder %s82, %s84
      %p88 = scmp.eq.s32.totalorder %s15, 0
      %p89 = por %p87, %p88
      %p90 = scmp.ne.s32.totalorder %s82, %s84
      %p91 = scmp.eq.s32.totalorder %s20, 1
      %p92 = por %p90, %p91
      %p93 = scmp.ne.s32.totalorder %s84, %s85
      %p94 = scmp.eq.s32.totalorder %s20, 0
      %p95 = por %p93, %p94
      %p96 = scmp.ne.s32.totalorder %s84, %s85
      %p97 = scmp.eq.s32.totalorder %s21, 1
      %p98 = por %p96, %p97
      %p100 = scmp.ne.s32.totalorder %s85, %s99
      %p101 = scmp.eq.s32.totalorder %s21, 0
      %p102 = por %p100, %p101
      %s103 = ssub.s32 %s23, %s30
      %p104 = scmp.eq.s32.totalorder %s103, 0
      %s106 = sadd.s32 %s105, 1
      %s107 = scalar_select %p104, %s105, %s106
      %p110 = pneg %p104
      %p111 = scmp.eq.s32.totalorder %s15, 1
      %p112 = por %p110, %p111
      %p113 = scmp.ne.s32.totalorder %s105, %s108
      %p114 = scmp.eq.s32.totalorder %s15, 0
      %p115 = por %p113, %p114
      %p116 = scmp.ne.s32.totalorder %s105, %s108
      %p117 = scmp.eq.s32.totalorder %s20, 1
      %p118 = por %p116, %p117
      %p119 = scmp.ne.s32.totalorder %s108, %s109
      %p120 = scmp.eq.s32.totalorder %s20, 0
      %p121 = por %p119, %p120
      %p122 = scmp.ne.s32.totalorder %s108, %s109
      %p123 = scmp.eq.s32.totalorder %s21, 1
      %p124 = por %p122, %p123
      %p126 = scmp.ne.s32.totalorder %s109, %s125
      %p127 = scmp.eq.s32.totalorder %s21, 0
      %p128 = por %p126, %p127
      %s129 = ssub.s32 %s23, %s30
      %p130 = scmp.eq.s32.totalorder %s129, 0
      %s132 = sadd.s32 %s131, 1
      %s133 = scalar_select %p130, %s131, %s132
      %p136 = pneg %p130
      %p137 = scmp.eq.s32.totalorder %s15, 1
      %p138 = por %p136, %p137
      %p139 = scmp.ne.s32.totalorder %s131, %s134
      %p140 = scmp.eq.s32.totalorder %s15, 0
      %p141 = por %p139, %p140
      %p142 = scmp.ne.s32.totalorder %s131, %s134
      %p143 = scmp.eq.s32.totalorder %s20, 1
      %p144 = por %p142, %p143
      %p145 = scmp.ne.s32.totalorder %s134, %s135
      %p146 = scmp.eq.s32.totalorder %s20, 0
      %p147 = por %p145, %p146
      %p148 = scmp.ne.s32.totalorder %s134, %s135
      %p149 = scmp.eq.s32.totalorder %s21, 1
      %p150 = por %p148, %p149
      %p152 = scmp.ne.s32.totalorder %s135, %s151
      %p153 = scmp.eq.s32.totalorder %s21, 0
      %p154 = por %p152, %p153
      %s155 = ssub.s32 %s22, %s34
      %s156 = ssub.s32 %s23, %s30
      %s157 = sor.u32 %s155, %s156
      %p158 = scmp.eq.s32.totalorder %s157, 0
      %s160 = sadd.s32 %s159, 1
      %s161 = scalar_select %p158, %s159, %s160
      %p164 = pneg %p158
      %p165 = scmp.eq.s32.totalorder %s15, 1
      %p166 = por %p164, %p165
      %p167 = scmp.ne.s32.totalorder %s159, %s162
      %p168 = scmp.eq.s32.totalorder %s15, 0
      %p169 = por %p167, %p168
      %p170 = scmp.ne.s32.totalorder %s159, %s162
      %p171 = scmp.eq.s32.totalorder %s20, 1
      %p172 = por %p170, %p171
      %p173 = scmp.ne.s32.totalorder %s162, %s163
      %p174 = scmp.eq.s32.totalorder %s20, 0
      %p175 = por %p173, %p174
      %p176 = scmp.ne.s32.totalorder %s162, %s163
      %p177 = scmp.eq.s32.totalorder %s21, 1
      %p178 = por %p176, %p177
      %p180 = scmp.ne.s32.totalorder %s163, %s179
      %p181 = scmp.eq.s32.totalorder %s21, 0
      %p182 = por %p180, %p181
      %p183 = scmp.le.s32.totalorder 1, %s15
      %p184 = scmp.lt.s32.totalorder %s15, 3
      %p185 = pnand %p183, %p184
      %p186 = pneg %p185
      // Predicated region
      $region9: #{block_forward.5} parent=5 // pred_check
        _
      $region10: #{block_forward.5} parent=5 // pred_check_branch
        %188 = sbr.rel (%p185) target = $region12
      $region11: #{block_forward.5} parent=5 // pred_region
        %s189 = ssub.s32 %s15, 1
        // Predicated region
        $region13: #{block_forward.5} parent=11 // pred_check
          %p190 = pneg %p53
        $region14: #{block_forward.5} parent=11 // pred_check_branch
          %192 = sbr.rel (%p190) target = $region16
        $region15: #{block_forward.5} parent=11 // pred_region
          %s193 = smul.u32 2, %s24
          %195 = vsyncadd [#allocation4], 0
          %s196 = smul.addr %s193, 2
          %s197 = smul.addr %s196, 8
          %s198 = scalar_lea.hbm %s0, %s197
          %s199 = sshll.u32 %s198, 4
          %s200 = int_to_ptr.hbm [resolvable:$true] %s199
          %s201 = sshll.u32 [#allocation3], 4
          %s202 = int_to_ptr.vmem [resolvable:$true] %s201
          %207 = dma.hbm_to_vmem [thread:$0]  %s200, 512, %s202, [#allocation4], 256, 256, 16
        $region16: #{block_forward.5} parent=11 // pred_fallthru
          _
        // Predicated region
        $region17: #{block_forward.5} parent=11 // pred_check
          %p208 = pneg %p74
        $region18: #{block_forward.5} parent=11 // pred_check_branch
          %210 = sbr.rel (%p208) target = $region20
        $region19: #{block_forward.5} parent=11 // pred_region
          _
        $region20: #{block_forward.5} parent=11 // pred_fallthru
          _
        // Predicated region
        $region21: #{block_forward.5} parent=11 // pred_check
          %p211 = pneg %p95
        $region22: #{block_forward.5} parent=11 // pred_check_branch
          %213 = sbr.rel (%p211) target = $region24
        $region23: #{block_forward.5} parent=11 // pred_region
          _
        $region24: #{block_forward.5} parent=11 // pred_fallthru
          _
      $region12: #{block_forward.5} parent=5 // pred_fallthru
        _
      %p214 = scmp.lt.s32.totalorder %s15, 2
      // Predicated region
      $region25: #{block_forward.5} parent=5 // pred_check
        %p215 = pneg %p214
      $region26: #{block_forward.5} parent=5 // pred_check_branch
        %217 = sbr.rel (%p215) target = $region28
      $region27: #{block_forward.5} parent=5 // pred_region
        // Predicated region
        $region29: #{block_forward.5} parent=27 // pred_check
          %p218 = pneg %p115
        $region30: #{block_forward.5} parent=27 // pred_check_branch
          %220 = sbr.rel (%p218) target = $region32
        $region31: #{block_forward.5} parent=27 // pred_region
          %s221 = sand.u32 %s15, 1
          %s222 = scalar_lea.sflag [#allocation6], %s221
          %s223 = sand.u32 %s105, 1
          %s224 = smul.addr %s223, 384
          %s225 = scalar_lea.vmem [#allocation5], %s224
          %s226 = smul.u32 3, %s23
          %228 = vsyncadd %s222, 0
          %s229 = smul.addr %s226, 4
          %s230 = scalar_lea.hbm %s3, %s229
          %s231 = sshll.u32 %s230, 4
          %s232 = int_to_ptr.hbm [resolvable:$true] %s231
          %s233 = sshll.u32 %s225, 4
          %s234 = int_to_ptr.vmem [resolvable:$true] %s233
          %239 = dma.hbm_to_vmem [thread:$0]  %s232, 6144, %s234, %s222, 384, 192, 12
        $region32: #{block_forward.5} parent=27 // pred_fallthru
          _
        // Predicated region
        $region33: #{block_forward.5} parent=27 // pred_check
          %p240 = pneg %p141
        $region34: #{block_forward.5} parent=27 // pred_check_branch
          %242 = sbr.rel (%p240) target = $region36
        $region35: #{block_forward.5} parent=27 // pred_region
          %s243 = sand.u32 %s15, 1
          %s244 = scalar_lea.sflag [#allocation6], %s243
          %s245 = sand.u32 %s131, 1
          %s246 = smul.addr %s245, 3
          %s247 = scalar_lea.vmem [#allocation7], %s246
          %s248 = smul.u32 3, %s23
          %250 = vsyncadd %s244, 0
          %s251 = scalar_lea.hbm %s4, %s248
          %s253 = sshll.u32 %s251, 4
          %s254 = int_to_ptr.hbm [resolvable:$true] %s253
          %s255 = sshll.u32 %s247, 4
          %s256 = int_to_ptr.vmem [resolvable:$true] %s255
          %258 = dma.hbm_to_vmem [thread:$0]  %s254, 48, %s256, %s244
        $region36: #{block_forward.5} parent=27 // pred_fallthru
          _
      $region28: #{block_forward.5} parent=5 // pred_fallthru
        _
      %p259 = scmp.le.s32.totalorder 1, %s15
      %p260 = scmp.lt.s32.totalorder %s15, 3
      %p261 = pnand %p259, %p260
      %p262 = pneg %p261
      // Predicated region
      $region37: #{block_forward.5} parent=5 // pred_check
        _
      $region38: #{block_forward.5} parent=5 // pred_check_branch
        %264 = sbr.rel (%p261) target = $region40
      $region39: #{block_forward.5} parent=5 // pred_region
        %s265 = ssub.s32 %s15, 1
        // Predicated region
        $region41: #{block_forward.5} parent=39 // pred_check
          %p266 = pneg %p53
        $region42: #{block_forward.5} parent=39 // pred_check_branch
          %268 = sbr.rel (%p266) target = $region44
        $region43: #{block_forward.5} parent=39 // pred_region
          %270 = dma.done [#allocation4], 512
        $region44: #{block_forward.5} parent=39 // pred_fallthru
          _
        %s271 = sand.u32 %s20, 1
        %s272 = scalar_lea.sflag [#allocation6], %s271
        %s273 = sand.u32 %s108, 1
        %s274 = smul.addr %s273, 384
        %s275 = scalar_lea.vmem [#allocation5], %s274
        // Predicated region
        $region45: #{block_forward.5} parent=39 // pred_check
          %p276 = pneg %p121
        $region46: #{block_forward.5} parent=39 // pred_check_branch
          %278 = sbr.rel (%p276) target = $region48
        $region47: #{block_forward.5} parent=39 // pred_region
          %280 = dma.done %s272, 6144
        $region48: #{block_forward.5} parent=39 // pred_fallthru
          _
        %s281 = sand.u32 %s20, 1
        %s282 = scalar_lea.sflag [#allocation6], %s281
        %s283 = sand.u32 %s134, 1
        %s284 = smul.addr %s283, 3
        %s285 = scalar_lea.vmem [#allocation7], %s284
        // Predicated region
        $region49: #{block_forward.5} parent=39 // pred_check
          %p286 = pneg %p147
        $region50: #{block_forward.5} parent=39 // pred_check_branch
          %288 = sbr.rel (%p286) target = $region52
        $region51: #{block_forward.5} parent=39 // pred_region
          %290 = dma.done %s282, 48
        $region52: #{block_forward.5} parent=39 // pred_fallthru
          _
        %p291 = pneg %p53
        %p292 = pneg %p50
        %p293 = pneg %p74
        %p294 = pneg %p71
        %p295 = pneg %p95
        %p296 = pneg %p92
        %s297 = sand.u32 %s20, 1
        %s298 = scalar_lea.sflag [#allocation6], %s297
        %s299 = sand.u32 %s108, 1
        %s300 = smul.addr %s299, 384
        %s301 = scalar_lea.vmem [#allocation5], %s300
        %p302 = pneg %p121
        %p303 = pneg %p118
        %s304 = sand.u32 %s20, 1
        %s305 = scalar_lea.sflag [#allocation6], %s304
        %s306 = sand.u32 %s134, 1
        %s307 = smul.addr %s306, 3
        %s308 = scalar_lea.vmem [#allocation7], %s307
        %p309 = pneg %p147
        %p310 = pneg %p144
        %p311 = pneg %p175
        %p312 = pneg %p172
        %s313 = sand.u32 %s162, 1
        %s314 = sand.u32 %s162, 1
        %s315 = smul.addr %s314, 24
        %s316 = scalar_lea.vmem [#allocation8], %s315
        %s317 = smul.u32 2, %s24
        %s318 = smul.u32 3, %s25
        %s319 = smul.u32 3, %s25
        %s320 = smul.u32 2, %s24
        %s321 = smul.u32 3, %s25
        %p322 = scmp.eq.s32.totalorder %s25, 0
        // Predicated region
        $region53: #{block_forward.5} parent=39 // pred_check
          %p323 = pneg %p322
        $region54: #{block_forward.5} parent=39 // pred_check_branch
          %325 = sbr.rel (%p323) target = $region56
        $region55: #{block_forward.5} parent=39 // pred_region
          %v326 = vld [vmem:[#allocation3] sm:$0xff]
          %v327 = vld [vmem:[#allocation3 + $0x8] sm:$0xff]
          %v328 = vld [vmem:[#allocation3 + $0x10] sm:$0xff]
          %v329 = vld [vmem:[#allocation3 + $0x18] sm:$0xff]
          %v330 = vadd.f32 %v326, %v327
          %331 = vadd.xlane.f32.xlu0 %v330
          %v332 = vpop.xlane.xlu0 %331
          %v333 = vadd.f32 %v328, %v329
          %334 = vadd.xlane.f32.xlu0 %v333
          %v335 = vpop.xlane.xlu0 %334
          %v336 = vrcp.pop 256.0
          %v337 = vmul.f32 256.0, %v336
          %v338 = vsub.f32 1.0, %v337
          %v339 = vmul.f32 %v336, %v338
          %v340 = vadd.f32 %v336, %v339
          %vm341 = vweird.f32 %v336
          %v342 = vsel %vm341, %v336, %v340
          %v343 = vmul.f32 %v332, %v342
          %v344 = vmul.f32 %v335, %v342
          %v345 = vsub.f32 %v326, %v343
          %v346 = vsub.f32 %v327, %v343
          %v347 = vsub.f32 %v328, %v344
          %v348 = vsub.f32 %v329, %v344
          %v349 = vmul.f32 %v345, %v345
          %v350 = vmul.f32 %v346, %v346
          %v351 = vmul.f32 %v347, %v347
          %v352 = vmul.f32 %v348, %v348
          %v353 = vadd.f32 %v349, %v350
          %354 = vadd.xlane.f32.xlu0 %v353
          %v355 = vpop.xlane.xlu0 %354
          %v356 = vadd.f32 %v351, %v352
          %357 = vadd.xlane.f32.xlu0 %v356
          %v358 = vpop.xlane.xlu0 %357
          %v359 = vmul.f32 %v355, %v342
          %v360 = vmul.f32 %v358, %v342
          %v361 = vadd.f32 %v359, 1e-05
          %v362 = vadd.f32 %v360, 1e-05
          %v363 = vrsqrt.pop %v361
          %v364 = vmul.f32 %v363, %v361
          %v365 = vmul.f32 %v364, %v363
          %v366 = vmul.f32 0.5, %v365
          %v367 = vsub.f32 1.5, %v366
          %v368 = vmul.f32 %v363, %v367
          %vm369 = vweird.f32 %v361
          %vm370 = vweird.f32 %v363
          %vm371 = vmor %vm369, %vm370
          %v372 = vsel %vm371, %v363, %v368
          %v373 = vrsqrt.pop %v362
          %v374 = vmul.f32 %v373, %v362
          %v375 = vmul.f32 %v374, %v373
          %v376 = vmul.f32 0.5, %v375
          %v377 = vsub.f32 1.5, %v376
          %v378 = vmul.f32 %v373, %v377
          %vm379 = vweird.f32 %v362
          %vm380 = vweird.f32 %v373
          %vm381 = vmor %vm379, %vm380
          %v382 = vsel %vm381, %v373, %v378
          %v383 = vmul.f32 %v345, %v372
          %v384 = vmul.f32 %v346, %v372
          %v385 = vmul.f32 %v347, %v382
          %v386 = vmul.f32 %v348, %v382
          %v387 = vld [vmem:[%s1] sm:$0x3]
          %v389 = vperm.slane %v387, 0
          %v390 = vperm.slane %v387, 1
          %v393 = vmul.f32 %v383, %v389
          %v394 = vmul.f32 %v384, %v390
          %v395 = vmul.f32 %v385, %v389
          %v396 = vmul.f32 %v386, %v390
          %v397 = vld [vmem:[%s2] sm:$0x3]
          %v399 = vperm.slane %v397, 0
          %v400 = vperm.slane %v397, 1
          %v403 = vadd.f32 %v393, %v399
          %v404 = vadd.f32 %v394, %v400
          %v405 = vadd.f32 %v395, %v399
          %v406 = vadd.f32 %v396, %v400
          %v407 = vpack.c.bf16 %v404, %v403
          %v408 = vpack.c.bf16 %v406, %v405
          %409 = vst [vmem:[#allocation2] sm:$0xff] %v407
          %410 = vst [vmem:[#allocation2 + $0x8] sm:$0xff] %v408
        $region56: #{block_forward.5} parent=39 // pred_fallthru
          _
        %v411 = vld [vmem:[#allocation2] sm:$0xff]
        %v412 = vld [vmem:[#allocation2 + $0x8] sm:$0xff]
        %v413 = vld [vmem:[%s275] sm:$0xff]
        %v414 = vld [vmem:[%s275 + $0x8] sm:$0xf]
        %v415 = vld [vmem:[%s275 + $0xc] sm:$0xff]
        %v416 = vld [vmem:[%s275 + $0x14] sm:$0xf]
        %v417 = vld [vmem:[%s275 + $0x18] sm:$0xff]
        %v418 = vld [vmem:[%s275 + $0x20] sm:$0xf]
        %v419 = vld [vmem:[%s275 + $0x24] sm:$0xff]
        %v420 = vld [vmem:[%s275 + $0x2c] sm:$0xf]
        %v421 = vld [vmem:[%s275 + $0x30] sm:$0xff]
        %v422 = vld [vmem:[%s275 + $0x38] sm:$0xf]
        %v423 = vld [vmem:[%s275 + $0x3c] sm:$0xff]
        %v424 = vld [vmem:[%s275 + $0x44] sm:$0xf]
        %v425 = vld [vmem:[%s275 + $0x48] sm:$0xff]
        %v426 = vld [vmem:[%s275 + $0x50] sm:$0xf]
        %v427 = vld [vmem:[%s275 + $0x54] sm:$0xff]
        %v428 = vld [vmem:[%s275 + $0x5c] sm:$0xf]
        %v429 = vld [vmem:[%s275 + $0x60] sm:$0xff]
        %v430 = vld [vmem:[%s275 + $0x68] sm:$0xf]
        %v431 = vld [vmem:[%s275 + $0x6c] sm:$0xff]
        %v432 = vld [vmem:[%s275 + $0x74] sm:$0xf]
        %v433 = vld [vmem:[%s275 + $0x78] sm:$0xff]
        %v434 = vld [vmem:[%s275 + $0x80] sm:$0xf]
        %v435 = vld [vmem:[%s275 + $0x84] sm:$0xff]
        %v436 = vld [vmem:[%s275 + $0x8c] sm:$0xf]
        %v437 = vld [vmem:[%s275 + $0x90] sm:$0xff]
        %v438 = vld [vmem:[%s275 + $0x98] sm:$0xf]
        %v439 = vld [vmem:[%s275 + $0x9c] sm:$0xff]
        %v440 = vld [vmem:[%s275 + $0xa4] sm:$0xf]
        %v441 = vld [vmem:[%s275 + $0xa8] sm:$0xff]
        %v442 = vld [vmem:[%s275 + $0xb0] sm:$0xf]
        %v443 = vld [vmem:[%s275 + $0xb4] sm:$0xff]
        %v444 = vld [vmem:[%s275 + $0xbc] sm:$0xf]
        %v445 = vld [vmem:[%s275 + $0xc0] sm:$0xff]
        %v446 = vld [vmem:[%s275 + $0xc8] sm:$0xf]
        %v447 = vld [vmem:[%s275 + $0xcc] sm:$0xff]
        %v448 = vld [vmem:[%s275 + $0xd4] sm:$0xf]
        %v449 = vld [vmem:[%s275 + $0xd8] sm:$0xff]
        %v450 = vld [vmem:[%s275 + $0xe0] sm:$0xf]
        %v451 = vld [vmem:[%s275 + $0xe4] sm:$0xff]
        %v452 = vld [vmem:[%s275 + $0xec] sm:$0xf]
        %v453 = vld [vmem:[%s275 + $0xf0] sm:$0xff]
        %v454 = vld [vmem:[%s275 + $0xf8] sm:$0xf]
        %v455 = vld [vmem:[%s275 + $0xfc] sm:$0xff]
        %v456 = vld [vmem:[%s275 + $0x104] sm:$0xf]
        %v457 = vld [vmem:[%s275 + $0x108] sm:$0xff]
        %v458 = vld [vmem:[%s275 + $0x110] sm:$0xf]
        %v459 = vld [vmem:[%s275 + $0x114] sm:$0xff]
        %v460 = vld [vmem:[%s275 + $0x11c] sm:$0xf]
        %v461 = vld [vmem:[%s275 + $0x120] sm:$0xff]
        %v462 = vld [vmem:[%s275 + $0x128] sm:$0xf]
        %v463 = vld [vmem:[%s275 + $0x12c] sm:$0xff]
        %v464 = vld [vmem:[%s275 + $0x134] sm:$0xf]
        %v465 = vld [vmem:[%s275 + $0x138] sm:$0xff]
        %v466 = vld [vmem:[%s275 + $0x140] sm:$0xf]
        %v467 = vld [vmem:[%s275 + $0x144] sm:$0xff]
        %v468 = vld [vmem:[%s275 + $0x14c] sm:$0xf]
        %v469 = vld [vmem:[%s275 + $0x150] sm:$0xff]
        %v470 = vld [vmem:[%s275 + $0x158] sm:$0xf]
        %v471 = vld [vmem:[%s275 + $0x15c] sm:$0xff]
        %v472 = vld [vmem:[%s275 + $0x164] sm:$0xf]
        %v473 = vld [vmem:[%s275 + $0x168] sm:$0xff]
        %v474 = vld [vmem:[%s275 + $0x170] sm:$0xf]
        %v475 = vld [vmem:[%s275 + $0x174] sm:$0xff]
        %v476 = vld [vmem:[%s275 + $0x17c] sm:$0xf]
        %v477 = vld [vmem:[%s285] sm:$0x7]
        %v479 = vperm.slane %v477, 0
        %v480 = vperm.slane %v477, 1
        %v481 = vperm.slane %v477, 2
        %v487 = vunpack.c.l.b16 %v411
        %v488 = vunpack.c.h.b16 %v411
        %v489 = vunpack.c.l.b16 %v412
        %v490 = vunpack.c.h.b16 %v412
        %v491 = vpack.c.b16 %v489, %v487
        %v492 = vpack.c.b16 %v490, %v488
        %v559 = vunpack.c.l.b16 %v413
        %v560 = vunpack.c.h.b16 %v413
        %v561 = vunpack.c.l.b16 %v414
        %v562 = vunpack.c.l.b16 %v415
        %v563 = vunpack.c.h.b16 %v415
        %v564 = vunpack.c.l.b16 %v416
        %v565 = vunpack.c.l.b16 %v417
        %v566 = vunpack.c.h.b16 %v417
        %v567 = vunpack.c.l.b16 %v418
        %v568 = vunpack.c.l.b16 %v419
        %v569 = vunpack.c.h.b16 %v419
        %v570 = vunpack.c.l.b16 %v420
        %v571 = vunpack.c.l.b16 %v421
        %v572 = vunpack.c.h.b16 %v421
        %v573 = vunpack.c.l.b16 %v422
        %v574 = vunpack.c.l.b16 %v423
        %v575 = vunpack.c.h.b16 %v423
        %v576 = vunpack.c.l.b16 %v424
        %v577 = vunpack.c.l.b16 %v425
        %v578 = vunpack.c.h.b16 %v425
        %v579 = vunpack.c.l.b16 %v426
        %v580 = vunpack.c.l.b16 %v427
        %v581 = vunpack.c.h.b16 %v427
        %v582 = vunpack.c.l.b16 %v428
        %v583 = vunpack.c.l.b16 %v429
        %v584 = vunpack.c.h.b16 %v429
        %v585 = vunpack.c.l.b16 %v430
        %v586 = vunpack.c.l.b16 %v431
        %v587 = vunpack.c.h.b16 %v431
        %v588 = vunpack.c.l.b16 %v432
        %v589 = vunpack.c.l.b16 %v433
        %v590 = vunpack.c.h.b16 %v433
        %v591 = vunpack.c.l.b16 %v434
        %v592 = vunpack.c.l.b16 %v435
        %v593 = vunpack.c.h.b16 %v435
        %v594 = vunpack.c.l.b16 %v436
        %v595 = vunpack.c.l.b16 %v437
        %v596 = vunpack.c.h.b16 %v437
        %v597 = vunpack.c.l.b16 %v438
        %v598 = vunpack.c.l.b16 %v439
        %v599 = vunpack.c.h.b16 %v439
        %v600 = vunpack.c.l.b16 %v440
        %v601 = vunpack.c.l.b16 %v441
        %v602 = vunpack.c.h.b16 %v441
        %v603 = vunpack.c.l.b16 %v442
        %v604 = vunpack.c.l.b16 %v443
        %v605 = vunpack.c.h.b16 %v443
        %v606 = vunpack.c.l.b16 %v444
        %v607 = vunpack.c.l.b16 %v445
        %v608 = vunpack.c.h.b16 %v445
        %v609 = vunpack.c.l.b16 %v446
        %v610 = vunpack.c.l.b16 %v447
        %v611 = vunpack.c.h.b16 %v447
        %v612 = vunpack.c.l.b16 %v448
        %v613 = vunpack.c.l.b16 %v449
        %v614 = vunpack.c.h.b16 %v449
        %v615 = vunpack.c.l.b16 %v450
        %v616 = vunpack.c.l.b16 %v451
        %v617 = vunpack.c.h.b16 %v451
        %v618 = vunpack.c.l.b16 %v452
        %v619 = vunpack.c.l.b16 %v453
        %v620 = vunpack.c.h.b16 %v453
        %v621 = vunpack.c.l.b16 %v454
        %v622 = vunpack.c.l.b16 %v455
        %v623 = vunpack.c.h.b16 %v455
        %v624 = vunpack.c.l.b16 %v456
        %v625 = vunpack.c.l.b16 %v457
        %v626 = vunpack.c.h.b16 %v457
        %v627 = vunpack.c.l.b16 %v458
        %v628 = vunpack.c.l.b16 %v459
        %v629 = vunpack.c.h.b16 %v459
        %v630 = vunpack.c.l.b16 %v460
        %v631 = vunpack.c.l.b16 %v461
        %v632 = vunpack.c.h.b16 %v461
        %v633 = vunpack.c.l.b16 %v462
        %v634 = vunpack.c.l.b16 %v463
        %v635 = vunpack.c.h.b16 %v463
        %v636 = vunpack.c.l.b16 %v464
        %v637 = vunpack.c.l.b16 %v465
        %v638 = vunpack.c.h.b16 %v465
        %v639 = vunpack.c.l.b16 %v466
        %v640 = vunpack.c.l.b16 %v467
        %v641 = vunpack.c.h.b16 %v467
        %v642 = vunpack.c.l.b16 %v468
        %v643 = vunpack.c.l.b16 %v469
        %v644 = vunpack.c.h.b16 %v469
        %v645 = vunpack.c.l.b16 %v470
        %v646 = vunpack.c.l.b16 %v471
        %v647 = vunpack.c.h.b16 %v471
        %v648 = vunpack.c.l.b16 %v472
        %v649 = vunpack.c.l.b16 %v473
        %v650 = vunpack.c.h.b16 %v473
        %v651 = vunpack.c.l.b16 %v474
        %v652 = vunpack.c.l.b16 %v475
        %v653 = vunpack.c.h.b16 %v475
        %v654 = vunpack.c.l.b16 %v476
        %v655 = vpack.c.b16 %v562, %v559
        %v656 = vpack.c.b16 %v563, %v560
        %v657 = vpack.c.b16 %v564, %v561
        %v658 = vpack.c.b16 %v568, %v565
        %v659 = vpack.c.b16 %v569, %v566
        %v660 = vpack.c.b16 %v570, %v567
        %v661 = vpack.c.b16 %v574, %v571
        %v662 = vpack.c.b16 %v575, %v572
        %v663 = vpack.c.b16 %v576, %v573
        %v664 = vpack.c.b16 %v580, %v577
        %v665 = vpack.c.b16 %v581, %v578
        %v666 = vpack.c.b16 %v582, %v579
        %v667 = vpack.c.b16 %v586, %v583
        %v668 = vpack.c.b16 %v587, %v584
        %v669 = vpack.c.b16 %v588, %v585
        %v670 = vpack.c.b16 %v592, %v589
        %v671 = vpack.c.b16 %v593, %v590
        %v672 = vpack.c.b16 %v594, %v591
        %v673 = vpack.c.b16 %v598, %v595
        %v674 = vpack.c.b16 %v599, %v596
        %v675 = vpack.c.b16 %v600, %v597
        %v676 = vpack.c.b16 %v604, %v601
        %v677 = vpack.c.b16 %v605, %v602
        %v678 = vpack.c.b16 %v606, %v603
        %v679 = vpack.c.b16 %v610, %v607
        %v680 = vpack.c.b16 %v611, %v608
        %v681 = vpack.c.b16 %v612, %v609
        %v682 = vpack.c.b16 %v616, %v613
        %v683 = vpack.c.b16 %v617, %v614
        %v684 = vpack.c.b16 %v618, %v615
        %v685 = vpack.c.b16 %v622, %v619
        %v686 = vpack.c.b16 %v623, %v620
        %v687 = vpack.c.b16 %v624, %v621
        %v688 = vpack.c.b16 %v628, %v625
        %v689 = vpack.c.b16 %v629, %v626
        %v690 = vpack.c.b16 %v630, %v627
        %v691 = vpack.c.b16 %v634, %v631
        %v692 = vpack.c.b16 %v635, %v632
        %v693 = vpack.c.b16 %v636, %v633
        %v694 = vpack.c.b16 %v640, %v637
        %v695 = vpack.c.b16 %v641, %v638
        %v696 = vpack.c.b16 %v642, %v639
        %v697 = vpack.c.b16 %v646, %v643
        %v698 = vpack.c.b16 %v647, %v644
        %v699 = vpack.c.b16 %v648, %v645
        %v700 = vpack.c.b16 %v652, %v649
        %v701 = vpack.c.b16 %v653, %v650
        %v702 = vpack.c.b16 %v654, %v651
        %751 = vmatpush.bf16.msra.mxu0 %v676
        %752 = vmatpush.bf16.msra.mxu0 %v673
        %753 = vmatpush.bf16.msra.mxu0 %v670
        %754 = vmatpush.bf16.msra.mxu0 %v667
        %755 = vmatpush.bf16.msra.mxu0 %v664
        %756 = vmatpush.bf16.msra.mxu0 %v661
        %757 = vmatpush.bf16.msra.mxu0 %v658
        %758 = vmatpush.bf16.msra.mxu0 %v655
        %759 = vmatmul.bf16.gmra.mxu0 %v491
        %v760 = vpop.f32.mrf.mxu0
        %v761 = vadd.f32 %v479, %v760
        %v762 = vpop.f32.mrf.mxu0
        %v763 = vadd.f32 %v479, %v762
        %764 = vdwg.mxu0
        %765 = vmatpush.bf16.msra.mxu0 %v700
        %766 = vmatpush.bf16.msra.mxu0 %v697
        %767 = vmatpush.bf16.msra.mxu0 %v694
        %768 = vmatpush.bf16.msra.mxu0 %v691
        %769 = vmatpush.bf16.msra.mxu0 %v688
        %770 = vmatpush.bf16.msra.mxu0 %v685
        %771 = vmatpush.bf16.msra.mxu0 %v682
        %772 = vmatpush.bf16.msra.mxu0 %v679
        %773 = vmatmul.bf16.gmra.mxu0 %v492
        %v774 = vpop.f32.mrf.mxu0
        %v775 = vadd.f32 %v761, %v774
        %v776 = vpop.f32.mrf.mxu0
        %v777 = vadd.f32 %v763, %v776
        %778 = vdwg.mxu0
        %779 = vmatpush.bf16.msra.mxu0 %v677
        %780 = vmatpush.bf16.msra.mxu0 %v674
        %781 = vmatpush.bf16.msra.mxu0 %v671
        %782 = vmatpush.bf16.msra.mxu0 %v668
        %783 = vmatpush.bf16.msra.mxu0 %v665
        %784 = vmatpush.bf16.msra.mxu0 %v662
        %785 = vmatpush.bf16.msra.mxu0 %v659
        %786 = vmatpush.bf16.msra.mxu0 %v656
        %787 = vmatmul.bf16.gmra.mxu0 %v491
        %v788 = vpop.f32.mrf.mxu0
        %v789 = vadd.f32 %v480, %v788
        %v790 = vpop.f32.mrf.mxu0
        %v791 = vadd.f32 %v480, %v790
        %792 = vdwg.mxu0
        %793 = vmatpush.bf16.msra.mxu0 %v701
        %794 = vmatpush.bf16.msra.mxu0 %v698
        %795 = vmatpush.bf16.msra.mxu0 %v695
        %796 = vmatpush.bf16.msra.mxu0 %v692
        %797 = vmatpush.bf16.msra.mxu0 %v689
        %798 = vmatpush.bf16.msra.mxu0 %v686
        %799 = vmatpush.bf16.msra.mxu0 %v683
        %800 = vmatpush.bf16.msra.mxu0 %v680
        %801 = vmatmul.bf16.gmra.mxu0 %v492
        %v802 = vpop.f32.mrf.mxu0
        %v803 = vadd.f32 %v789, %v802
        %v804 = vpop.f32.mrf.mxu0
        %v805 = vadd.f32 %v791, %v804
        %806 = vdwg.mxu0
        %807 = vmatpush.bf16.msra.mxu0 %v678
        %808 = vmatpush.bf16.msra.mxu0 %v675
        %809 = vmatpush.bf16.msra.mxu0 %v672
        %810 = vmatpush.bf16.msra.mxu0 %v669
        %811 = vmatpush.bf16.msra.mxu0 %v666
        %812 = vmatpush.bf16.msra.mxu0 %v663
        %813 = vmatpush.bf16.msra.mxu0 %v660
        %814 = vmatpush.bf16.msra.mxu0 %v657
        %815 = vmatmul.bf16.gmra.mxu0 %v491
        %v816 = vpop.f32.mrf.mxu0
        %v817 = vadd.f32 %v481, %v816
        %v818 = vpop.f32.mrf.mxu0
        %v819 = vadd.f32 %v481, %v818
        %820 = vdwg.mxu0
        %821 = vmatpush.bf16.msra.mxu0 %v702
        %822 = vmatpush.bf16.msra.mxu0 %v699
        %823 = vmatpush.bf16.msra.mxu0 %v696
        %824 = vmatpush.bf16.msra.mxu0 %v693
        %825 = vmatpush.bf16.msra.mxu0 %v690
        %826 = vmatpush.bf16.msra.mxu0 %v687
        %827 = vmatpush.bf16.msra.mxu0 %v684
        %828 = vmatpush.bf16.msra.mxu0 %v681
        %829 = vmatmul.bf16.gmra.mxu0 %v492
        %v830 = vpop.f32.mrf.mxu0
        %v831 = vadd.f32 %v817, %v830
        %v832 = vpop.f32.mrf.mxu0
        %v833 = vadd.f32 %v819, %v832
        %834 = vdwg.mxu0
        %v835 = vpack.c.bf16 %v803, %v775
        %v836 = vpack.c.bf16 %v831, %v831
        %v837 = vpack.c.bf16 %v805, %v777
        %v838 = vpack.c.bf16 %v833, %v833
        %839 = vst [vmem:[%s316] sm:$0xff] %v835
        %840 = vst [vmem:[%s316 + $0x8] sm:$0xf] %v836
        %841 = vst [vmem:[%s316 + $0xc] sm:$0xff] %v837
        %842 = vst [vmem:[%s316 + $0x14] sm:$0xf] %v838
        %s843 = sand.u32 %s162, 1
        %s844 = sand.u32 %s162, 1
        %s845 = smul.addr %s844, 24
        %s846 = scalar_lea.vmem [#allocation8], %s845
        // Predicated region
        $region57: #{block_forward.5} parent=39 // pred_check
          %p847 = pneg %p172
        $region58: #{block_forward.5} parent=39 // pred_check_branch
          %849 = sbr.rel (%p847) target = $region60
        $region59: #{block_forward.5} parent=39 // pred_region
          %s850 = smul.u32 2, %s24
          %s851 = smul.u32 3, %s25
          %s852 = smul.addr %s850, 6
          %s853 = sadd.s32 %s851, %s852
          %s854 = smul.addr %s853, 4
          %s855 = scalar_lea.vmem %s5, %s854
          // Predicated region
          $region61: #{block_forward.5} parent=59 // pred_check
            _
          $region62: #{block_forward.5} parent=59 // pred_check_branch
            %857 = sbr.rel (0) target = $region64
          $region63: #{block_forward.5} parent=59 // pred_region
            // Predicated region
            $region65: #{block_forward.5} parent=63 // pred_check
              _
            $region66: #{block_forward.5} parent=63 // pred_check_branch
              %859 = sbr.rel (0) target = $region68
            $region67: #{block_forward.5} parent=63 // pred_region
              %s860 = scalar_lea.vmem %s846, 8 [#allocation8]
              %s861 = scalar_lea.vmem %s855, 8
              loop: start=0, step=1, limit=1
              $region69: #{block_forward.5} parent=67 // loop_pre_header
                _
              $region70: #{block_forward.5} parent=67 // loop_header
                %s863 = sphi 0, %s867
                %p864 = scmp.ge.s32.totalorder %s863, 1
                %s868 = sphi %s846, %s846
                %s869 = sphi %s855, %s855
              $region71: #{block_forward.5} parent=67 // loop_header_branch
                %866 = sbr.rel (%p864) target = $region75
              $region72: #{block_forward.5} parent=67 // loop_body
                %v870 = vld [vmem:[%s868] sm:$0xff]
                %871 = vst [vmem:[%s869] sm:$0xff] %v870
                %v872 = vld [vmem:[%s868 + $0xc] sm:$0xff]
                %873 = vst [vmem:[%s869 + $0x18] sm:$0xff] %v872
              $region73: #{block_forward.5} parent=67 // loop_footer
                %s867 = sadd.s32 1, %s863
              $region74: #{block_forward.5} parent=67 // loop_footer_branch
                %862 = sbr.rel target = $region70
              $region75: #{block_forward.5} parent=67 // loop_exit
                _
              %s875 = ssub.s32 16, 1
              loop: start=0, step=1, limit=1
              $region76: #{block_forward.5} parent=67 // loop_pre_header
                _
              $region77: #{block_forward.5} parent=67 // loop_header
                %s877 = sphi 0, %s881
                %p878 = scmp.ge.s32.totalorder %s877, 1
                %s882 = sphi %s860, %s860
                %s883 = sphi %s861, %s861
              $region78: #{block_forward.5} parent=67 // loop_header_branch
                %880 = sbr.rel (%p878) target = $region82
              $region79: #{block_forward.5} parent=67 // loop_body
                %v884 = vld [vmem:[%s882] sm:%s875]
                %885 = vst [vmem:[%s883] sm:%s875] %v884
                %v886 = vld [vmem:[%s882 + $0xc] sm:%s875]
                %887 = vst [vmem:[%s883 + $0x18] sm:%s875] %v886
              $region80: #{block_forward.5} parent=67 // loop_footer
                %s881 = sadd.s32 1, %s877
              $region81: #{block_forward.5} parent=67 // loop_footer_branch
                %876 = sbr.rel target = $region77
              $region82: #{block_forward.5} parent=67 // loop_exit
                _
            $region68: #{block_forward.5} parent=63 // pred_fallthru
              _
          $region64: #{block_forward.5} parent=59 // pred_fallthru
            _
          %888 = vnop
        $region60: #{block_forward.5} parent=39 // pred_fallthru
          _
      $region40: #{block_forward.5} parent=5 // pred_fallthru
        _
      %p889 = scmp.le.s32.totalorder 2, %s15
      // Predicated region
      $region83: #{block_forward.5} parent=5 // pred_check
        %p890 = pneg %p889
      $region84: #{block_forward.5} parent=5 // pred_check_branch
        %892 = sbr.rel (%p890) target = $region86
      $region85: #{block_forward.5} parent=5 // pred_region
        %s893 = ssub.s32 %s15, 2
        // Predicated region
        $region87: #{block_forward.5} parent=85 // pred_check
          %p894 = pneg %p178
        $region88: #{block_forward.5} parent=85 // pred_check_branch
          %896 = sbr.rel (%p894) target = $region90
        $region89: #{block_forward.5} parent=85 // pred_region
          %s897 = sand.u32 %s163, 1
          %s898 = sand.u32 %s163, 1
          %s899 = smul.addr %s898, 24
          %s900 = scalar_lea.vmem [#allocation8], %s899
        $region90: #{block_forward.5} parent=85 // pred_fallthru
          _
      $region86: #{block_forward.5} parent=5 // pred_fallthru
        _
    $region6: #{block_forward.5} parent=1 // loop_footer
      %s19 = sadd.s32 1, %s15
    $region7: #{block_forward.5} parent=1 // loop_footer_branch
      %14 = sbr.rel target = $region3
    $region8: #{block_forward.5} parent=1 // loop_exit
      _
    %901 = vsyncpa [#allocation4], 1
    %s902 = scalar_lea.sflag [#allocation4], 1
    %903 = vsyncpa %s902, 1
    %904 = vsyncpa [#allocation6], 1
    %s905 = scalar_lea.sflag [#allocation6], 1
    %906 = vsyncpa %s905, 1

// kernel: block_forward.9
$region0: #{block_forward.9}
  #allocation0 [shape = 'u32[]', space=smem, size = 0x4, offset = 0x4, fixed_abs, tag = 'smem constant byte address 0x4 - core index']
  #allocation1 [shape = 'u32[72,128]{1,0:T(1,128)}', space=vmem, size = 0x9000, scoped, tag = 'internal scratch']
  %s0 = inlined_call_operand.vmem [shape: bf16[16,1024], index: 0, kind: input, shape index: {}]
  %s1 = inlined_call_operand.hbm [shape: bf16[1024,256], index: 1, kind: input, shape index: {}]
  %s2 = inlined_call_operand.vmem [shape: f32[1,256], index: 2, kind: input, shape index: {}]
  %s3 = inlined_call_operand.vmem [shape: f32[1,256], index: 3, kind: input, shape index: {}]
  %s4 = inlined_call_operand.vmem [shape: f32[16,256], index: 4, kind: input, shape index: {}]
  %s5 = inlined_call_operand.hbm [shape: f32[16,256], index: 5, kind: output, shape index: {}]
  %s6 = sld [smem:[#allocation0]]
  $region88: #{block_forward.9} parent=0
    _
  %s8 = ssub.s32 1, %s6
  %s9 = scalar_select 0, %s8, %s6
  $region1: #{block_forward.9} parent=0
    #allocation2 [shape = 'u8[32768]{0}', space=vmem, size = 0x8000, scoped, tag = 'input window, operand 0']
    #allocation3 [shape = 'u8[524288]{0}', space=vmem, size = 0x80000, scoped, tag = 'input window, operand 1']
    #allocation4 [shape = 's32[2]{0}', space=sflag, size = 0x8, scoped, tag = 'scoped memory for block_forward.9']
    #allocation5 [shape = 's32[2]{0}', space=sflag, size = 0x8, scoped, tag = 'scoped memory for block_forward.9']
    #allocation6 [shape = 'u8[16384]{0}', space=vmem, size = 0x4000, scoped, tag = 'output window, operand 0, single buffered']
    %10 = vsyncpa [#allocation4], 0
    %s11 = scalar_lea.sflag [#allocation4], 1
    %12 = vsyncpa %s11, 0
    %13 = vsyncpa [#allocation5], 0
    loop: start=0, step=1, limit=4
    $region2: #{block_forward.9} parent=1 // loop_pre_header
      _
    $region3: #{block_forward.9} parent=1 // loop_header
      %s15 = sphi 0, %s19
      %p16 = scmp.ge.s32.totalorder %s15, 4
      %s22 = sphi 0, %s41
      %s23 = sphi 0, %s37
      %s24 = sphi 0, %s33
      %s25 = sphi 0, %s22
      %s26 = sphi 0, %s23
      %s27 = sphi 0, %s24
      %s28 = sphi 0, %s25
      %s29 = sphi 0, %s26
      %s30 = sphi 0, %s27
      %s46 = sphi 0, %s48
      %s49 = sphi 0, %s46
      %s50 = sphi 0, %s49
      %s66 = sphi 0, %s50
      %s74 = sphi 0, %s76
      %s77 = sphi 0, %s74
      %s78 = sphi 0, %s77
      %s94 = sphi 0, %s78
      %s100 = sphi 0, %s102
      %s103 = sphi 0, %s100
      %s104 = sphi 0, %s103
      %s120 = sphi 0, %s104
      %s126 = sphi 0, %s128
      %s129 = sphi 0, %s126
      %s130 = sphi 0, %s129
      %s146 = sphi 0, %s130
      %s154 = sphi 0, %s156
      %s157 = sphi 0, %s154
      %s158 = sphi 0, %s157
      %s174 = sphi 0, %s158
      %s182 = sphi 0, %s184
      %s185 = sphi 0, %s182
      %s186 = sphi 0, %s185
      %s202 = sphi 0, %s186
    $region4: #{block_forward.9} parent=1 // loop_header_branch
      %18 = sbr.rel (%p16) target = $region8
    $region5: #{block_forward.9} parent=1 // loop_body
      %s20 = ssub.s32 %s15, 1
      %s21 = ssub.s32 %s15, 2
      %s31 = sadd.s32 1, %s24
      %p32 = scmp.ge.s32.totalorder %s31, 2
      %s33 = scalar_select %p32, 0, %s31
      %s34 = sadd.s32 1, %s23
      %s35 = scalar_select %p32, %s34, %s23
      %p36 = scmp.ge.s32.totalorder %s35, 1
      %s37 = scalar_select %p36, 0, %s35
      %s38 = sadd.s32 1, %s22
      %s39 = scalar_select %p36, %s38, %s22
      %p40 = scmp.ge.s32.totalorder %s39, 1
      %s41 = scalar_select %p40, 0, %s39
      %s42 = ssub.s32 %s22, %s41
      %s43 = ssub.s32 %s24, %s33
      %s44 = sor.u32 %s42, %s43
      %p45 = scmp.eq.s32.totalorder %s44, 0
      %s47 = sadd.s32 %s46, 1
      %s48 = scalar_select %p45, %s46, %s47
      %p51 = pneg %p45
      %p52 = scmp.eq.s32.totalorder %s15, 1
      %p53 = por %p51, %p52
      %p54 = scmp.ne.s32.totalorder %s46, %s49
      %p55 = scmp.eq.s32.totalorder %s15, 0
      %p56 = por %p54, %p55
      %p57 = scmp.ne.s32.totalorder %s46, %s49
      %p58 = scmp.eq.s32.totalorder %s20, 1
      %p59 = por %p57, %p58
      %p60 = scmp.ne.s32.totalorder %s49, %s50
      %p61 = scmp.eq.s32.totalorder %s20, 0
      %p62 = por %p60, %p61
      %p63 = scmp.ne.s32.totalorder %s49, %s50
      %p64 = scmp.eq.s32.totalorder %s21, 1
      %p65 = por %p63, %p64
      %p67 = scmp.ne.s32.totalorder %s50, %s66
      %p68 = scmp.eq.s32.totalorder %s21, 0
      %p69 = por %p67, %p68
      %s70 = ssub.s32 %s24, %s33
      %s71 = ssub.s32 %s23, %s37
      %s72 = sor.u32 %s70, %s71
      %p73 = scmp.eq.s32.totalorder %s72, 0
      %s75 = sadd.s32 %s74, 1
      %s76 = scalar_select %p73, %s74, %s75
      %p79 = pneg %p73
      %p80 = scmp.eq.s32.totalorder %s15, 1
      %p81 = por %p79, %p80
      %p82 = scmp.ne.s32.totalorder %s74, %s77
      %p83 = scmp.eq.s32.totalorder %s15, 0
      %p84 = por %p82, %p83
      %p85 = scmp.ne.s32.totalorder %s74, %s77
      %p86 = scmp.eq.s32.totalorder %s20, 1
      %p87 = por %p85, %p86
      %p88 = scmp.ne.s32.totalorder %s77, %s78
      %p89 = scmp.eq.s32.totalorder %s20, 0
      %p90 = por %p88, %p89
      %p91 = scmp.ne.s32.totalorder %s77, %s78
      %p92 = scmp.eq.s32.totalorder %s21, 1
      %p93 = por %p91, %p92
      %p95 = scmp.ne.s32.totalorder %s78, %s94
      %p96 = scmp.eq.s32.totalorder %s21, 0
      %p97 = por %p95, %p96
      %s98 = ssub.s32 %s23, %s37
      %p99 = scmp.eq.s32.totalorder %s98, 0
      %s101 = sadd.s32 %s100, 1
      %s102 = scalar_select %p99, %s100, %s101
      %p105 = pneg %p99
      %p106 = scmp.eq.s32.totalorder %s15, 1
      %p107 = por %p105, %p106
      %p108 = scmp.ne.s32.totalorder %s100, %s103
      %p109 = scmp.eq.s32.totalorder %s15, 0
      %p110 = por %p108, %p109
      %p111 = scmp.ne.s32.totalorder %s100, %s103
      %p112 = scmp.eq.s32.totalorder %s20, 1
      %p113 = por %p111, %p112
      %p114 = scmp.ne.s32.totalorder %s103, %s104
      %p115 = scmp.eq.s32.totalorder %s20, 0
      %p116 = por %p114, %p115
      %p117 = scmp.ne.s32.totalorder %s103, %s104
      %p118 = scmp.eq.s32.totalorder %s21, 1
      %p119 = por %p117, %p118
      %p121 = scmp.ne.s32.totalorder %s104, %s120
      %p122 = scmp.eq.s32.totalorder %s21, 0
      %p123 = por %p121, %p122
      %s124 = ssub.s32 %s23, %s37
      %p125 = scmp.eq.s32.totalorder %s124, 0
      %s127 = sadd.s32 %s126, 1
      %s128 = scalar_select %p125, %s126, %s127
      %p131 = pneg %p125
      %p132 = scmp.eq.s32.totalorder %s15, 1
      %p133 = por %p131, %p132
      %p134 = scmp.ne.s32.totalorder %s126, %s129
      %p135 = scmp.eq.s32.totalorder %s15, 0
      %p136 = por %p134, %p135
      %p137 = scmp.ne.s32.totalorder %s126, %s129
      %p138 = scmp.eq.s32.totalorder %s20, 1
      %p139 = por %p137, %p138
      %p140 = scmp.ne.s32.totalorder %s129, %s130
      %p141 = scmp.eq.s32.totalorder %s20, 0
      %p142 = por %p140, %p141
      %p143 = scmp.ne.s32.totalorder %s129, %s130
      %p144 = scmp.eq.s32.totalorder %s21, 1
      %p145 = por %p143, %p144
      %p147 = scmp.ne.s32.totalorder %s130, %s146
      %p148 = scmp.eq.s32.totalorder %s21, 0
      %p149 = por %p147, %p148
      %s150 = ssub.s32 %s22, %s41
      %s151 = ssub.s32 %s23, %s37
      %s152 = sor.u32 %s150, %s151
      %p153 = scmp.eq.s32.totalorder %s152, 0
      %s155 = sadd.s32 %s154, 1
      %s156 = scalar_select %p153, %s154, %s155
      %p159 = pneg %p153
      %p160 = scmp.eq.s32.totalorder %s15, 1
      %p161 = por %p159, %p160
      %p162 = scmp.ne.s32.totalorder %s154, %s157
      %p163 = scmp.eq.s32.totalorder %s15, 0
      %p164 = por %p162, %p163
      %p165 = scmp.ne.s32.totalorder %s154, %s157
      %p166 = scmp.eq.s32.totalorder %s20, 1
      %p167 = por %p165, %p166
      %p168 = scmp.ne.s32.totalorder %s157, %s158
      %p169 = scmp.eq.s32.totalorder %s20, 0
      %p170 = por %p168, %p169
      %p171 = scmp.ne.s32.totalorder %s157, %s158
      %p172 = scmp.eq.s32.totalorder %s21, 1
      %p173 = por %p171, %p172
      %p175 = scmp.ne.s32.totalorder %s158, %s174
      %p176 = scmp.eq.s32.totalorder %s21, 0
      %p177 = por %p175, %p176
      %s178 = ssub.s32 %s22, %s41
      %s179 = ssub.s32 %s23, %s37
      %s180 = sor.u32 %s178, %s179
      %p181 = scmp.eq.s32.totalorder %s180, 0
      %s183 = sadd.s32 %s182, 1
      %s184 = scalar_select %p181, %s182, %s183
      %p187 = pneg %p181
      %p188 = scmp.eq.s32.totalorder %s15, 1
      %p189 = por %p187, %p188
      %p190 = scmp.ne.s32.totalorder %s182, %s185
      %p191 = scmp.eq.s32.totalorder %s15, 0
      %p192 = por %p190, %p191
      %p193 = scmp.ne.s32.totalorder %s182, %s185
      %p194 = scmp.eq.s32.totalorder %s20, 1
      %p195 = por %p193, %p194
      %p196 = scmp.ne.s32.totalorder %s185, %s186
      %p197 = scmp.eq.s32.totalorder %s20, 0
      %p198 = por %p196, %p197
      %p199 = scmp.ne.s32.totalorder %s185, %s186
      %p200 = scmp.eq.s32.totalorder %s21, 1
      %p201 = por %p199, %p200
      %p203 = scmp.ne.s32.totalorder %s186, %s202
      %p204 = scmp.eq.s32.totalorder %s21, 0
      %p205 = por %p203, %p204
      %p206 = scmp.le.s32.totalorder 1, %s15
      %p207 = scmp.lt.s32.totalorder %s15, 3
      %p208 = pnand %p206, %p207
      %p209 = pneg %p208
      // Predicated region
      $region9: #{block_forward.9} parent=5 // pred_check
        _
      $region10: #{block_forward.9} parent=5 // pred_check_branch
        %211 = sbr.rel (%p208) target = $region12
      $region11: #{block_forward.9} parent=5 // pred_region
        %s212 = ssub.s32 %s15, 1
        // Predicated region
        $region13: #{block_forward.9} parent=11 // pred_check
          %p213 = pneg %p116
        $region14: #{block_forward.9} parent=11 // pred_check_branch
          %215 = sbr.rel (%p213) target = $region16
        $region15: #{block_forward.9} parent=11 // pred_region
          %s216 = smul.u32 2, %s26
          %p217 = scmp.lt.s32.totalorder %s216, 1
          %s218 = scalar_select %p217, %s216, 1
          %s219 = scalar_lea.vmem %s2, %s218
          %s220 = smul.u32 2, %s26
        $region16: #{block_forward.9} parent=11 // pred_fallthru
          _
        // Predicated region
        $region17: #{block_forward.9} parent=11 // pred_check
          %p221 = pneg %p142
        $region18: #{block_forward.9} parent=11 // pred_check_branch
          %223 = sbr.rel (%p221) target = $region20
        $region19: #{block_forward.9} parent=11 // pred_region
          %s224 = smul.u32 2, %s26
          %p225 = scmp.lt.s32.totalorder %s224, 1
          %s226 = scalar_select %p225, %s224, 1
          %s227 = scalar_lea.vmem %s3, %s226
          %s228 = smul.u32 2, %s26
        $region20: #{block_forward.9} parent=11 // pred_fallthru
          _
        // Predicated region
        $region21: #{block_forward.9} parent=11 // pred_check
          %p229 = pneg %p170
        $region22: #{block_forward.9} parent=11 // pred_check_branch
          %231 = sbr.rel (%p229) target = $region24
        $region23: #{block_forward.9} parent=11 // pred_region
          %s232 = smul.u32 2, %s25
          %s233 = smul.u32 2, %s26
          %p234 = scmp.lt.s32.totalorder %s232, 1
          %s235 = scalar_select %p234, %s232, 1
          %p236 = scmp.lt.s32.totalorder %s233, 1
          %s237 = scalar_select %p236, %s233, 1
          %s238 = smul.addr %s235, 2
          %s239 = sadd.s32 %s237, %s238
          %s240 = smul.addr %s239, 8
          %s241 = scalar_lea.vmem %s4, %s240
          %s242 = smul.u32 2, %s25
          %s243 = smul.u32 2, %s26
        $region24: #{block_forward.9} parent=11 // pred_fallthru
          _
      $region12: #{block_forward.9} parent=5 // pred_fallthru
        _
      %p244 = scmp.lt.s32.totalorder %s15, 2
      // Predicated region
      $region25: #{block_forward.9} parent=5 // pred_check
        %p245 = pneg %p244
      $region26: #{block_forward.9} parent=5 // pred_check_branch
        %247 = sbr.rel (%p245) target = $region28
      $region27: #{block_forward.9} parent=5 // pred_region
        // Predicated region
        $region29: #{block_forward.9} parent=27 // pred_check
          %p248 = pneg %p56
        $region30: #{block_forward.9} parent=27 // pred_check_branch
          %250 = sbr.rel (%p248) target = $region32
        $region31: #{block_forward.9} parent=27 // pred_region
          %s251 = sand.u32 %s46, 1
          %s252 = sand.u32 %s46, 1
          %s253 = smul.addr %s252, 32
          %s254 = scalar_lea.vmem [#allocation2], %s253
          %s255 = smul.u32 2, %s22
          %s256 = smul.u32 4, %s24
          %s257 = smul.addr %s255, 8
          %s258 = sadd.s32 %s256, %s257
          %s259 = smul.addr %s258, 4
          %s260 = scalar_lea.vmem %s0, %s259
          // Predicated region
          $region33: #{block_forward.9} parent=31 // pred_check
            _
          $region34: #{block_forward.9} parent=31 // pred_check_branch
            %262 = sbr.rel (0) target = $region36
          $region35: #{block_forward.9} parent=31 // pred_region
            // Predicated region
            $region37: #{block_forward.9} parent=35 // pred_check
              _
            $region38: #{block_forward.9} parent=35 // pred_check_branch
              %264 = sbr.rel (0) target = $region40
            $region39: #{block_forward.9} parent=35 // pred_region
              loop: start=0, step=1, limit=1
              $region41: #{block_forward.9} parent=39 // loop_pre_header
                _
              $region42: #{block_forward.9} parent=39 // loop_header
                %s266 = sphi 0, %s270
                %p267 = scmp.ge.s32.totalorder %s266, 1
                %s271 = sphi %s260, %s260
                %s272 = sphi %s254, %s254
              $region43: #{block_forward.9} parent=39 // loop_header_branch
                %269 = sbr.rel (%p267) target = $region47
              $region44: #{block_forward.9} parent=39 // loop_body
                %v273 = vld [vmem:[%s271] sm:$0xff]
                %274 = vst [vmem:[%s272] sm:$0xff] %v273
                %v275 = vld [vmem:[%s271 + $0x8] sm:$0xff]
                %276 = vst [vmem:[%s272 + $0x8] sm:$0xff] %v275
                %v277 = vld [vmem:[%s271 + $0x20] sm:$0xff]
                %278 = vst [vmem:[%s272 + $0x10] sm:$0xff] %v277
                %v279 = vld [vmem:[%s271 + $0x28] sm:$0xff]
                %280 = vst [vmem:[%s272 + $0x18] sm:$0xff] %v279
              $region45: #{block_forward.9} parent=39 // loop_footer
                %s270 = sadd.s32 1, %s266
              $region46: #{block_forward.9} parent=39 // loop_footer_branch
                %265 = sbr.rel target = $region42
              $region47: #{block_forward.9} parent=39 // loop_exit
                _
            $region40: #{block_forward.9} parent=35 // pred_fallthru
              _
            // Predicated region
            $region48: #{block_forward.9} parent=35 // pred_check
              _
            $region49: #{block_forward.9} parent=35 // pred_check_branch
              %282 = sbr.rel target = $region51
            $region50: #{block_forward.9} parent=35 // pred_region
              _
            $region51: #{block_forward.9} parent=35 // pred_fallthru
              _
          $region36: #{block_forward.9} parent=31 // pred_fallthru
            _
          %283 = vnop
        $region32: #{block_forward.9} parent=27 // pred_fallthru
          _
        // Predicated region
        $region52: #{block_forward.9} parent=27 // pred_check
          %p284 = pneg %p84
        $region53: #{block_forward.9} parent=27 // pred_check_branch
          %286 = sbr.rel (%p284) target = $region55
        $region54: #{block_forward.9} parent=27 // pred_region
          %s287 = sand.u32 %s74, 1
          %s288 = scalar_lea.sflag [#allocation4], %s287
          %s289 = sand.u32 %s74, 1
          %s290 = smul.addr %s289, 512
          %s291 = scalar_lea.vmem [#allocation3], %s290
          %s292 = smul.u32 64, %s24
          %s293 = smul.u32 2, %s23
          %295 = vsyncadd %s288, 0
          %s296 = smul.addr %s292, 2
          %s297 = sadd.s32 %s293, %s296
          %s298 = smul.addr %s297, 4
          %s299 = scalar_lea.hbm %s1, %s298
          %s300 = sshll.u32 %s299, 4
          %s301 = int_to_ptr.hbm [resolvable:$true] %s300
          %s302 = sshll.u32 %s291, 4
          %s303 = int_to_ptr.vmem [resolvable:$true] %s302
          %308 = dma.hbm_to_vmem [thread:$0]  %s301, 8192, %s303, %s288, 128, 128, 8
        $region55: #{block_forward.9} parent=27 // pred_fallthru
          _
      $region28: #{block_forward.9} parent=5 // pred_fallthru
        _
      %p309 = scmp.le.s32.totalorder 1, %s15
      %p310 = scmp.lt.s32.totalorder %s15, 3
      %p311 = pnand %p309, %p310
      %p312 = pneg %p311
      // Predicated region
      $region56: #{block_forward.9} parent=5 // pred_check
        _
      $region57: #{block_forward.9} parent=5 // pred_check_branch
        %314 = sbr.rel (%p311) target = $region59
      $region58: #{block_forward.9} parent=5 // pred_region
        %s315 = ssub.s32 %s15, 1
        %s316 = sand.u32 %s49, 1
        %s317 = sand.u32 %s49, 1
        %s318 = smul.addr %s317, 32
        %s319 = scalar_lea.vmem [#allocation2], %s318
        // Predicated region
        $region60: #{block_forward.9} parent=58 // pred_check
          %p320 = pneg %p62
        $region61: #{block_forward.9} parent=58 // pred_check_branch
          %322 = sbr.rel (%p320) target = $region63
        $region62: #{block_forward.9} parent=58 // pred_region
          _
        $region63: #{block_forward.9} parent=58 // pred_fallthru
          _
        %s323 = sand.u32 %s77, 1
        %s324 = scalar_lea.sflag [#allocation4], %s323
        %s325 = sand.u32 %s77, 1
        %s326 = smul.addr %s325, 512
        %s327 = scalar_lea.vmem [#allocation3], %s326
        // Predicated region
        $region64: #{block_forward.9} parent=58 // pred_check
          %p328 = pneg %p90
        $region65: #{block_forward.9} parent=58 // pred_check_branch
          %330 = sbr.rel (%p328) target = $region67
        $region66: #{block_forward.9} parent=58 // pred_region
          %332 = dma.done %s324, 8192
        $region67: #{block_forward.9} parent=58 // pred_fallthru
          _
        %s333 = sand.u32 %s49, 1
        %s334 = sand.u32 %s49, 1
        %s335 = smul.addr %s334, 32
        %s336 = scalar_lea.vmem [#allocation2], %s335
        %p337 = pneg %p62
        %p338 = pneg %p59
        %s339 = sand.u32 %s77, 1
        %s340 = scalar_lea.sflag [#allocation4], %s339
        %s341 = sand.u32 %s77, 1
        %s342 = smul.addr %s341, 512
        %s343 = scalar_lea.vmem [#allocation3], %s342
        %p344 = pneg %p90
        %p345 = pneg %p87
        %s346 = smul.u32 2, %s26
        %p347 = scmp.lt.s32.totalorder %s346, 1
        %s348 = scalar_select %p347, %s346, 1
        %s349 = scalar_lea.vmem %s2, %s348
        %p350 = pneg %p116
        %p351 = pneg %p113
        %s352 = smul.u32 2, %s26
        %p353 = scmp.lt.s32.totalorder %s352, 1
        %s354 = scalar_select %p353, %s352, 1
        %s355 = scalar_lea.vmem %s3, %s354
        %p356 = pneg %p142
        %p357 = pneg %p139
        %s358 = smul.u32 2, %s25
        %s359 = smul.u32 2, %s26
        %p360 = scmp.lt.s32.totalorder %s358, 1
        %s361 = scalar_select %p360, %s358, 1
        %p362 = scmp.lt.s32.totalorder %s359, 1
        %s363 = scalar_select %p362, %s359, 1
        %s364 = smul.addr %s361, 2
        %s365 = sadd.s32 %s363, %s364
        %s366 = smul.addr %s365, 8
        %s367 = scalar_lea.vmem %s4, %s366
        %p368 = pneg %p170
        %p369 = pneg %p167
        %p370 = pneg %p198
        %p371 = pneg %p195
        %s372 = smul.u32 2, %s25
        %s373 = smul.u32 4, %s27
        %s374 = smul.u32 64, %s27
        %s375 = smul.u32 2, %s26
        %s376 = smul.u32 2, %s26
        %p377 = scmp.lt.s32.totalorder %s376, 1
        %s378 = scalar_select %p377, %s376, 1
        %s379 = scalar_lea.vmem %s2, %s378
        %s380 = smul.u32 2, %s26
        %s381 = smul.u32 2, %s26
        %p382 = scmp.lt.s32.totalorder %s381, 1
        %s383 = scalar_select %p382, %s381, 1
        %s384 = scalar_lea.vmem %s3, %s383
        %s385 = smul.u32 2, %s26
        %s386 = smul.u32 2, %s25
        %s387 = smul.u32 2, %s26
        %p388 = scmp.lt.s32.totalorder %s386, 1
        %s389 = scalar_select %p388, %s386, 1
        %p390 = scmp.lt.s32.totalorder %s387, 1
        %s391 = scalar_select %p390, %s387, 1
        %s392 = smul.addr %s389, 2
        %s393 = sadd.s32 %s391, %s392
        %s394 = smul.addr %s393, 8
        %s395 = scalar_lea.vmem %s4, %s394
        %s396 = smul.u32 2, %s25
        %s397 = smul.u32 2, %s26
        %s398 = smul.u32 2, %s25
        %s399 = smul.u32 2, %s26
        %p400 = scmp.eq.s32.totalorder %s27, 0
        // Predicated region
        $region68: #{block_forward.9} parent=58 // pred_check
          %p401 = pneg %p400
        $region69: #{block_forward.9} parent=58 // pred_check_branch
          %403 = sbr.rel (%p401) target = $region71
        $region70: #{block_forward.9} parent=58 // pred_region
          %404 = vst [vmem:[#allocation6] sm:$0xff] 0.0
          %405 = vst [vmem:[#allocation6 + $0x8] sm:$0xff] 0.0
          %406 = vst [vmem:[#allocation6 + $0x10] sm:$0xff] 0.0
          %407 = vst [vmem:[#allocation6 + $0x18] sm:$0xff] 0.0
        $region71: #{block_forward.9} parent=58 // pred_fallthru
          _
        %v408 = vld [vmem:[#allocation6] sm:$0xff]
        %v409 = vld [vmem:[#allocation6 + $0x8] sm:$0xff]
        %v410 = vld [vmem:[#allocation6 + $0x10] sm:$0xff]
        %v411 = vld [vmem:[#allocation6 + $0x18] sm:$0xff]
        %v412 = vld [vmem:[%s319] sm:$0xff]
        %v413 = vld [vmem:[%s319 + $0x8] sm:$0xff]
        %v414 = vld [vmem:[%s319 + $0x10] sm:$0xff]
        %v415 = vld [vmem:[%s319 + $0x18] sm:$0xff]
        %v416 = vld [vmem:[%s327] sm:$0xff]
        %v417 = vld [vmem:[%s327 + $0x8] sm:$0xff]
        %v418 = vld [vmem:[%s327 + $0x10] sm:$0xff]
        %v419 = vld [vmem:[%s327 + $0x18] sm:$0xff]
        %v420 = vld [vmem:[%s327 + $0x20] sm:$0xff]
        %v421 = vld [vmem:[%s327 + $0x28] sm:$0xff]
        %v422 = vld [vmem:[%s327 + $0x30] sm:$0xff]
        %v423 = vld [vmem:[%s327 + $0x38] sm:$0xff]
        %v424 = vld [vmem:[%s327 + $0x40] sm:$0xff]
        %v425 = vld [vmem:[%s327 + $0x48] sm:$0xff]
        %v426 = vld [vmem:[%s327 + $0x50] sm:$0xff]
        %v427 = vld [vmem:[%s327 + $0x58] sm:$0xff]
        %v428 = vld [vmem:[%s327 + $0x60] sm:$0xff]
        %v429 = vld [vmem:[%s327 + $0x68] sm:$0xff]
        %v430 = vld [vmem:[%s327 + $0x70] sm:$0xff]
        %v431 = vld [vmem:[%s327 + $0x78] sm:$0xff]
        %v432 = vld [vmem:[%s327 + $0x80] sm:$0xff]
        %v433 = vld [vmem:[%s327 + $0x88] sm:$0xff]
        %v434 = vld [vmem:[%s327 + $0x90] sm:$0xff]
        %v435 = vld [vmem:[%s327 + $0x98] sm:$0xff]
        %v436 = vld [vmem:[%s327 + $0xa0] sm:$0xff]
        %v437 = vld [vmem:[%s327 + $0xa8] sm:$0xff]
        %v438 = vld [vmem:[%s327 + $0xb0] sm:$0xff]
        %v439 = vld [vmem:[%s327 + $0xb8] sm:$0xff]
        %v440 = vld [vmem:[%s327 + $0xc0] sm:$0xff]
        %v441 = vld [vmem:[%s327 + $0xc8] sm:$0xff]
        %v442 = vld [vmem:[%s327 + $0xd0] sm:$0xff]
        %v443 = vld [vmem:[%s327 + $0xd8] sm:$0xff]
        %v444 = vld [vmem:[%s327 + $0xe0] sm:$0xff]
        %v445 = vld [vmem:[%s327 + $0xe8] sm:$0xff]
        %v446 = vld [vmem:[%s327 + $0xf0] sm:$0xff]
        %v447 = vld [vmem:[%s327 + $0xf8] sm:$0xff]
        %v448 = vld [vmem:[%s327 + $0x100] sm:$0xff]
        %v449 = vld [vmem:[%s327 + $0x108] sm:$0xff]
        %v450 = vld [vmem:[%s327 + $0x110] sm:$0xff]
        %v451 = vld [vmem:[%s327 + $0x118] sm:$0xff]
        %v452 = vld [vmem:[%s327 + $0x120] sm:$0xff]
        %v453 = vld [vmem:[%s327 + $0x128] sm:$0xff]
        %v454 = vld [vmem:[%s327 + $0x130] sm:$0xff]
        %v455 = vld [vmem:[%s327 + $0x138] sm:$0xff]
        %v456 = vld [vmem:[%s327 + $0x140] sm:$0xff]
        %v457 = vld [vmem:[%s327 + $0x148] sm:$0xff]
        %v458 = vld [vmem:[%s327 + $0x150] sm:$0xff]
        %v459 = vld [vmem:[%s327 + $0x158] sm:$0xff]
        %v460 = vld [vmem:[%s327 + $0x160] sm:$0xff]
        %v461 = vld [vmem:[%s327 + $0x168] sm:$0xff]
        %v462 = vld [vmem:[%s327 + $0x170] sm:$0xff]
        %v463 = vld [vmem:[%s327 + $0x178] sm:$0xff]
        %v464 = vld [vmem:[%s327 + $0x180] sm:$0xff]
        %v465 = vld [vmem:[%s327 + $0x188] sm:$0xff]
        %v466 = vld [vmem:[%s327 + $0x190] sm:$0xff]
        %v467 = vld [vmem:[%s327 + $0x198] sm:$0xff]
        %v468 = vld [vmem:[%s327 + $0x1a0] sm:$0xff]
        %v469 = vld [vmem:[%s327 + $0x1a8] sm:$0xff]
        %v470 = vld [vmem:[%s327 + $0x1b0] sm:$0xff]
        %v471 = vld [vmem:[%s327 + $0x1b8] sm:$0xff]
        %v472 = vld [vmem:[%s327 + $0x1c0] sm:$0xff]
        %v473 = vld [vmem:[%s327 + $0x1c8] sm:$0xff]
        %v474 = vld [vmem:[%s327 + $0x1d0] sm:$0xff]
        %v475 = vld [vmem:[%s327 + $0x1d8] sm:$0xff]
        %v476 = vld [vmem:[%s327 + $0x1e0] sm:$0xff]
        %v477 = vld [vmem:[%s327 + $0x1e8] sm:$0xff]
        %v478 = vld [vmem:[%s327 + $0x1f0] sm:$0xff]
        %v479 = vld [vmem:[%s327 + $0x1f8] sm:$0xff]
        %v484 = vunpack.c.l.b16 %v412
        %v485 = vunpack.c.h.b16 %v412
        %v486 = vunpack.c.l.b16 %v413
        %v487 = vunpack.c.h.b16 %v413
        %v488 = vunpack.c.l.b16 %v414
        %v489 = vunpack.c.h.b16 %v414
        %v490 = vunpack.c.l.b16 %v415
        %v491 = vunpack.c.h.b16 %v415
        %v492 = vpack.c.b16 %v488, %v484
        %v493 = vpack.c.b16 %v489, %v485
        %v494 = vpack.c.b16 %v490, %v486
        %v495 = vpack.c.b16 %v491, %v487
        %v564 = vunpack.c.l.b16 %v416
        %v565 = vunpack.c.h.b16 %v416
        %v566 = vunpack.c.l.b16 %v417
        %v567 = vunpack.c.h.b16 %v417
        %v568 = vunpack.c.l.b16 %v418
        %v569 = vunpack.c.h.b16 %v418
        %v570 = vunpack.c.l.b16 %v419
        %v571 = vunpack.c.h.b16 %v419
        %v572 = vunpack.c.l.b16 %v420
        %v573 = vunpack.c.h.b16 %v420
        %v574 = vunpack.c.l.b16 %v421
        %v575 = vunpack.c.h.b16 %v421
        %v576 = vunpack.c.l.b16 %v422
        %v577 = vunpack.c.h.b16 %v422
        %v578 = vunpack.c.l.b16 %v423
        %v579 = vunpack.c.h.b16 %v423
        %v580 = vunpack.c.l.b16 %v424
        %v581 = vunpack.c.h.b16 %v424
        %v582 = vunpack.c.l.b16 %v425
        %v583 = vunpack.c.h.b16 %v425
        %v584 = vunpack.c.l.b16 %v426
        %v585 = vunpack.c.h.b16 %v426
        %v586 = vunpack.c.l.b16 %v427
        %v587 = vunpack.c.h.b16 %v427
        %v588 = vunpack.c.l.b16 %v428
        %v589 = vunpack.c.h.b16 %v428
        %v590 = vunpack.c.l.b16 %v429
        %v591 = vunpack.c.h.b16 %v429
        %v592 = vunpack.c.l.b16 %v430
        %v593 = vunpack.c.h.b16 %v430
        %v594 = vunpack.c.l.b16 %v431
        %v595 = vunpack.c.h.b16 %v431
        %v596 = vunpack.c.l.b16 %v432
        %v597 = vunpack.c.h.b16 %v432
        %v598 = vunpack.c.l.b16 %v433
        %v599 = vunpack.c.h.b16 %v433
        %v600 = vunpack.c.l.b16 %v434
        %v601 = vunpack.c.h.b16 %v434
        %v602 = vunpack.c.l.b16 %v435
        %v603 = vunpack.c.h.b16 %v435
        %v604 = vunpack.c.l.b16 %v436
        %v605 = vunpack.c.h.b16 %v436
        %v606 = vunpack.c.l.b16 %v437
        %v607 = vunpack.c.h.b16 %v437
        %v608 = vunpack.c.l.b16 %v438
        %v609 = vunpack.c.h.b16 %v438
        %v610 = vunpack.c.l.b16 %v439
        %v611 = vunpack.c.h.b16 %v439
        %v612 = vunpack.c.l.b16 %v440
        %v613 = vunpack.c.h.b16 %v440
        %v614 = vunpack.c.l.b16 %v441
        %v615 = vunpack.c.h.b16 %v441
        %v616 = vunpack.c.l.b16 %v442
        %v617 = vunpack.c.h.b16 %v442
        %v618 = vunpack.c.l.b16 %v443
        %v619 = vunpack.c.h.b16 %v443
        %v620 = vunpack.c.l.b16 %v444
        %v621 = vunpack.c.h.b16 %v444
        %v622 = vunpack.c.l.b16 %v445
        %v623 = vunpack.c.h.b16 %v445
        %v624 = vunpack.c.l.b16 %v446
        %v625 = vunpack.c.h.b16 %v446
        %v626 = vunpack.c.l.b16 %v447
        %v627 = vunpack.c.h.b16 %v447
        %v628 = vunpack.c.l.b16 %v448
        %v629 = vunpack.c.h.b16 %v448
        %v630 = vunpack.c.l.b16 %v449
        %v631 = vunpack.c.h.b16 %v449
        %v632 = vunpack.c.l.b16 %v450
        %v633 = vunpack.c.h.b16 %v450
        %v634 = vunpack.c.l.b16 %v451
        %v635 = vunpack.c.h.b16 %v451
        %v636 = vunpack.c.l.b16 %v452
        %v637 = vunpack.c.h.b16 %v452
        %v638 = vunpack.c.l.b16 %v453
        %v639 = vunpack.c.h.b16 %v453
        %v640 = vunpack.c.l.b16 %v454
        %v641 = vunpack.c.h.b16 %v454
        %v642 = vunpack.c.l.b16 %v455
        %v643 = vunpack.c.h.b16 %v455
        %v644 = vunpack.c.l.b16 %v456
        %v645 = vunpack.c.h.b16 %v456
        %v646 = vunpack.c.l.b16 %v457
        %v647 = vunpack.c.h.b16 %v457
        %v648 = vunpack.c.l.b16 %v458
        %v649 = vunpack.c.h.b16 %v458
        %v650 = vunpack.c.l.b16 %v459
        %v651 = vunpack.c.h.b16 %v459
        %v652 = vunpack.c.l.b16 %v460
        %v653 = vunpack.c.h.b16 %v460
        %v654 = vunpack.c.l.b16 %v461
        %v655 = vunpack.c.h.b16 %v461
        %v656 = vunpack.c.l.b16 %v462
        %v657 = vunpack.c.h.b16 %v462
        %v658 = vunpack.c.l.b16 %v463
        %v659 = vunpack.c.h.b16 %v463
        %v660 = vunpack.c.l.b16 %v464
        %v661 = vunpack.c.h.b16 %v464
        %v662 = vunpack.c.l.b16 %v465
        %v663 = vunpack.c.h.b16 %v465
        %v664 = vunpack.c.l.b16 %v466
        %v665 = vunpack.c.h.b16 %v466
        %v666 = vunpack.c.l.b16 %v467
        %v667 = vunpack.c.h.b16 %v467
        %v668 = vunpack.c.l.b16 %v468
        %v669 = vunpack.c.h.b16 %v468
        %v670 = vunpack.c.l.b16 %v469
        %v671 = vunpack.c.h.b16 %v469
        %v672 = vunpack.c.l.b16 %v470
        %v673 = vunpack.c.h.b16 %v470
        %v674 = vunpack.c.l.b16 %v471
        %v675 = vunpack.c.h.b16 %v471
        %v676 = vunpack.c.l.b16 %v472
        %v677 = vunpack.c.h.b16 %v472
        %v678 = vunpack.c.l.b16 %v473
        %v679 = vunpack.c.h.b16 %v473
        %v680 = vunpack.c.l.b16 %v474
        %v681 = vunpack.c.h.b16 %v474
        %v682 = vunpack.c.l.b16 %v475
        %v683 = vunpack.c.h.b16 %v475
        %v684 = vunpack.c.l.b16 %v476
        %v685 = vunpack.c.h.b16 %v476
        %v686 = vunpack.c.l.b16 %v477
        %v687 = vunpack.c.h.b16 %v477
        %v688 = vunpack.c.l.b16 %v478
        %v689 = vunpack.c.h.b16 %v478
        %v690 = vunpack.c.l.b16 %v479
        %v691 = vunpack.c.h.b16 %v479
        %v692 = vpack.c.b16 %v566, %v564
        %v693 = vpack.c.b16 %v567, %v565
        %v694 = vpack.c.b16 %v570, %v568
        %v695 = vpack.c.b16 %v571, %v569
        %v696 = vpack.c.b16 %v574, %v572
        %v697 = vpack.c.b16 %v575, %v573
        %v698 = vpack.c.b16 %v578, %v576
        %v699 = vpack.c.b16 %v579, %v577
        %v700 = vpack.c.b16 %v582, %v580
        %v701 = vpack.c.b16 %v583, %v581
        %v702 = vpack.c.b16 %v586, %v584
        %v703 = vpack.c.b16 %v587, %v585
        %v704 = vpack.c.b16 %v590, %v588
        %v705 = vpack.c.b16 %v591, %v589
        %v706 = vpack.c.b16 %v594, %v592
        %v707 = vpack.c.b16 %v595, %v593
        %v708 = vpack.c.b16 %v598, %v596
        %v709 = vpack.c.b16 %v599, %v597
        %v710 = vpack.c.b16 %v602, %v600
        %v711 = vpack.c.b16 %v603, %v601
        %v712 = vpack.c.b16 %v606, %v604
        %v713 = vpack.c.b16 %v607, %v605
        %v714 = vpack.c.b16 %v610, %v608
        %v715 = vpack.c.b16 %v611, %v609
        %v716 = vpack.c.b16 %v614, %v612
        %v717 = vpack.c.b16 %v615, %v613
        %v718 = vpack.c.b16 %v618, %v616
        %v719 = vpack.c.b16 %v619, %v617
        %v720 = vpack.c.b16 %v622, %v620
        %v721 = vpack.c.b16 %v623, %v621
        %v722 = vpack.c.b16 %v626, %v624
        %v723 = vpack.c.b16 %v627, %v625
        %v724 = vpack.c.b16 %v630, %v628
        %v725 = vpack.c.b16 %v631, %v629
        %v726 = vpack.c.b16 %v634, %v632
        %v727 = vpack.c.b16 %v635, %v633
        %v728 = vpack.c.b16 %v638, %v636
        %v729 = vpack.c.b16 %v639, %v637
        %v730 = vpack.c.b16 %v642, %v640
        %v731 = vpack.c.b16 %v643, %v641
        %v732 = vpack.c.b16 %v646, %v644
        %v733 = vpack.c.b16 %v647, %v645
        %v734 = vpack.c.b16 %v650, %v648
        %v735 = vpack.c.b16 %v651, %v649
        %v736 = vpack.c.b16 %v654, %v652
        %v737 = vpack.c.b16 %v655, %v653
        %v738 = vpack.c.b16 %v658, %v656
        %v739 = vpack.c.b16 %v659, %v657
        %v740 = vpack.c.b16 %v662, %v660
        %v741 = vpack.c.b16 %v663, %v661
        %v742 = vpack.c.b16 %v666, %v664
        %v743 = vpack.c.b16 %v667, %v665
        %v744 = vpack.c.b16 %v670, %v668
        %v745 = vpack.c.b16 %v671, %v669
        %v746 = vpack.c.b16 %v674, %v672
        %v747 = vpack.c.b16 %v675, %v673
        %v748 = vpack.c.b16 %v678, %v676
        %v749 = vpack.c.b16 %v679, %v677
        %v750 = vpack.c.b16 %v682, %v680
        %v751 = vpack.c.b16 %v683, %v681
        %v752 = vpack.c.b16 %v686, %v684
        %v753 = vpack.c.b16 %v687, %v685
        %v754 = vpack.c.b16 %v690, %v688
        %v755 = vpack.c.b16 %v691, %v689
        %820 = vmatpush.bf16.msra.mxu0 %v706
        %821 = vmatpush.bf16.msra.mxu0 %v704
        %822 = vmatpush.bf16.msra.mxu0 %v702
        %823 = vmatpush.bf16.msra.mxu0 %v700
        %824 = vmatpush.bf16.msra.mxu0 %v698
        %825 = vmatpush.bf16.msra.mxu0 %v696
        %826 = vmatpush.bf16.msra.mxu0 %v694
        %827 = vmatpush.bf16.msra.mxu0 %v692
        %828 = vmatmul.bf16.gmra.mxu0 %v492
        %v829 = vpop.f32.mrf.mxu0
        %v830 = vadd.f32 0.0, %v829
        %v831 = vpop.f32.mrf.mxu0
        %v832 = vadd.f32 0.0, %v831
        %833 = vdwg.mxu0
        %834 = vmatpush.bf16.msra.mxu0 %v722
        %835 = vmatpush.bf16.msra.mxu0 %v720
        %836 = vmatpush.bf16.msra.mxu0 %v718
        %837 = vmatpush.bf16.msra.mxu0 %v716
        %838 = vmatpush.bf16.msra.mxu0 %v714
        %839 = vmatpush.bf16.msra.mxu0 %v712
        %840 = vmatpush.bf16.msra.mxu0 %v710
        %841 = vmatpush.bf16.msra.mxu0 %v708
        %842 = vmatmul.bf16.gmra.mxu0 %v493
        %v843 = vpop.f32.mrf.mxu0
        %v844 = vadd.f32 %v830, %v843
        %v845 = vpop.f32.mrf.mxu0
        %v846 = vadd.f32 %v832, %v845
        %847 = vdwg.mxu0
        %848 = vmatpush.bf16.msra.mxu0 %v738
        %849 = vmatpush.bf16.msra.mxu0 %v736
        %850 = vmatpush.bf16.msra.mxu0 %v734
        %851 = vmatpush.bf16.msra.mxu0 %v732
        %852 = vmatpush.bf16.msra.mxu0 %v730
        %853 = vmatpush.bf16.msra.mxu0 %v728
        %854 = vmatpush.bf16.msra.mxu0 %v726
        %855 = vmatpush.bf16.msra.mxu0 %v724
        %856 = vmatmul.bf16.gmra.mxu0 %v494
        %v857 = vpop.f32.mrf.mxu0
        %v858 = vadd.f32 %v844, %v857
        %v859 = vpop.f32.mrf.mxu0
        %v860 = vadd.f32 %v846, %v859
        %861 = vdwg.mxu0
        %862 = vmatpush.bf16.msra.mxu0 %v754
        %863 = vmatpush.bf16.msra.mxu0 %v752
        %864 = vmatpush.bf16.msra.mxu0 %v750
        %865 = vmatpush.bf16.msra.mxu0 %v748
        %866 = vmatpush.bf16.msra.mxu0 %v746
        %867 = vmatpush.bf16.msra.mxu0 %v744
        %868 = vmatpush.bf16.msra.mxu0 %v742
        %869 = vmatpush.bf16.msra.mxu0 %v740
        %870 = vmatmul.bf16.gmra.mxu0 %v495
        %v871 = vpop.f32.mrf.mxu0
        %v872 = vadd.f32 %v858, %v871
        %v873 = vpop.f32.mrf.mxu0
        %v874 = vadd.f32 %v860, %v873
        %875 = vdwg.mxu0
        %876 = vmatpush.bf16.msra.mxu0 %v707
        %877 = vmatpush.bf16.msra.mxu0 %v705
        %878 = vmatpush.bf16.msra.mxu0 %v703
        %879 = vmatpush.bf16.msra.mxu0 %v701
        %880 = vmatpush.bf16.msra.mxu0 %v699
        %881 = vmatpush.bf16.msra.mxu0 %v697
        %882 = vmatpush.bf16.msra.mxu0 %v695
        %883 = vmatpush.bf16.msra.mxu0 %v693
        %884 = vmatmul.bf16.gmra.mxu0 %v492
        %v885 = vpop.f32.mrf.mxu0
        %v886 = vadd.f32 0.0, %v885
        %v887 = vpop.f32.mrf.mxu0
        %v888 = vadd.f32 0.0, %v887
        %889 = vdwg.mxu0
        %890 = vmatpush.bf16.msra.mxu0 %v723
        %891 = vmatpush.bf16.msra.mxu0 %v721
        %892 = vmatpush.bf16.msra.mxu0 %v719
        %893 = vmatpush.bf16.msra.mxu0 %v717
        %894 = vmatpush.bf16.msra.mxu0 %v715
        %895 = vmatpush.bf16.msra.mxu0 %v713
        %896 = vmatpush.bf16.msra.mxu0 %v711
        %897 = vmatpush.bf16.msra.mxu0 %v709
        %898 = vmatmul.bf16.gmra.mxu0 %v493
        %v899 = vpop.f32.mrf.mxu0
        %v900 = vadd.f32 %v886, %v899
        %v901 = vpop.f32.mrf.mxu0
        %v902 = vadd.f32 %v888, %v901
        %903 = vdwg.mxu0
        %904 = vmatpush.bf16.msra.mxu0 %v739
        %905 = vmatpush.bf16.msra.mxu0 %v737
        %906 = vmatpush.bf16.msra.mxu0 %v735
        %907 = vmatpush.bf16.msra.mxu0 %v733
        %908 = vmatpush.bf16.msra.mxu0 %v731
        %909 = vmatpush.bf16.msra.mxu0 %v729
        %910 = vmatpush.bf16.msra.mxu0 %v727
        %911 = vmatpush.bf16.msra.mxu0 %v725
        %912 = vmatmul.bf16.gmra.mxu0 %v494
        %v913 = vpop.f32.mrf.mxu0
        %v914 = vadd.f32 %v900, %v913
        %v915 = vpop.f32.mrf.mxu0
        %v916 = vadd.f32 %v902, %v915
        %917 = vdwg.mxu0
        %918 = vmatpush.bf16.msra.mxu0 %v755
        %919 = vmatpush.bf16.msra.mxu0 %v753
        %920 = vmatpush.bf16.msra.mxu0 %v751
        %921 = vmatpush.bf16.msra.mxu0 %v749
        %922 = vmatpush.bf16.msra.mxu0 %v747
        %923 = vmatpush.bf16.msra.mxu0 %v745
        %924 = vmatpush.bf16.msra.mxu0 %v743
        %925 = vmatpush.bf16.msra.mxu0 %v741
        %926 = vmatmul.bf16.gmra.mxu0 %v495
        %v927 = vpop.f32.mrf.mxu0
        %v928 = vadd.f32 %v914, %v927
        %v929 = vpop.f32.mrf.mxu0
        %v930 = vadd.f32 %v916, %v929
        %931 = vdwg.mxu0
        %v932 = vadd.f32 %v408, %v872
        %v933 = vadd.f32 %v409, %v928
        %v934 = vadd.f32 %v410, %v874
        %v935 = vadd.f32 %v411, %v930
        %936 = vst [vmem:[#allocation6] sm:$0xff] %v932
        %937 = vst [vmem:[#allocation6 + $0x8] sm:$0xff] %v933
        %938 = vst [vmem:[#allocation6 + $0x10] sm:$0xff] %v934
        %939 = vst [vmem:[#allocation6 + $0x18] sm:$0xff] %v935
        %p940 = scmp.eq.s32.totalorder %s27, 1
        // Predicated region
        $region72: #{block_forward.9} parent=58 // pred_check
          %p941 = pneg %p940
        $region73: #{block_forward.9} parent=58 // pred_check_branch
          %943 = sbr.rel (%p941) target = $region75
        $region74: #{block_forward.9} parent=58 // pred_region
          %v944 = vld [vmem:[%s395] sm:$0xff]
          %v945 = vld [vmem:[%s395 + $0x8] sm:$0xff]
          %v946 = vld [vmem:[%s395 + $0x10] sm:$0xff]
          %v947 = vld [vmem:[%s395 + $0x18] sm:$0xff]
          %v948 = vld [vmem:[#allocation6] sm:$0xff]
          %v949 = vld [vmem:[#allocation6 + $0x8] sm:$0xff]
          %v950 = vld [vmem:[#allocation6 + $0x10] sm:$0xff]
          %v951 = vld [vmem:[#allocation6 + $0x18] sm:$0xff]
          %v952 = vld [vmem:[%s379] sm:$0x3]
          %v954 = vperm.slane %v952, 0
          %v955 = vperm.slane %v952, 1
          %v958 = vadd.f32 %v948, %v954
          %v959 = vadd.f32 %v949, %v955
          %v960 = vadd.f32 %v950, %v954
          %v961 = vadd.f32 %v951, %v955
          %v962 = vld [vmem:[%s384] sm:$0x3]
          %v964 = vperm.slane %v962, 0
          %v965 = vperm.slane %v962, 1
          %v968 = vmul.f32 %v958, %v964
          %v969 = vmul.f32 %v959, %v965
          %v970 = vmul.f32 %v960, %v964
          %v971 = vmul.f32 %v961, %v965
          %v972 = vadd.f32 %v944, %v968
          %v973 = vadd.f32 %v945, %v969
          %v974 = vadd.f32 %v946, %v970
          %v975 = vadd.f32 %v947, %v971
          %976 = vst [vmem:[#allocation6] sm:$0xff] %v972
          %977 = vst [vmem:[#allocation6 + $0x8] sm:$0xff] %v973
          %978 = vst [vmem:[#allocation6 + $0x10] sm:$0xff] %v974
          %979 = vst [vmem:[#allocation6 + $0x18] sm:$0xff] %v975
        $region75: #{block_forward.9} parent=58 // pred_fallthru
          _
        // Predicated region
        $region76: #{block_forward.9} parent=58 // pred_check
          %p980 = pneg %p195
        $region77: #{block_forward.9} parent=58 // pred_check_branch
          %982 = sbr.rel (%p980) target = $region79
        $region78: #{block_forward.9} parent=58 // pred_region
          %s983 = smul.u32 2, %s25
          %s984 = smul.u32 2, %s26
          %986 = vsyncadd [#allocation5], 0
          %s987 = smul.addr %s983, 2
          %s988 = sadd.s32 %s984, %s987
          %s989 = smul.addr %s988, 8
          %s990 = scalar_lea.hbm %s5, %s989
          %s991 = sshll.u32 [#allocation6], 4
          %s992 = int_to_ptr.vmem [resolvable:$true] %s991
          %s993 = sshll.u32 %s990, 4
          %s994 = int_to_ptr.hbm [resolvable:$true] %s993
          %999 = dma.vmem_to_hbm [thread:$0]  %s992, 512, %s994, [#allocation5], 256, 256, 16
        $region79: #{block_forward.9} parent=58 // pred_fallthru
          _
        // Predicated region
        $region80: #{block_forward.9} parent=58 // pred_check
          %p1000 = pneg %p195
        $region81: #{block_forward.9} parent=58 // pred_check_branch
          %1002 = sbr.rel (%p1000) target = $region83
        $region82: #{block_forward.9} parent=58 // pred_region
          %1004 = dma.done [#allocation5], 512
        $region83: #{block_forward.9} parent=58 // pred_fallthru
          _
      $region59: #{block_forward.9} parent=5 // pred_fallthru
        _
      %p1005 = scmp.le.s32.totalorder 2, %s15
      // Predicated region
      $region84: #{block_forward.9} parent=5 // pred_check
        %p1006 = pneg %p1005
      $region85: #{block_forward.9} parent=5 // pred_check_branch
        %1008 = sbr.rel (%p1006) target = $region87
      $region86: #{block_forward.9} parent=5 // pred_region
        %s1009 = ssub.s32 %s15, 2
      $region87: #{block_forward.9} parent=5 // pred_fallthru
        _
    $region6: #{block_forward.9} parent=1 // loop_footer
      %s19 = sadd.s32 1, %s15
    $region7: #{block_forward.9} parent=1 // loop_footer_branch
      %14 = sbr.rel target = $region3
    $region8: #{block_forward.9} parent=1 // loop_exit
      _
    %1010 = vsyncpa [#allocation4], 1
    %s1011 = scalar_lea.sflag [#allocation4], 1
    %1012 = vsyncpa %s1011, 1
    %1013 = vsyncpa [#allocation5], 1
    %s1014 = scalar_lea.sflag [#allocation5], 1
    %1015 = vsyncpa %s1014, 1

</llo_original>
